<compile_context>
chip_gen: v5e
topology: v5e:2x2
jax: 0.10.0
libtpu: 0.0.40
codegen_flags: <defaults>
</compile_context>

<pallas_src>
import functools

import jax
import jax.numpy as jnp
from jax.experimental import pallas as pl
from jax.experimental.pallas import tpu as pltpu

EPS = 1e-5


def _bn_relu(y, gamma, beta, relu=True):
    """Training-mode batch norm over rows of y: (R, C) f32, fused scale/bias."""
    inv_r = 1.0 / y.shape[0]
    mu = jnp.sum(y, axis=0, keepdims=True) * inv_r
    yc = y - mu
    var = jnp.sum(yc * yc, axis=0, keepdims=True) * inv_r     # biased, two-pass
    scale = gamma * jax.lax.rsqrt(var + EPS)                   # rsqrt -> EUP slot
    z = yc * scale + beta
    return jnp.maximum(z, 0.0) if relu else z


def bottleneck_kernel(x_ref, w1_ref, g1_ref, b1_ref,
                      w2_ref, g2_ref, b2_ref,
                      w3_ref, g3_ref, b3_ref,
                      out_ref, pad_ref, *, N, H, W, WP):
    f32 = jnp.float32
    bf16 = jnp.bfloat16
    R = N * H * W

    # Channel-last, lane-dense input (R, Cpad); padded channels are exact zeros.
    x = x_ref[...].astype(f32)

    # ---- conv1x1 + BN1 + ReLU  (bf16 MXU operands, f32 accumulation) ----
    h1 = jnp.dot(x.astype(bf16), w1_ref[...], preferred_element_type=f32)   # (R, WP)
    h1 = _bn_relu(h1, g1_ref[...], b1_ref[...])

    # ---- conv3x3, padding=1: bf16 zero-halo scratch, two wide lane-dense stores ----
    pad_ref[...] = jnp.zeros((N, H + 2, W + 2, WP), bf16)
    pad_ref[:, 1:H + 1, 1:W + 1, :] = h1.astype(bf16).reshape(N, H, W, WP)

    # 9 shifted-window matmuls accumulated in f32 (no materialized im2col buffer).
    # Each tap is a (R, WP) x (WP, WP) matmul with WP a multiple of 128.
    acc = jnp.zeros((R, WP), f32)
    for t in range(9):
        ky, kx = t // 3, t % 3
        tap = pad_ref[:, ky:ky + H, kx:kx + W, :].reshape(R, WP)
        acc = acc + jnp.dot(tap, w2_ref[t], preferred_element_type=f32)
    h2 = _bn_relu(acc, g2_ref[...], b2_ref[...])

    # ---- conv1x1 + BN3, identity residual add, ReLU ----
    h3 = jnp.dot(h2.astype(bf16), w3_ref[...], preferred_element_type=f32)  # (R, Cpad)
    h3 = _bn_relu(h3, g3_ref[...], b3_ref[...], relu=False)

    # Lane-dense channel-last output store (last dim multiple of 128, unmasked).
    out_ref[...] = jnp.maximum(h3 + x, 0.0).astype(out_ref.dtype)


def _round_up(n, m=128):
    return ((n + m - 1) // m) * m


def _pad_to(a, shape):
    return jnp.pad(a, [(0, t - s) for s, t in zip(a.shape, shape)])


def bottleneck_forward_nhwc(x_nhwc, params):
    """Channel-last fast path: x (N, H, W, Cin) f32 -> (N, H, W, Cout)."""
    w1, g1, b1, w2, g2, b2, w3, g3, b3 = params
    N, H, W, Cin = x_nhwc.shape
    width = w1.shape[1]
    Cout = w3.shape[1]
    if Cout != Cin:
        raise ValueError("identity residual requires Cout == Cin (no downsample path)")

    CP = _round_up(Cin)          # padded in/out channels (Cin == Cout)
    WP = _round_up(width)        # padded bottleneck width
    R = N * H * W

    bf16 = jnp.bfloat16
    # Zero-pad channels to lane multiples; weights packed in matmul layout.
    xp = _pad_to(x_nhwc, (N, H, W, CP)).reshape(R, CP)
    w1p = _pad_to(w1, (CP, WP)).astype(bf16)         # (Cin_pad, width_pad)
    w2p = _pad_to(w2, (9, WP, WP)).astype(bf16)      # tap k = ky*3+kx, (in, out)
    w3p = _pad_to(w3, (WP, CP)).astype(bf16)         # (width_pad, Cout_pad)
    g1p, b1p = _pad_to(g1, (1, WP)), _pad_to(b1, (1, WP))
    g2p, b2p = _pad_to(g2, (1, WP)), _pad_to(b2, (1, WP))
    g3p, b3p = _pad_to(g3, (1, CP)), _pad_to(b3, (1, CP))

    kernel = functools.partial(bottleneck_kernel, N=N, H=H, W=W, WP=WP)

    out = pl.pallas_call(
        kernel,
        out_shape=jax.ShapeDtypeStruct((R, CP), x_nhwc.dtype),
        in_specs=[pl.BlockSpec(memory_space=pltpu.MemorySpace.VMEM)] * 10,
        out_specs=pl.BlockSpec(memory_space=pltpu.MemorySpace.VMEM),
        scratch_shapes=[pltpu.VMEM((N, H + 2, W + 2, WP), jnp.bfloat16)],
        # 48 MiB cap: headroom under v7x's 64 MiB physical per-TC VMEM.
        compiler_params=pltpu.CompilerParams(vmem_limit_bytes=48 * 1024 * 1024),
    )(xp, w1p, g1p, b1p, w2p, g2p, b2p, w3p, g3p, b3p)

    return out[:, :Cout].reshape(N, H, W, Cout)


def bottleneck_forward(x_nchw, params):
    """PyTorch-facing NCHW API.  Relayout is done once here (model boundary)."""
    x_nhwc = jnp.transpose(x_nchw, (0, 2, 3, 1))
    out_nhwc = bottleneck_forward_nhwc(x_nhwc, params)
    return jnp.transpose(out_nhwc, (0, 3, 1, 2))


# ----------------------- pure-JAX reference (for checking) -----------------------
def reference_bottleneck(x_nchw, params):
    w1, g1, b1, w2, g2, b2, w3, g3, b3 = params
    x = jnp.transpose(x_nchw, (0, 2, 3, 1))
    width = w1.shape[1]
    bf16 = jnp.bfloat16

    def conv(h, w_hwio, pad):
        # bf16 operands + f32 accumulation, matching the kernel's MXU path.
        return jax.lax.conv_general_dilated(
            h.astype(bf16), w_hwio.astype(bf16), window_strides=(1, 1),
            padding=pad, dimension_numbers=('NHWC', 'HWIO', 'NHWC'),
            preferred_element_type=jnp.float32)

    def bn(h, g, b):
        mu = jnp.mean(h, axis=(0, 1, 2), keepdims=True)
        var = jnp.mean(jnp.square(h - mu), axis=(0, 1, 2), keepdims=True)
        return (h - mu) * jax.lax.rsqrt(var + EPS) * g.reshape(1, 1, 1, -1) \
               + b.reshape(1, 1, 1, -1)

    h = jnp.maximum(bn(conv(x, w1[None, None], 'VALID'), g1, b1), 0.0)
    h = jnp.maximum(bn(conv(h, w2.reshape(3, 3, width, width), 'SAME'), g2, b2), 0.0)
    h = bn(conv(h, w3[None, None], 'VALID'), g3, b3)
    out = jnp.maximum(h + x, 0.0)
    return jnp.transpose(out, (0, 3, 1, 2))


if __name__ == "__main__":
    # Bottleneck(inplanes=32, planes=8): width = 8, out channels = 8*4 = 32 == Cin,
    # so the identity residual is valid (no downsample).
    N, Cin, H, W = 2, 32, 8, 8
    planes = 8
    width = planes            # base_width=64, groups=1
    Cout = planes * 4

    key = jax.random.PRNGKey(0)
    ks = jax.random.split(key, 10)

    x = jax.random.normal(ks[0], (N, Cin, H, W), jnp.float32)

    # conv weights stored directly in matmul layout:
    #   w1: (Cin, width)         == pytorch conv1 weight[:, :, 0, 0].T
    #   w2: (9, width, width)    tap k = ky*3 + kx, (in, out) layout
    #   w3: (width, Cout)
    w1 = jax.random.normal(ks[1], (Cin, width), jnp.float32) / jnp.sqrt(Cin)
    w2 = jax.random.normal(ks[2], (9, width, width), jnp.float32) / jnp.sqrt(9.0 * width)
    w3 = jax.random.normal(ks[3], (width, Cout), jnp.float32) / jnp.sqrt(width)

    # BatchNorm affine params (gamma, beta), shaped (1, C).
    g1 = 1.0 + 0.1 * jax.random.normal(ks[4], (1, width), jnp.float32)
    b1 = 0.1 * jax.random.normal(ks[5], (1, width), jnp.float32)
    g2 = 1.0 + 0.1 * jax.random.normal(ks[6], (1, width), jnp.float32)
    b2 = 0.1 * jax.random.normal(ks[7], (1, width), jnp.float32)
    g3 = 1.0 + 0.1 * jax.random.normal(ks[8], (1, Cout), jnp.float32)
    b3 = 0.1 * jax.random.normal(ks[9], (1, Cout), jnp.float32)

    params = (w1, g1, b1, w2, g2, b2, w3, g3, b3)

    out = jax.block_until_ready(bottleneck_forward(x, params))
    ref = jax.block_until_ready(reference_bottleneck(x, params))

    assert out.shape == (N, Cout, H, W), out.shape
    err = jnp.max(jnp.abs(out - ref))
    # Tolerance accounts for bf16 MXU operands (f32 accumulation) vs the XLA conv
    # path (different summation order / intermediate bf16 rounding points).
    assert jnp.allclose(out, ref, rtol=1e-2, atol=1e-2), f"max abs err = {err}"

    print("KERNEL_OK")
</pallas_src>

<mosaic_0001>
module attributes {stable_mosaic.version = 11 : i64} {
  func.func @bottleneck_kernel(%arg0: memref<128x128xf32, #tpu.memory_space<vmem>>, %arg1: memref<128x128xbf16, #tpu.memory_space<vmem>>, %arg2: memref<1x128xf32, #tpu.memory_space<vmem>>, %arg3: memref<1x128xf32, #tpu.memory_space<vmem>>, %arg4: memref<9x128x128xbf16, #tpu.memory_space<vmem>>, %arg5: memref<1x128xf32, #tpu.memory_space<vmem>>, %arg6: memref<1x128xf32, #tpu.memory_space<vmem>>, %arg7: memref<128x128xbf16, #tpu.memory_space<vmem>>, %arg8: memref<1x128xf32, #tpu.memory_space<vmem>>, %arg9: memref<1x128xf32, #tpu.memory_space<vmem>>, %arg10: memref<128x128xf32, #tpu.memory_space<vmem>>, %arg11: memref<2x10x10x128xbf16, #tpu.memory_space<vmem>>) attributes {dimension_semantics = [], scalar_prefetch = 0 : i64, scratch_operands = 1 : i64, tpu.core_type = #tpu.core_type<tc>} {
    %c0 = arith.constant 0 : index
    %c0_0 = arith.constant 0 : index
    %0 = vector.load %arg0[%c0, %c0_0] : memref<128x128xf32, #tpu.memory_space<vmem>>, vector<128x128xf32>
    %1 = arith.truncf %0 : vector<128x128xf32> to vector<128x128xbf16>
    %c0_1 = arith.constant 0 : index
    %c0_2 = arith.constant 0 : index
    %2 = vector.load %arg1[%c0_1, %c0_2] : memref<128x128xbf16, #tpu.memory_space<vmem>>, vector<128x128xbf16>
    %cst = arith.constant dense<0.000000e+00> : vector<128x128xf32>
    %3 = tpu.matmul %1, %2, %cst {dimension_numbers = #tpu.dot_dimension_numbers<[1], [0], [0], [1], [0, 0, 1, 1], [], []>} : vector<128x128xbf16>, vector<128x128xbf16>, vector<128x128xf32> -> vector<128x128xf32>
    %c0_3 = arith.constant 0 : index
    %c0_4 = arith.constant 0 : index
    %4 = vector.load %arg2[%c0_3, %c0_4] : memref<1x128xf32, #tpu.memory_space<vmem>>, vector<1x128xf32>
    %c0_5 = arith.constant 0 : index
    %c0_6 = arith.constant 0 : index
    %5 = vector.load %arg3[%c0_5, %c0_6] : memref<1x128xf32, #tpu.memory_space<vmem>>, vector<1x128xf32>
    %cst_7 = arith.constant dense<0.000000e+00> : vector<128xf32>
    %6 = vector.multi_reduction <add>, %3, %cst_7 [0] : vector<128x128xf32> to vector<128xf32>
    %7 = vector.shape_cast %6 : vector<128xf32> to vector<1x128xf32>
    %cst_8 = arith.constant 7.812500e-03 : f32
    %8 = vector.broadcast %cst_8 : f32 to vector<1x128xf32>
    %9 = arith.mulf %7, %8 : vector<1x128xf32>
    %10 = vector.broadcast %9 : vector<1x128xf32> to vector<128x128xf32>
    %11 = arith.subf %3, %10 : vector<128x128xf32>
    %12 = arith.mulf %11, %11 : vector<128x128xf32>
    %cst_9 = arith.constant dense<0.000000e+00> : vector<128xf32>
    %13 = vector.multi_reduction <add>, %12, %cst_9 [0] : vector<128x128xf32> to vector<128xf32>
    %14 = vector.shape_cast %13 : vector<128xf32> to vector<1x128xf32>
    %cst_10 = arith.constant 7.812500e-03 : f32
    %15 = vector.broadcast %cst_10 : f32 to vector<1x128xf32>
    %16 = arith.mulf %14, %15 : vector<1x128xf32>
    %cst_11 = arith.constant 9.99999974E-6 : f32
    %17 = vector.broadcast %cst_11 : f32 to vector<1x128xf32>
    %18 = arith.addf %16, %17 : vector<1x128xf32>
    %19 = math.rsqrt %18 : vector<1x128xf32>
    %20 = arith.mulf %4, %19 : vector<1x128xf32>
    %21 = vector.broadcast %20 : vector<1x128xf32> to vector<128x128xf32>
    %22 = arith.mulf %11, %21 : vector<128x128xf32>
    %23 = vector.broadcast %5 : vector<1x128xf32> to vector<128x128xf32>
    %24 = arith.addf %22, %23 : vector<128x128xf32>
    %cst_12 = arith.constant 0.000000e+00 : f32
    %25 = vector.broadcast %cst_12 : f32 to vector<128x128xf32>
    %26 = arith.maximumf %24, %25 : vector<128x128xf32>
    %cst_13 = arith.constant 0.000000e+00 : bf16
    %27 = vector.broadcast %cst_13 : bf16 to vector<2x10x10x128xbf16>
    %c0_14 = arith.constant 0 : index
    %c0_15 = arith.constant 0 : index
    %c0_16 = arith.constant 0 : index
    %c0_17 = arith.constant 0 : index
    %28 = vector.load %arg11[%c0_14, %c0_15, %c0_16, %c0_17] : memref<2x10x10x128xbf16, #tpu.memory_space<vmem>>, vector<2x10x10x128xbf16>
    tpu.vector_store %arg11[%c0_14, %c0_15, %c0_16, %c0_17], %27 {strides = array<i32>} : memref<2x10x10x128xbf16, #tpu.memory_space<vmem>>, vector<2x10x10x128xbf16>,
    %29 = arith.truncf %26 : vector<128x128xf32> to vector<128x128xbf16>
    %30 = vector.shape_cast %29 : vector<128x128xbf16> to vector<2x8x8x128xbf16>
    %c0_18 = arith.constant 0 : index
    %c1 = arith.constant 1 : index
    %c1_19 = arith.constant 1 : index
    %c0_20 = arith.constant 0 : index
    %31 = vector.load %arg11[%c0_18, %c1, %c1_19, %c0_20] : memref<2x10x10x128xbf16, #tpu.memory_space<vmem>>, vector<2x8x8x128xbf16>
    tpu.vector_store %arg11[%c0_18, %c1, %c1_19, %c0_20], %30 {strides = array<i32>} : memref<2x10x10x128xbf16, #tpu.memory_space<vmem>>, vector<2x8x8x128xbf16>,
    %cst_21 = arith.constant 0.000000e+00 : f32
    %32 = vector.broadcast %cst_21 : f32 to vector<128x128xf32>
    %c0_22 = arith.constant 0 : index
    %c0_23 = arith.constant 0 : index
    %c0_24 = arith.constant 0 : index
    %c0_25 = arith.constant 0 : index
    %33 = vector.load %arg11[%c0_22, %c0_23, %c0_24, %c0_25] : memref<2x10x10x128xbf16, #tpu.memory_space<vmem>>, vector<2x8x8x128xbf16>
    %34 = vector.shape_cast %33 : vector<2x8x8x128xbf16> to vector<128x128xbf16>
    %c0_26 = arith.constant 0 : index
    %c0_27 = arith.constant 0 : index
    %c0_28 = arith.constant 0 : index
    %35 = vector.load %arg4[%c0_26, %c0_27, %c0_28] : memref<9x128x128xbf16, #tpu.memory_space<vmem>>, vector<1x128x128xbf16>
    %36 = vector.shape_cast %35 : vector<1x128x128xbf16> to vector<128x128xbf16>
    %cst_29 = arith.constant dense<0.000000e+00> : vector<128x128xf32>
    %37 = tpu.matmul %34, %36, %cst_29 {dimension_numbers = #tpu.dot_dimension_numbers<[1], [0], [0], [1], [0, 0, 1, 1], [], []>} : vector<128x128xbf16>, vector<128x128xbf16>, vector<128x128xf32> -> vector<128x128xf32>
    %38 = arith.addf %32, %37 : vector<128x128xf32>
    %c0_30 = arith.constant 0 : index
    %c0_31 = arith.constant 0 : index
    %c1_32 = arith.constant 1 : index
    %c0_33 = arith.constant 0 : index
    %39 = vector.load %arg11[%c0_30, %c0_31, %c1_32, %c0_33] : memref<2x10x10x128xbf16, #tpu.memory_space<vmem>>, vector<2x8x8x128xbf16>
    %40 = vector.shape_cast %39 : vector<2x8x8x128xbf16> to vector<128x128xbf16>
    %c1_34 = arith.constant 1 : index
    %c0_35 = arith.constant 0 : index
    %c0_36 = arith.constant 0 : index
    %41 = vector.load %arg4[%c1_34, %c0_35, %c0_36] : memref<9x128x128xbf16, #tpu.memory_space<vmem>>, vector<1x128x128xbf16>
    %42 = vector.shape_cast %41 : vector<1x128x128xbf16> to vector<128x128xbf16>
    %cst_37 = arith.constant dense<0.000000e+00> : vector<128x128xf32>
    %43 = tpu.matmul %40, %42, %cst_37 {dimension_numbers = #tpu.dot_dimension_numbers<[1], [0], [0], [1], [0, 0, 1, 1], [], []>} : vector<128x128xbf16>, vector<128x128xbf16>, vector<128x128xf32> -> vector<128x128xf32>
    %44 = arith.addf %38, %43 : vector<128x128xf32>
    %c0_38 = arith.constant 0 : index
    %c0_39 = arith.constant 0 : index
    %c2 = arith.constant 2 : index
    %c0_40 = arith.constant 0 : index
    %45 = vector.load %arg11[%c0_38, %c0_39, %c2, %c0_40] : memref<2x10x10x128xbf16, #tpu.memory_space<vmem>>, vector<2x8x8x128xbf16>
    %46 = vector.shape_cast %45 : vector<2x8x8x128xbf16> to vector<128x128xbf16>
    %c2_41 = arith.constant 2 : index
    %c0_42 = arith.constant 0 : index
    %c0_43 = arith.constant 0 : index
    %47 = vector.load %arg4[%c2_41, %c0_42, %c0_43] : memref<9x128x128xbf16, #tpu.memory_space<vmem>>, vector<1x128x128xbf16>
    %48 = vector.shape_cast %47 : vector<1x128x128xbf16> to vector<128x128xbf16>
    %cst_44 = arith.constant dense<0.000000e+00> : vector<128x128xf32>
    %49 = tpu.matmul %46, %48, %cst_44 {dimension_numbers = #tpu.dot_dimension_numbers<[1], [0], [0], [1], [0, 0, 1, 1], [], []>} : vector<128x128xbf16>, vector<128x128xbf16>, vector<128x128xf32> -> vector<128x128xf32>
    %50 = arith.addf %44, %49 : vector<128x128xf32>
    %c0_45 = arith.constant 0 : index
    %c1_46 = arith.constant 1 : index
    %c0_47 = arith.constant 0 : index
    %c0_48 = arith.constant 0 : index
    %51 = vector.load %arg11[%c0_45, %c1_46, %c0_47, %c0_48] : memref<2x10x10x128xbf16, #tpu.memory_space<vmem>>, vector<2x8x8x128xbf16>
    %52 = vector.shape_cast %51 : vector<2x8x8x128xbf16> to vector<128x128xbf16>
    %c3 = arith.constant 3 : index
    %c0_49 = arith.constant 0 : index
    %c0_50 = arith.constant 0 : index
    %53 = vector.load %arg4[%c3, %c0_49, %c0_50] : memref<9x128x128xbf16, #tpu.memory_space<vmem>>, vector<1x128x128xbf16>
    %54 = vector.shape_cast %53 : vector<1x128x128xbf16> to vector<128x128xbf16>
    %cst_51 = arith.constant dense<0.000000e+00> : vector<128x128xf32>
    %55 = tpu.matmul %52, %54, %cst_51 {dimension_numbers = #tpu.dot_dimension_numbers<[1], [0], [0], [1], [0, 0, 1, 1], [], []>} : vector<128x128xbf16>, vector<128x128xbf16>, vector<128x128xf32> -> vector<128x128xf32>
    %56 = arith.addf %50, %55 : vector<128x128xf32>
    %c0_52 = arith.constant 0 : index
    %c1_53 = arith.constant 1 : index
    %c1_54 = arith.constant 1 : index
    %c0_55 = arith.constant 0 : index
    %57 = vector.load %arg11[%c0_52, %c1_53, %c1_54, %c0_55] : memref<2x10x10x128xbf16, #tpu.memory_space<vmem>>, vector<2x8x8x128xbf16>
    %58 = vector.shape_cast %57 : vector<2x8x8x128xbf16> to vector<128x128xbf16>
    %c4 = arith.constant 4 : index
    %c0_56 = arith.constant 0 : index
    %c0_57 = arith.constant 0 : index
    %59 = vector.load %arg4[%c4, %c0_56, %c0_57] : memref<9x128x128xbf16, #tpu.memory_space<vmem>>, vector<1x128x128xbf16>
    %60 = vector.shape_cast %59 : vector<1x128x128xbf16> to vector<128x128xbf16>
    %cst_58 = arith.constant dense<0.000000e+00> : vector<128x128xf32>
    %61 = tpu.matmul %58, %60, %cst_58 {dimension_numbers = #tpu.dot_dimension_numbers<[1], [0], [0], [1], [0, 0, 1, 1], [], []>} : vector<128x128xbf16>, vector<128x128xbf16>, vector<128x128xf32> -> vector<128x128xf32>
    %62 = arith.addf %56, %61 : vector<128x128xf32>
    %c0_59 = arith.constant 0 : index
    %c1_60 = arith.constant 1 : index
    %c2_61 = arith.constant 2 : index
    %c0_62 = arith.constant 0 : index
    %63 = vector.load %arg11[%c0_59, %c1_60, %c2_61, %c0_62] : memref<2x10x10x128xbf16, #tpu.memory_space<vmem>>, vector<2x8x8x128xbf16>
    %64 = vector.shape_cast %63 : vector<2x8x8x128xbf16> to vector<128x128xbf16>
    %c5 = arith.constant 5 : index
    %c0_63 = arith.constant 0 : index
    %c0_64 = arith.constant 0 : index
    %65 = vector.load %arg4[%c5, %c0_63, %c0_64] : memref<9x128x128xbf16, #tpu.memory_space<vmem>>, vector<1x128x128xbf16>
    %66 = vector.shape_cast %65 : vector<1x128x128xbf16> to vector<128x128xbf16>
    %cst_65 = arith.constant dense<0.000000e+00> : vector<128x128xf32>
    %67 = tpu.matmul %64, %66, %cst_65 {dimension_numbers = #tpu.dot_dimension_numbers<[1], [0], [0], [1], [0, 0, 1, 1], [], []>} : vector<128x128xbf16>, vector<128x128xbf16>, vector<128x128xf32> -> vector<128x128xf32>
    %68 = arith.addf %62, %67 : vector<128x128xf32>
    %c0_66 = arith.constant 0 : index
    %c2_67 = arith.constant 2 : index
    %c0_68 = arith.constant 0 : index
    %c0_69 = arith.constant 0 : index
    %69 = vector.load %arg11[%c0_66, %c2_67, %c0_68, %c0_69] : memref<2x10x10x128xbf16, #tpu.memory_space<vmem>>, vector<2x8x8x128xbf16>
    %70 = vector.shape_cast %69 : vector<2x8x8x128xbf16> to vector<128x128xbf16>
    %c6 = arith.constant 6 : index
    %c0_70 = arith.constant 0 : index
    %c0_71 = arith.constant 0 : index
    %71 = vector.load %arg4[%c6, %c0_70, %c0_71] : memref<9x128x128xbf16, #tpu.memory_space<vmem>>, vector<1x128x128xbf16>
    %72 = vector.shape_cast %71 : vector<1x128x128xbf16> to vector<128x128xbf16>
    %cst_72 = arith.constant dense<0.000000e+00> : vector<128x128xf32>
    %73 = tpu.matmul %70, %72, %cst_72 {dimension_numbers = #tpu.dot_dimension_numbers<[1], [0], [0], [1], [0, 0, 1, 1], [], []>} : vector<128x128xbf16>, vector<128x128xbf16>, vector<128x128xf32> -> vector<128x128xf32>
    %74 = arith.addf %68, %73 : vector<128x128xf32>
    %c0_73 = arith.constant 0 : index
    %c2_74 = arith.constant 2 : index
    %c1_75 = arith.constant 1 : index
    %c0_76 = arith.constant 0 : index
    %75 = vector.load %arg11[%c0_73, %c2_74, %c1_75, %c0_76] : memref<2x10x10x128xbf16, #tpu.memory_space<vmem>>, vector<2x8x8x128xbf16>
    %76 = vector.shape_cast %75 : vector<2x8x8x128xbf16> to vector<128x128xbf16>
    %c7 = arith.constant 7 : index
    %c0_77 = arith.constant 0 : index
    %c0_78 = arith.constant 0 : index
    %77 = vector.load %arg4[%c7, %c0_77, %c0_78] : memref<9x128x128xbf16, #tpu.memory_space<vmem>>, vector<1x128x128xbf16>
    %78 = vector.shape_cast %77 : vector<1x128x128xbf16> to vector<128x128xbf16>
    %cst_79 = arith.constant dense<0.000000e+00> : vector<128x128xf32>
    %79 = tpu.matmul %76, %78, %cst_79 {dimension_numbers = #tpu.dot_dimension_numbers<[1], [0], [0], [1], [0, 0, 1, 1], [], []>} : vector<128x128xbf16>, vector<128x128xbf16>, vector<128x128xf32> -> vector<128x128xf32>
    %80 = arith.addf %74, %79 : vector<128x128xf32>
    %c0_80 = arith.constant 0 : index
    %c2_81 = arith.constant 2 : index
    %c2_82 = arith.constant 2 : index
    %c0_83 = arith.constant 0 : index
    %81 = vector.load %arg11[%c0_80, %c2_81, %c2_82, %c0_83] : memref<2x10x10x128xbf16, #tpu.memory_space<vmem>>, vector<2x8x8x128xbf16>
    %82 = vector.shape_cast %81 : vector<2x8x8x128xbf16> to vector<128x128xbf16>
    %c8 = arith.constant 8 : index
    %c0_84 = arith.constant 0 : index
    %c0_85 = arith.constant 0 : index
    %83 = vector.load %arg4[%c8, %c0_84, %c0_85] : memref<9x128x128xbf16, #tpu.memory_space<vmem>>, vector<1x128x128xbf16>
    %84 = vector.shape_cast %83 : vector<1x128x128xbf16> to vector<128x128xbf16>
    %cst_86 = arith.constant dense<0.000000e+00> : vector<128x128xf32>
    %85 = tpu.matmul %82, %84, %cst_86 {dimension_numbers = #tpu.dot_dimension_numbers<[1], [0], [0], [1], [0, 0, 1, 1], [], []>} : vector<128x128xbf16>, vector<128x128xbf16>, vector<128x128xf32> -> vector<128x128xf32>
    %86 = arith.addf %80, %85 : vector<128x128xf32>
    %c0_87 = arith.constant 0 : index
    %c0_88 = arith.constant 0 : index
    %87 = vector.load %arg5[%c0_87, %c0_88] : memref<1x128xf32, #tpu.memory_space<vmem>>, vector<1x128xf32>
    %c0_89 = arith.constant 0 : index
    %c0_90 = arith.constant 0 : index
    %88 = vector.load %arg6[%c0_89, %c0_90] : memref<1x128xf32, #tpu.memory_space<vmem>>, vector<1x128xf32>
    %cst_91 = arith.constant dense<0.000000e+00> : vector<128xf32>
    %89 = vector.multi_reduction <add>, %86, %cst_91 [0] : vector<128x128xf32> to vector<128xf32>
    %90 = vector.shape_cast %89 : vector<128xf32> to vector<1x128xf32>
    %cst_92 = arith.constant 7.812500e-03 : f32
    %91 = vector.broadcast %cst_92 : f32 to vector<1x128xf32>
    %92 = arith.mulf %90, %91 : vector<1x128xf32>
    %93 = vector.broadcast %92 : vector<1x128xf32> to vector<128x128xf32>
    %94 = arith.subf %86, %93 : vector<128x128xf32>
    %95 = arith.mulf %94, %94 : vector<128x128xf32>
    %cst_93 = arith.constant dense<0.000000e+00> : vector<128xf32>
    %96 = vector.multi_reduction <add>, %95, %cst_93 [0] : vector<128x128xf32> to vector<128xf32>
    %97 = vector.shape_cast %96 : vector<128xf32> to vector<1x128xf32>
    %cst_94 = arith.constant 7.812500e-03 : f32
    %98 = vector.broadcast %cst_94 : f32 to vector<1x128xf32>
    %99 = arith.mulf %97, %98 : vector<1x128xf32>
    %cst_95 = arith.constant 9.99999974E-6 : f32
    %100 = vector.broadcast %cst_95 : f32 to vector<1x128xf32>
    %101 = arith.addf %99, %100 : vector<1x128xf32>
    %102 = math.rsqrt %101 : vector<1x128xf32>
    %103 = arith.mulf %87, %102 : vector<1x128xf32>
    %104 = vector.broadcast %103 : vector<1x128xf32> to vector<128x128xf32>
    %105 = arith.mulf %94, %104 : vector<128x128xf32>
    %106 = vector.broadcast %88 : vector<1x128xf32> to vector<128x128xf32>
    %107 = arith.addf %105, %106 : vector<128x128xf32>
    %cst_96 = arith.constant 0.000000e+00 : f32
    %108 = vector.broadcast %cst_96 : f32 to vector<128x128xf32>
    %109 = arith.maximumf %107, %108 : vector<128x128xf32>
    %110 = arith.truncf %109 : vector<128x128xf32> to vector<128x128xbf16>
    %c0_97 = arith.constant 0 : index
    %c0_98 = arith.constant 0 : index
    %111 = vector.load %arg7[%c0_97, %c0_98] : memref<128x128xbf16, #tpu.memory_space<vmem>>, vector<128x128xbf16>
    %cst_99 = arith.constant dense<0.000000e+00> : vector<128x128xf32>
    %112 = tpu.matmul %110, %111, %cst_99 {dimension_numbers = #tpu.dot_dimension_numbers<[1], [0], [0], [1], [0, 0, 1, 1], [], []>} : vector<128x128xbf16>, vector<128x128xbf16>, vector<128x128xf32> -> vector<128x128xf32>
    %c0_100 = arith.constant 0 : index
    %c0_101 = arith.constant 0 : index
    %113 = vector.load %arg8[%c0_100, %c0_101] : memref<1x128xf32, #tpu.memory_space<vmem>>, vector<1x128xf32>
    %c0_102 = arith.constant 0 : index
    %c0_103 = arith.constant 0 : index
    %114 = vector.load %arg9[%c0_102, %c0_103] : memref<1x128xf32, #tpu.memory_space<vmem>>, vector<1x128xf32>
    %cst_104 = arith.constant dense<0.000000e+00> : vector<128xf32>
    %115 = vector.multi_reduction <add>, %112, %cst_104 [0] : vector<128x128xf32> to vector<128xf32>
    %116 = vector.shape_cast %115 : vector<128xf32> to vector<1x128xf32>
    %cst_105 = arith.constant 7.812500e-03 : f32
    %117 = vector.broadcast %cst_105 : f32 to vector<1x128xf32>
    %118 = arith.mulf %116, %117 : vector<1x128xf32>
    %119 = vector.broadcast %118 : vector<1x128xf32> to vector<128x128xf32>
    %120 = arith.subf %112, %119 : vector<128x128xf32>
    %121 = arith.mulf %120, %120 : vector<128x128xf32>
    %cst_106 = arith.constant dense<0.000000e+00> : vector<128xf32>
    %122 = vector.multi_reduction <add>, %121, %cst_106 [0] : vector<128x128xf32> to vector<128xf32>
    %123 = vector.shape_cast %122 : vector<128xf32> to vector<1x128xf32>
    %cst_107 = arith.constant 7.812500e-03 : f32
    %124 = vector.broadcast %cst_107 : f32 to vector<1x128xf32>
    %125 = arith.mulf %123, %124 : vector<1x128xf32>
    %cst_108 = arith.constant 9.99999974E-6 : f32
    %126 = vector.broadcast %cst_108 : f32 to vector<1x128xf32>
    %127 = arith.addf %125, %126 : vector<1x128xf32>
    %128 = math.rsqrt %127 : vector<1x128xf32>
    %129 = arith.mulf %113, %128 : vector<1x128xf32>
    %130 = vector.broadcast %129 : vector<1x128xf32> to vector<128x128xf32>
    %131 = arith.mulf %120, %130 : vector<128x128xf32>
    %132 = vector.broadcast %114 : vector<1x128xf32> to vector<128x128xf32>
    %133 = arith.addf %131, %132 : vector<128x128xf32>
    %134 = arith.addf %133, %0 : vector<128x128xf32>
    %cst_109 = arith.constant 0.000000e+00 : f32
    %135 = vector.broadcast %cst_109 : f32 to vector<128x128xf32>
    %136 = arith.maximumf %134, %135 : vector<128x128xf32>
    %c0_110 = arith.constant 0 : index
    %c0_111 = arith.constant 0 : index
    %137 = vector.load %arg10[%c0_110, %c0_111] : memref<128x128xf32, #tpu.memory_space<vmem>>, vector<128x128xf32>
    tpu.vector_store %arg10[%c0_110, %c0_111], %136 {strides = array<i32>} : memref<128x128xf32, #tpu.memory_space<vmem>>, vector<128x128xf32>,
    return
  }
}

</mosaic_0001>

<llo_original>
// kernel: tpu_custom_call.1
$region0: #{tpu_custom_call.1}
  #allocation0 [shape = 'u32[]', space=smem, size = 0x4, offset = 0x4, fixed_abs, tag = 'smem constant byte address 0x4 - core index']
  #allocation1 [shape = 'u32[72,128]{1,0:T(1,128)}', space=vmem, size = 0x9000, scoped, tag = 'internal scratch']
  #allocation2 [shape = 'bf16[2,10,10,128]{3,2,1,0:T(8,128)(2,1)}', space=vmem, size = 0x14000, scoped, tag = 'scratch operand']
  %s0 = inlined_call_operand.hbm [shape: f32[128,128], index: 0, kind: input, shape index: {}]
  %s1 = inlined_call_operand.hbm [shape: bf16[128,128], index: 1, kind: input, shape index: {}]
  %s2 = inlined_call_operand.vmem [shape: f32[1,128], index: 2, kind: input, shape index: {}]
  %s3 = inlined_call_operand.vmem [shape: f32[1,128], index: 3, kind: input, shape index: {}]
  %s4 = inlined_call_operand.hbm [shape: bf16[9,128,128], index: 4, kind: input, shape index: {}]
  %s5 = inlined_call_operand.vmem [shape: f32[1,128], index: 5, kind: input, shape index: {}]
  %s6 = inlined_call_operand.vmem [shape: f32[1,128], index: 6, kind: input, shape index: {}]
  %s7 = inlined_call_operand.hbm [shape: bf16[128,128], index: 7, kind: input, shape index: {}]
  %s8 = inlined_call_operand.vmem [shape: f32[1,128], index: 8, kind: input, shape index: {}]
  %s9 = inlined_call_operand.vmem [shape: f32[1,128], index: 9, kind: input, shape index: {}]
  %s10 = inlined_call_operand.hbm [shape: f32[128,128], index: 10, kind: output, shape index: {}]
  %s11 = sld [smem:[#allocation0]]
  $region66: #{tpu_custom_call.1} parent=0
    _
  %s13 = ssub.s32 1, %s11
  %s14 = scalar_select 0, %s13, %s11
  $region1: #{tpu_custom_call.1} parent=0
    #allocation3 [shape = 'u8[65536]{0}', space=vmem, size = 0x10000, scoped, tag = 'input window, operand 0, single buffered']
    #allocation4 [shape = 's32[1]{0}', space=sflag, size = 0x4, scoped, tag = 'scoped memory for tpu_custom_call.1']
    #allocation5 [shape = 's32[1]{0}', space=sflag, size = 0x4, scoped, tag = 'scoped memory for tpu_custom_call.1']
    #allocation6 [shape = 'u8[32768]{0}', space=vmem, size = 0x8000, scoped, tag = 'input window, operand 1, single buffered']
    #allocation7 [shape = 's32[1]{0}', space=sflag, size = 0x4, scoped, tag = 'scoped memory for tpu_custom_call.1']
    #allocation8 [shape = 'u8[294912]{0}', space=vmem, size = 0x48000, scoped, tag = 'input window, operand 4, single buffered']
    #allocation9 [shape = 'u8[32768]{0}', space=vmem, size = 0x8000, scoped, tag = 'input window, operand 7, single buffered']
    #allocation10 [shape = 's32[1]{0}', space=sflag, size = 0x4, scoped, tag = 'scoped memory for tpu_custom_call.1']
    #allocation11 [shape = 'u8[65536]{0}', space=vmem, size = 0x10000, scoped, tag = 'output window, operand 0, single buffered']
    %15 = vsyncpa [#allocation4], 0
    %16 = vsyncpa [#allocation7], 0
    %17 = vsyncpa [#allocation10], 0
    %18 = vsyncpa [#allocation5], 0
    // Predicated region
    $region2: #{tpu_custom_call.1} parent=1 // pred_check
      _
    $region3: #{tpu_custom_call.1} parent=1 // pred_check_branch
      %20 = sbr.rel (0) target = $region5
    $region4: #{tpu_custom_call.1} parent=1 // pred_region
      %22 = vsyncadd [#allocation4], 0
      %s23 = sshll.u32 %s0, 4
      %s24 = int_to_ptr.hbm [resolvable:$true] %s23
      %s25 = sshll.u32 [#allocation3], 4
      %s26 = int_to_ptr.vmem [resolvable:$true] %s25
      %31 = dma.hbm_to_vmem [thread:$0]  %s24, 2048, %s26, [#allocation4], 128, 128, 8
    $region5: #{tpu_custom_call.1} parent=1 // pred_fallthru
      _
    // Predicated region
    $region6: #{tpu_custom_call.1} parent=1 // pred_check
      _
    $region7: #{tpu_custom_call.1} parent=1 // pred_check_branch
      %33 = sbr.rel (0) target = $region9
    $region8: #{tpu_custom_call.1} parent=1 // pred_region
      %35 = vsyncadd [#allocation7], 0
      %s36 = sshll.u32 %s1, 4
      %s37 = int_to_ptr.hbm [resolvable:$true] %s36
      %s38 = sshll.u32 [#allocation6], 4
      %s39 = int_to_ptr.vmem [resolvable:$true] %s38
      %44 = dma.hbm_to_vmem [thread:$0]  %s37, 1024, %s39, [#allocation7], 64, 64, 4
    $region9: #{tpu_custom_call.1} parent=1 // pred_fallthru
      _
    // Predicated region
    $region10: #{tpu_custom_call.1} parent=1 // pred_check
      _
    $region11: #{tpu_custom_call.1} parent=1 // pred_check_branch
      %46 = sbr.rel (0) target = $region13
    $region12: #{tpu_custom_call.1} parent=1 // pred_region
      _
    $region13: #{tpu_custom_call.1} parent=1 // pred_fallthru
      _
    // Predicated region
    $region14: #{tpu_custom_call.1} parent=1 // pred_check
      _
    $region15: #{tpu_custom_call.1} parent=1 // pred_check_branch
      %48 = sbr.rel (0) target = $region17
    $region16: #{tpu_custom_call.1} parent=1 // pred_region
      _
    $region17: #{tpu_custom_call.1} parent=1 // pred_fallthru
      _
    // Predicated region
    $region18: #{tpu_custom_call.1} parent=1 // pred_check
      _
    $region19: #{tpu_custom_call.1} parent=1 // pred_check_branch
      %50 = sbr.rel (0) target = $region21
    $region20: #{tpu_custom_call.1} parent=1 // pred_region
      %52 = vsyncadd [#allocation7], 0
      %s53 = sshll.u32 %s4, 4
      %s54 = int_to_ptr.hbm [resolvable:$true] %s53
      %s55 = sshll.u32 [#allocation8], 4
      %s56 = int_to_ptr.vmem [resolvable:$true] %s55
      %61 = dma.hbm_to_vmem [thread:$0]  %s54, 9216, %s56, [#allocation7], 64, 64, 4
    $region21: #{tpu_custom_call.1} parent=1 // pred_fallthru
      _
    // Predicated region
    $region22: #{tpu_custom_call.1} parent=1 // pred_check
      _
    $region23: #{tpu_custom_call.1} parent=1 // pred_check_branch
      %63 = sbr.rel (0) target = $region25
    $region24: #{tpu_custom_call.1} parent=1 // pred_region
      _
    $region25: #{tpu_custom_call.1} parent=1 // pred_fallthru
      _
    // Predicated region
    $region26: #{tpu_custom_call.1} parent=1 // pred_check
      _
    $region27: #{tpu_custom_call.1} parent=1 // pred_check_branch
      %65 = sbr.rel (0) target = $region29
    $region28: #{tpu_custom_call.1} parent=1 // pred_region
      _
    $region29: #{tpu_custom_call.1} parent=1 // pred_fallthru
      _
    // Predicated region
    $region30: #{tpu_custom_call.1} parent=1 // pred_check
      _
    $region31: #{tpu_custom_call.1} parent=1 // pred_check_branch
      %67 = sbr.rel (0) target = $region33
    $region32: #{tpu_custom_call.1} parent=1 // pred_region
      %69 = vsyncadd [#allocation10], 0
      %s70 = sshll.u32 %s7, 4
      %s71 = int_to_ptr.hbm [resolvable:$true] %s70
      %s72 = sshll.u32 [#allocation9], 4
      %s73 = int_to_ptr.vmem [resolvable:$true] %s72
      %78 = dma.hbm_to_vmem [thread:$0]  %s71, 1024, %s73, [#allocation10], 64, 64, 4
    $region33: #{tpu_custom_call.1} parent=1 // pred_fallthru
      _
    // Predicated region
    $region34: #{tpu_custom_call.1} parent=1 // pred_check
      _
    $region35: #{tpu_custom_call.1} parent=1 // pred_check_branch
      %80 = sbr.rel (0) target = $region37
    $region36: #{tpu_custom_call.1} parent=1 // pred_region
      _
    $region37: #{tpu_custom_call.1} parent=1 // pred_fallthru
      _
    // Predicated region
    $region38: #{tpu_custom_call.1} parent=1 // pred_check
      _
    $region39: #{tpu_custom_call.1} parent=1 // pred_check_branch
      %82 = sbr.rel (0) target = $region41
    $region40: #{tpu_custom_call.1} parent=1 // pred_region
      _
    $region41: #{tpu_custom_call.1} parent=1 // pred_fallthru
      _
    // Predicated region
    $region42: #{tpu_custom_call.1} parent=1 // pred_check
      _
    $region43: #{tpu_custom_call.1} parent=1 // pred_check_branch
      %84 = sbr.rel (0) target = $region45
    $region44: #{tpu_custom_call.1} parent=1 // pred_region
      %86 = dma.done [#allocation4], 2048
    $region45: #{tpu_custom_call.1} parent=1 // pred_fallthru
      _
    // Predicated region
    $region46: #{tpu_custom_call.1} parent=1 // pred_check
      _
    $region47: #{tpu_custom_call.1} parent=1 // pred_check_branch
      %88 = sbr.rel (0) target = $region49
    $region48: #{tpu_custom_call.1} parent=1 // pred_region
      %90 = dma.done [#allocation7], 1024
    $region49: #{tpu_custom_call.1} parent=1 // pred_fallthru
      _
    // Predicated region
    $region50: #{tpu_custom_call.1} parent=1 // pred_check
      _
    $region51: #{tpu_custom_call.1} parent=1 // pred_check_branch
      %92 = sbr.rel (0) target = $region53
    $region52: #{tpu_custom_call.1} parent=1 // pred_region
      %94 = dma.done [#allocation7], 9216
    $region53: #{tpu_custom_call.1} parent=1 // pred_fallthru
      _
    // Predicated region
    $region54: #{tpu_custom_call.1} parent=1 // pred_check
      _
    $region55: #{tpu_custom_call.1} parent=1 // pred_check_branch
      %96 = sbr.rel (0) target = $region57
    $region56: #{tpu_custom_call.1} parent=1 // pred_region
      %98 = dma.done [#allocation10], 1024
    $region57: #{tpu_custom_call.1} parent=1 // pred_fallthru
      _
    %v100 = vld [vmem:[#allocation3] sm:$0xff]
    %v101 = vld [vmem:[#allocation3 + $0x8] sm:$0xff]
    %v102 = vld [vmem:[#allocation3 + $0x10] sm:$0xff]
    %v103 = vld [vmem:[#allocation3 + $0x18] sm:$0xff]
    %v104 = vld [vmem:[#allocation3 + $0x20] sm:$0xff]
    %v105 = vld [vmem:[#allocation3 + $0x28] sm:$0xff]
    %v106 = vld [vmem:[#allocation3 + $0x30] sm:$0xff]
    %v107 = vld [vmem:[#allocation3 + $0x38] sm:$0xff]
    %v108 = vld [vmem:[#allocation3 + $0x40] sm:$0xff]
    %v109 = vld [vmem:[#allocation3 + $0x48] sm:$0xff]
    %v110 = vld [vmem:[#allocation3 + $0x50] sm:$0xff]
    %v111 = vld [vmem:[#allocation3 + $0x58] sm:$0xff]
    %v112 = vld [vmem:[#allocation3 + $0x60] sm:$0xff]
    %v113 = vld [vmem:[#allocation3 + $0x68] sm:$0xff]
    %v114 = vld [vmem:[#allocation3 + $0x70] sm:$0xff]
    %v115 = vld [vmem:[#allocation3 + $0x78] sm:$0xff]
    %v116 = vpack.c.bf16 %v101, %v100
    %v117 = vpack.c.bf16 %v103, %v102
    %v118 = vpack.c.bf16 %v105, %v104
    %v119 = vpack.c.bf16 %v107, %v106
    %v120 = vpack.c.bf16 %v109, %v108
    %v121 = vpack.c.bf16 %v111, %v110
    %v122 = vpack.c.bf16 %v113, %v112
    %v123 = vpack.c.bf16 %v115, %v114
    %v124 = vld [vmem:[#allocation6] sm:$0xf]
    %v125 = vld [vmem:[#allocation6 + $0x4] sm:$0xf]
    %v126 = vld [vmem:[#allocation6 + $0x8] sm:$0xf]
    %v127 = vld [vmem:[#allocation6 + $0xc] sm:$0xf]
    %v128 = vld [vmem:[#allocation6 + $0x10] sm:$0xf]
    %v129 = vld [vmem:[#allocation6 + $0x14] sm:$0xf]
    %v130 = vld [vmem:[#allocation6 + $0x18] sm:$0xf]
    %v131 = vld [vmem:[#allocation6 + $0x1c] sm:$0xf]
    %v132 = vld [vmem:[#allocation6 + $0x20] sm:$0xf]
    %v133 = vld [vmem:[#allocation6 + $0x24] sm:$0xf]
    %v134 = vld [vmem:[#allocation6 + $0x28] sm:$0xf]
    %v135 = vld [vmem:[#allocation6 + $0x2c] sm:$0xf]
    %v136 = vld [vmem:[#allocation6 + $0x30] sm:$0xf]
    %v137 = vld [vmem:[#allocation6 + $0x34] sm:$0xf]
    %v138 = vld [vmem:[#allocation6 + $0x38] sm:$0xf]
    %v139 = vld [vmem:[#allocation6 + $0x3c] sm:$0xf]
    %v156 = vunpack.c.l.b16 %v124
    %v157 = vunpack.c.l.b16 %v125
    %v158 = vunpack.c.l.b16 %v126
    %v159 = vunpack.c.l.b16 %v127
    %v160 = vunpack.c.l.b16 %v128
    %v161 = vunpack.c.l.b16 %v129
    %v162 = vunpack.c.l.b16 %v130
    %v163 = vunpack.c.l.b16 %v131
    %v164 = vunpack.c.l.b16 %v132
    %v165 = vunpack.c.l.b16 %v133
    %v166 = vunpack.c.l.b16 %v134
    %v167 = vunpack.c.l.b16 %v135
    %v168 = vunpack.c.l.b16 %v136
    %v169 = vunpack.c.l.b16 %v137
    %v170 = vunpack.c.l.b16 %v138
    %v171 = vunpack.c.l.b16 %v139
    %v172 = vpack.c.b16 %v157, %v156
    %v173 = vpack.c.b16 %v159, %v158
    %v174 = vpack.c.b16 %v161, %v160
    %v175 = vpack.c.b16 %v163, %v162
    %v176 = vpack.c.b16 %v165, %v164
    %v177 = vpack.c.b16 %v167, %v166
    %v178 = vpack.c.b16 %v169, %v168
    %v179 = vpack.c.b16 %v171, %v170
    %188 = vmatpush.bf16.msra.mxu0 %v179
    %189 = vmatpush.bf16.msra.mxu0 %v178
    %190 = vmatpush.bf16.msra.mxu0 %v177
    %191 = vmatpush.bf16.msra.mxu0 %v176
    %192 = vmatpush.bf16.msra.mxu0 %v175
    %193 = vmatpush.bf16.msra.mxu0 %v174
    %194 = vmatpush.bf16.msra.mxu0 %v173
    %195 = vmatpush.bf16.msra.mxu0 %v172
    %196 = vmatmul.bf16.gmra.mxu0 %v116
    %v197 = vpop.f32.mrf.mxu0
    %v198 = vadd.f32 0.0, %v197
    %v199 = vpop.f32.mrf.mxu0
    %v200 = vadd.f32 0.0, %v199
    %201 = vmatmul.bf16.gmra.mxu0 %v117
    %v202 = vpop.f32.mrf.mxu0
    %v203 = vadd.f32 0.0, %v202
    %v204 = vpop.f32.mrf.mxu0
    %v205 = vadd.f32 0.0, %v204
    %206 = vmatmul.bf16.gmra.mxu0 %v118
    %v207 = vpop.f32.mrf.mxu0
    %v208 = vadd.f32 0.0, %v207
    %v209 = vpop.f32.mrf.mxu0
    %v210 = vadd.f32 0.0, %v209
    %211 = vmatmul.bf16.gmra.mxu0 %v119
    %v212 = vpop.f32.mrf.mxu0
    %v213 = vadd.f32 0.0, %v212
    %v214 = vpop.f32.mrf.mxu0
    %v215 = vadd.f32 0.0, %v214
    %216 = vmatmul.bf16.gmra.mxu0 %v120
    %v217 = vpop.f32.mrf.mxu0
    %v218 = vadd.f32 0.0, %v217
    %v219 = vpop.f32.mrf.mxu0
    %v220 = vadd.f32 0.0, %v219
    %221 = vmatmul.bf16.gmra.mxu0 %v121
    %v222 = vpop.f32.mrf.mxu0
    %v223 = vadd.f32 0.0, %v222
    %v224 = vpop.f32.mrf.mxu0
    %v225 = vadd.f32 0.0, %v224
    %226 = vmatmul.bf16.gmra.mxu0 %v122
    %v227 = vpop.f32.mrf.mxu0
    %v228 = vadd.f32 0.0, %v227
    %v229 = vpop.f32.mrf.mxu0
    %v230 = vadd.f32 0.0, %v229
    %231 = vmatmul.bf16.gmra.mxu0 %v123
    %v232 = vpop.f32.mrf.mxu0
    %v233 = vadd.f32 0.0, %v232
    %v234 = vpop.f32.mrf.mxu0
    %v235 = vadd.f32 0.0, %v234
    %236 = vdwg.mxu0
    %v237 = vld [vmem:[%s2] sm:$0x1]
    %v238 = vld [vmem:[%s3] sm:$0x1]
    %v239 = vadd.f32 %v198, %v200
    %v240 = vadd.f32 %v239, %v203
    %v241 = vadd.f32 %v240, %v205
    %v242 = vadd.f32 %v241, %v208
    %v243 = vadd.f32 %v242, %v210
    %v244 = vadd.f32 %v243, %v213
    %v245 = vadd.f32 %v244, %v215
    %v246 = vadd.f32 %v245, %v218
    %v247 = vadd.f32 %v246, %v220
    %v248 = vadd.f32 %v247, %v223
    %v249 = vadd.f32 %v248, %v225
    %v250 = vadd.f32 %v249, %v228
    %v251 = vadd.f32 %v250, %v230
    %v252 = vadd.f32 %v251, %v233
    %v253 = vadd.f32 %v252, %v235
    %v254 = vrot.slane %v253, 4
    %v255 = vadd.f32 %v253, %v254
    %v256 = vrot.slane %v255, 2
    %v257 = vadd.f32 %v255, %v256
    %v258 = vrot.slane %v257, 1
    %v259 = vadd.f32 %v257, %v258
    %v260 = vmul.f32 %v259, 0.0078125
    %v261 = vsub.f32 %v198, %v260
    %v262 = vsub.f32 %v200, %v260
    %v263 = vsub.f32 %v203, %v260
    %v264 = vsub.f32 %v205, %v260
    %v265 = vsub.f32 %v208, %v260
    %v266 = vsub.f32 %v210, %v260
    %v267 = vsub.f32 %v213, %v260
    %v268 = vsub.f32 %v215, %v260
    %v269 = vsub.f32 %v218, %v260
    %v270 = vsub.f32 %v220, %v260
    %v271 = vsub.f32 %v223, %v260
    %v272 = vsub.f32 %v225, %v260
    %v273 = vsub.f32 %v228, %v260
    %v274 = vsub.f32 %v230, %v260
    %v275 = vsub.f32 %v233, %v260
    %v276 = vsub.f32 %v235, %v260
    %v277 = vmul.f32 %v261, %v261
    %v278 = vmul.f32 %v262, %v262
    %v279 = vmul.f32 %v263, %v263
    %v280 = vmul.f32 %v264, %v264
    %v281 = vmul.f32 %v265, %v265
    %v282 = vmul.f32 %v266, %v266
    %v283 = vmul.f32 %v267, %v267
    %v284 = vmul.f32 %v268, %v268
    %v285 = vmul.f32 %v269, %v269
    %v286 = vmul.f32 %v270, %v270
    %v287 = vmul.f32 %v271, %v271
    %v288 = vmul.f32 %v272, %v272
    %v289 = vmul.f32 %v273, %v273
    %v290 = vmul.f32 %v274, %v274
    %v291 = vmul.f32 %v275, %v275
    %v292 = vmul.f32 %v276, %v276
    %v293 = vadd.f32 %v277, %v278
    %v294 = vadd.f32 %v293, %v279
    %v295 = vadd.f32 %v294, %v280
    %v296 = vadd.f32 %v295, %v281
    %v297 = vadd.f32 %v296, %v282
    %v298 = vadd.f32 %v297, %v283
    %v299 = vadd.f32 %v298, %v284
    %v300 = vadd.f32 %v299, %v285
    %v301 = vadd.f32 %v300, %v286
    %v302 = vadd.f32 %v301, %v287
    %v303 = vadd.f32 %v302, %v288
    %v304 = vadd.f32 %v303, %v289
    %v305 = vadd.f32 %v304, %v290
    %v306 = vadd.f32 %v305, %v291
    %v307 = vadd.f32 %v306, %v292
    %v308 = vrot.slane %v307, 4
    %v309 = vadd.f32 %v307, %v308
    %v310 = vrot.slane %v309, 2
    %v311 = vadd.f32 %v309, %v310
    %v312 = vrot.slane %v311, 1
    %v313 = vadd.f32 %v311, %v312
    %v314 = vmul.f32 %v313, 0.0078125
    %v315 = vadd.f32 %v314, 1e-05
    %v316 = vrsqrt.pop %v315
    %v317 = vmul.f32 %v316, %v315
    %v318 = vmul.f32 %v317, %v316
    %v319 = vmul.f32 0.5, %v318
    %v320 = vsub.f32 1.5, %v319
    %v321 = vmul.f32 %v316, %v320
    %vm322 = vweird.f32 %v315
    %vm323 = vweird.f32 %v316
    %vm324 = vmor %vm322, %vm323
    %v325 = vsel %vm324, %v316, %v321
    %v326 = vmul.f32 %v237, %v325
    %v328 = vperm.slane %v326, 0
    %v330 = vmul.f32 %v261, %v328
    %v331 = vmul.f32 %v262, %v328
    %v332 = vmul.f32 %v263, %v328
    %v333 = vmul.f32 %v264, %v328
    %v334 = vmul.f32 %v265, %v328
    %v335 = vmul.f32 %v266, %v328
    %v336 = vmul.f32 %v267, %v328
    %v337 = vmul.f32 %v268, %v328
    %v338 = vmul.f32 %v269, %v328
    %v339 = vmul.f32 %v270, %v328
    %v340 = vmul.f32 %v271, %v328
    %v341 = vmul.f32 %v272, %v328
    %v342 = vmul.f32 %v273, %v328
    %v343 = vmul.f32 %v274, %v328
    %v344 = vmul.f32 %v275, %v328
    %v345 = vmul.f32 %v276, %v328
    %v347 = vperm.slane %v238, 0
    %v349 = vadd.f32 %v330, %v347
    %v350 = vadd.f32 %v331, %v347
    %v351 = vadd.f32 %v332, %v347
    %v352 = vadd.f32 %v333, %v347
    %v353 = vadd.f32 %v334, %v347
    %v354 = vadd.f32 %v335, %v347
    %v355 = vadd.f32 %v336, %v347
    %v356 = vadd.f32 %v337, %v347
    %v357 = vadd.f32 %v338, %v347
    %v358 = vadd.f32 %v339, %v347
    %v359 = vadd.f32 %v340, %v347
    %v360 = vadd.f32 %v341, %v347
    %v361 = vadd.f32 %v342, %v347
    %v362 = vadd.f32 %v343, %v347
    %v363 = vadd.f32 %v344, %v347
    %v364 = vadd.f32 %v345, %v347
    %v365 = vmax.f32 %v349, 0.0
    %v366 = vmax.f32 %v350, 0.0
    %v367 = vmax.f32 %v351, 0.0
    %v368 = vmax.f32 %v352, 0.0
    %v369 = vmax.f32 %v353, 0.0
    %v370 = vmax.f32 %v354, 0.0
    %v371 = vmax.f32 %v355, 0.0
    %v372 = vmax.f32 %v356, 0.0
    %v373 = vmax.f32 %v357, 0.0
    %v374 = vmax.f32 %v358, 0.0
    %v375 = vmax.f32 %v359, 0.0
    %v376 = vmax.f32 %v360, 0.0
    %v377 = vmax.f32 %v361, 0.0
    %v378 = vmax.f32 %v362, 0.0
    %v379 = vmax.f32 %v363, 0.0
    %v380 = vmax.f32 %v364, 0.0
    %381 = vst [vmem:[#allocation2] sm:$0xf] 0
    %382 = vst [vmem:[#allocation2 + $0x4] sm:$0x1] 0
    %383 = vst [vmem:[#allocation2 + $0x8] sm:$0xf] 0
    %384 = vst [vmem:[#allocation2 + $0xc] sm:$0x1] 0
    %385 = vst [vmem:[#allocation2 + $0x10] sm:$0xf] 0
    %386 = vst [vmem:[#allocation2 + $0x14] sm:$0x1] 0
    %387 = vst [vmem:[#allocation2 + $0x18] sm:$0xf] 0
    %388 = vst [vmem:[#allocation2 + $0x1c] sm:$0x1] 0
    %389 = vst [vmem:[#allocation2 + $0x20] sm:$0xf] 0
    %390 = vst [vmem:[#allocation2 + $0x24] sm:$0x1] 0
    %391 = vst [vmem:[#allocation2 + $0x28] sm:$0xf] 0
    %392 = vst [vmem:[#allocation2 + $0x2c] sm:$0x1] 0
    %393 = vst [vmem:[#allocation2 + $0x30] sm:$0xf] 0
    %394 = vst [vmem:[#allocation2 + $0x34] sm:$0x1] 0
    %395 = vst [vmem:[#allocation2 + $0x38] sm:$0xf] 0
    %396 = vst [vmem:[#allocation2 + $0x3c] sm:$0x1] 0
    %397 = vst [vmem:[#allocation2 + $0x40] sm:$0xf] 0
    %398 = vst [vmem:[#allocation2 + $0x44] sm:$0x1] 0
    %399 = vst [vmem:[#allocation2 + $0x48] sm:$0xf] 0
    %400 = vst [vmem:[#allocation2 + $0x4c] sm:$0x1] 0
    %401 = vst [vmem:[#allocation2 + $0x50] sm:$0xf] 0
    %402 = vst [vmem:[#allocation2 + $0x54] sm:$0x1] 0
    %403 = vst [vmem:[#allocation2 + $0x58] sm:$0xf] 0
    %404 = vst [vmem:[#allocation2 + $0x5c] sm:$0x1] 0
    %405 = vst [vmem:[#allocation2 + $0x60] sm:$0xf] 0
    %406 = vst [vmem:[#allocation2 + $0x64] sm:$0x1] 0
    %407 = vst [vmem:[#allocation2 + $0x68] sm:$0xf] 0
    %408 = vst [vmem:[#allocation2 + $0x6c] sm:$0x1] 0
    %409 = vst [vmem:[#allocation2 + $0x70] sm:$0xf] 0
    %410 = vst [vmem:[#allocation2 + $0x74] sm:$0x1] 0
    %411 = vst [vmem:[#allocation2 + $0x78] sm:$0xf] 0
    %412 = vst [vmem:[#allocation2 + $0x7c] sm:$0x1] 0
    %413 = vst [vmem:[#allocation2 + $0x80] sm:$0xf] 0
    %414 = vst [vmem:[#allocation2 + $0x84] sm:$0x1] 0
    %415 = vst [vmem:[#allocation2 + $0x88] sm:$0xf] 0
    %416 = vst [vmem:[#allocation2 + $0x8c] sm:$0x1] 0
    %417 = vst [vmem:[#allocation2 + $0x90] sm:$0xf] 0
    %418 = vst [vmem:[#allocation2 + $0x94] sm:$0x1] 0
    %419 = vst [vmem:[#allocation2 + $0x98] sm:$0xf] 0
    %420 = vst [vmem:[#allocation2 + $0x9c] sm:$0x1] 0
    %v421 = vpack.c.bf16 %v365, %v365
    %v422 = vpack.c.bf16 %v366, %v366
    %v423 = vpack.c.bf16 %v367, %v367
    %v424 = vpack.c.bf16 %v368, %v368
    %v425 = vpack.c.bf16 %v369, %v369
    %v426 = vpack.c.bf16 %v370, %v370
    %v427 = vpack.c.bf16 %v371, %v371
    %v428 = vpack.c.bf16 %v372, %v372
    %v429 = vpack.c.bf16 %v373, %v373
    %v430 = vpack.c.bf16 %v374, %v374
    %v431 = vpack.c.bf16 %v375, %v375
    %v432 = vpack.c.bf16 %v376, %v376
    %v433 = vpack.c.bf16 %v377, %v377
    %v434 = vpack.c.bf16 %v378, %v378
    %v435 = vpack.c.bf16 %v379, %v379
    %v436 = vpack.c.bf16 %v380, %v380
    %v438 = vshrl.u32 %v421, 16
    %v440 = vrot.slane %v438, 7
    %v441 = vshll.u32 %v421, 16
    %v443 = vor.u32 %v440, %v441
    %v444 = vrot.slane %v440, 4
    %v446 = vshrl.u32 %v422, 16
    %v448 = vrot.slane %v446, 7
    %v449 = vshll.u32 %v422, 16
    %v451 = vor.u32 %v448, %v449
    %v452 = vrot.slane %v448, 4
    %v454 = vshrl.u32 %v423, 16
    %v456 = vrot.slane %v454, 7
    %v457 = vshll.u32 %v423, 16
    %v459 = vor.u32 %v456, %v457
    %v460 = vrot.slane %v456, 4
    %v462 = vshrl.u32 %v424, 16
    %v464 = vrot.slane %v462, 7
    %v465 = vshll.u32 %v424, 16
    %v467 = vor.u32 %v464, %v465
    %v468 = vrot.slane %v464, 4
    %v470 = vshrl.u32 %v425, 16
    %v472 = vrot.slane %v470, 7
    %v473 = vshll.u32 %v425, 16
    %v475 = vor.u32 %v472, %v473
    %v476 = vrot.slane %v472, 4
    %v478 = vshrl.u32 %v426, 16
    %v480 = vrot.slane %v478, 7
    %v481 = vshll.u32 %v426, 16
    %v483 = vor.u32 %v480, %v481
    %v484 = vrot.slane %v480, 4
    %v486 = vshrl.u32 %v427, 16
    %v488 = vrot.slane %v486, 7
    %v489 = vshll.u32 %v427, 16
    %v491 = vor.u32 %v488, %v489
    %v492 = vrot.slane %v488, 4
    %v494 = vshrl.u32 %v428, 16
    %v496 = vrot.slane %v494, 7
    %v497 = vshll.u32 %v428, 16
    %v499 = vor.u32 %v496, %v497
    %v500 = vrot.slane %v496, 4
    %v502 = vshrl.u32 %v429, 16
    %v504 = vrot.slane %v502, 7
    %v505 = vshll.u32 %v429, 16
    %v507 = vor.u32 %v504, %v505
    %v508 = vrot.slane %v504, 4
    %v510 = vshrl.u32 %v430, 16
    %v512 = vrot.slane %v510, 7
    %v513 = vshll.u32 %v430, 16
    %v515 = vor.u32 %v512, %v513
    %v516 = vrot.slane %v512, 4
    %v518 = vshrl.u32 %v431, 16
    %v520 = vrot.slane %v518, 7
    %v521 = vshll.u32 %v431, 16
    %v523 = vor.u32 %v520, %v521
    %v524 = vrot.slane %v520, 4
    %v526 = vshrl.u32 %v432, 16
    %v528 = vrot.slane %v526, 7
    %v529 = vshll.u32 %v432, 16
    %v531 = vor.u32 %v528, %v529
    %v532 = vrot.slane %v528, 4
    %v534 = vshrl.u32 %v433, 16
    %v536 = vrot.slane %v534, 7
    %v537 = vshll.u32 %v433, 16
    %v539 = vor.u32 %v536, %v537
    %v540 = vrot.slane %v536, 4
    %v542 = vshrl.u32 %v434, 16
    %v544 = vrot.slane %v542, 7
    %v545 = vshll.u32 %v434, 16
    %v547 = vor.u32 %v544, %v545
    %v548 = vrot.slane %v544, 4
    %v550 = vshrl.u32 %v435, 16
    %v552 = vrot.slane %v550, 7
    %v553 = vshll.u32 %v435, 16
    %v555 = vor.u32 %v552, %v553
    %v556 = vrot.slane %v552, 4
    %v558 = vshrl.u32 %v436, 16
    %v560 = vrot.slane %v558, 7
    %v561 = vshll.u32 %v436, 16
    %v563 = vor.u32 %v560, %v561
    %v564 = vrot.slane %v560, 4
    %s597 = scalar_lea.vmem [#allocation2], 8
    %vm598 = vcmask 1043456
    %vm599 = vsmask.f32 7938
    %vm600 = vmand %vm598, %vm599
    %v601 = vld [vmem:[%s597] sm:$0xf]
    %v602 = vsel %vm600, %v443, %v601
    %603 = vst [vmem:[%s597] sm:$0xf] %v602
    %vm604 = vcmask 1040384
    %vm605 = vsmask.f32 256
    %vm606 = vmand %vm604, %vm605
    %v607 = vld [vmem:[%s597 + $0x4] sm:$0x1]
    %v608 = vsel %vm606, %v444, %v607
    %609 = vst [vmem:[%s597 + $0x4] sm:$0x1] %v608
    %v610 = vld [vmem:[%s597 + $0x8] sm:$0xf]
    %v611 = vsel %vm600, %v451, %v610
    %612 = vst [vmem:[%s597 + $0x8] sm:$0xf] %v611
    %v613 = vld [vmem:[%s597 + $0xc] sm:$0x1]
    %v614 = vsel %vm606, %v452, %v613
    %615 = vst [vmem:[%s597 + $0xc] sm:$0x1] %v614
    %v616 = vld [vmem:[%s597 + $0x10] sm:$0xf]
    %v617 = vsel %vm600, %v459, %v616
    %618 = vst [vmem:[%s597 + $0x10] sm:$0xf] %v617
    %v619 = vld [vmem:[%s597 + $0x14] sm:$0x1]
    %v620 = vsel %vm606, %v460, %v619
    %621 = vst [vmem:[%s597 + $0x14] sm:$0x1] %v620
    %v622 = vld [vmem:[%s597 + $0x18] sm:$0xf]
    %v623 = vsel %vm600, %v467, %v622
    %624 = vst [vmem:[%s597 + $0x18] sm:$0xf] %v623
    %v625 = vld [vmem:[%s597 + $0x1c] sm:$0x1]
    %v626 = vsel %vm606, %v468, %v625
    %627 = vst [vmem:[%s597 + $0x1c] sm:$0x1] %v626
    %v628 = vld [vmem:[%s597 + $0x20] sm:$0xf]
    %v629 = vsel %vm600, %v475, %v628
    %630 = vst [vmem:[%s597 + $0x20] sm:$0xf] %v629
    %v631 = vld [vmem:[%s597 + $0x24] sm:$0x1]
    %v632 = vsel %vm606, %v476, %v631
    %633 = vst [vmem:[%s597 + $0x24] sm:$0x1] %v632
    %v634 = vld [vmem:[%s597 + $0x28] sm:$0xf]
    %v635 = vsel %vm600, %v483, %v634
    %636 = vst [vmem:[%s597 + $0x28] sm:$0xf] %v635
    %v637 = vld [vmem:[%s597 + $0x2c] sm:$0x1]
    %v638 = vsel %vm606, %v484, %v637
    %639 = vst [vmem:[%s597 + $0x2c] sm:$0x1] %v638
    %v640 = vld [vmem:[%s597 + $0x30] sm:$0xf]
    %v641 = vsel %vm600, %v491, %v640
    %642 = vst [vmem:[%s597 + $0x30] sm:$0xf] %v641
    %v643 = vld [vmem:[%s597 + $0x34] sm:$0x1]
    %v644 = vsel %vm606, %v492, %v643
    %645 = vst [vmem:[%s597 + $0x34] sm:$0x1] %v644
    %v646 = vld [vmem:[%s597 + $0x38] sm:$0xf]
    %v647 = vsel %vm600, %v499, %v646
    %648 = vst [vmem:[%s597 + $0x38] sm:$0xf] %v647
    %v649 = vld [vmem:[%s597 + $0x3c] sm:$0x1]
    %v650 = vsel %vm606, %v500, %v649
    %651 = vst [vmem:[%s597 + $0x3c] sm:$0x1] %v650
    %v652 = vld [vmem:[%s597 + $0x50] sm:$0xf]
    %v653 = vsel %vm600, %v507, %v652
    %654 = vst [vmem:[%s597 + $0x50] sm:$0xf] %v653
    %v655 = vld [vmem:[%s597 + $0x54] sm:$0x1]
    %v656 = vsel %vm606, %v508, %v655
    %657 = vst [vmem:[%s597 + $0x54] sm:$0x1] %v656
    %v658 = vld [vmem:[%s597 + $0x58] sm:$0xf]
    %v659 = vsel %vm600, %v515, %v658
    %660 = vst [vmem:[%s597 + $0x58] sm:$0xf] %v659
    %v661 = vld [vmem:[%s597 + $0x5c] sm:$0x1]
    %v662 = vsel %vm606, %v516, %v661
    %663 = vst [vmem:[%s597 + $0x5c] sm:$0x1] %v662
    %v664 = vld [vmem:[%s597 + $0x60] sm:$0xf]
    %v665 = vsel %vm600, %v523, %v664
    %666 = vst [vmem:[%s597 + $0x60] sm:$0xf] %v665
    %v667 = vld [vmem:[%s597 + $0x64] sm:$0x1]
    %v668 = vsel %vm606, %v524, %v667
    %669 = vst [vmem:[%s597 + $0x64] sm:$0x1] %v668
    %v670 = vld [vmem:[%s597 + $0x68] sm:$0xf]
    %v671 = vsel %vm600, %v531, %v670
    %672 = vst [vmem:[%s597 + $0x68] sm:$0xf] %v671
    %v673 = vld [vmem:[%s597 + $0x6c] sm:$0x1]
    %v674 = vsel %vm606, %v532, %v673
    %675 = vst [vmem:[%s597 + $0x6c] sm:$0x1] %v674
    %v676 = vld [vmem:[%s597 + $0x70] sm:$0xf]
    %v677 = vsel %vm600, %v539, %v676
    %678 = vst [vmem:[%s597 + $0x70] sm:$0xf] %v677
    %v679 = vld [vmem:[%s597 + $0x74] sm:$0x1]
    %v680 = vsel %vm606, %v540, %v679
    %681 = vst [vmem:[%s597 + $0x74] sm:$0x1] %v680
    %v682 = vld [vmem:[%s597 + $0x78] sm:$0xf]
    %v683 = vsel %vm600, %v547, %v682
    %684 = vst [vmem:[%s597 + $0x78] sm:$0xf] %v683
    %v685 = vld [vmem:[%s597 + $0x7c] sm:$0x1]
    %v686 = vsel %vm606, %v548, %v685
    %687 = vst [vmem:[%s597 + $0x7c] sm:$0x1] %v686
    %v688 = vld [vmem:[%s597 + $0x80] sm:$0xf]
    %v689 = vsel %vm600, %v555, %v688
    %690 = vst [vmem:[%s597 + $0x80] sm:$0xf] %v689
    %v691 = vld [vmem:[%s597 + $0x84] sm:$0x1]
    %v692 = vsel %vm606, %v556, %v691
    %693 = vst [vmem:[%s597 + $0x84] sm:$0x1] %v692
    %v694 = vld [vmem:[%s597 + $0x88] sm:$0xf]
    %v695 = vsel %vm600, %v563, %v694
    %696 = vst [vmem:[%s597 + $0x88] sm:$0xf] %v695
    %v697 = vld [vmem:[%s597 + $0x8c] sm:$0x1]
    %v698 = vsel %vm606, %v564, %v697
    %699 = vst [vmem:[%s597 + $0x8c] sm:$0x1] %v698
    %v700 = vld [vmem:[#allocation2] sm:$0xf]
    %v701 = vld [vmem:[#allocation2 + $0x8] sm:$0xf]
    %v702 = vld [vmem:[#allocation2 + $0x10] sm:$0xf]
    %v703 = vld [vmem:[#allocation2 + $0x18] sm:$0xf]
    %v704 = vld [vmem:[#allocation2 + $0x20] sm:$0xf]
    %v705 = vld [vmem:[#allocation2 + $0x28] sm:$0xf]
    %v706 = vld [vmem:[#allocation2 + $0x30] sm:$0xf]
    %v707 = vld [vmem:[#allocation2 + $0x38] sm:$0xf]
    %v708 = vld [vmem:[#allocation2 + $0x50] sm:$0xf]
    %v709 = vld [vmem:[#allocation2 + $0x58] sm:$0xf]
    %v710 = vld [vmem:[#allocation2 + $0x60] sm:$0xf]
    %v711 = vld [vmem:[#allocation2 + $0x68] sm:$0xf]
    %v712 = vld [vmem:[#allocation2 + $0x70] sm:$0xf]
    %v713 = vld [vmem:[#allocation2 + $0x78] sm:$0xf]
    %v714 = vld [vmem:[#allocation2 + $0x80] sm:$0xf]
    %v715 = vld [vmem:[#allocation2 + $0x88] sm:$0xf]
    %v716 = vld [vmem:[#allocation8] sm:$0xf]
    %v717 = vld [vmem:[#allocation8 + $0x4] sm:$0xf]
    %v718 = vld [vmem:[#allocation8 + $0x8] sm:$0xf]
    %v719 = vld [vmem:[#allocation8 + $0xc] sm:$0xf]
    %v720 = vld [vmem:[#allocation8 + $0x10] sm:$0xf]
    %v721 = vld [vmem:[#allocation8 + $0x14] sm:$0xf]
    %v722 = vld [vmem:[#allocation8 + $0x18] sm:$0xf]
    %v723 = vld [vmem:[#allocation8 + $0x1c] sm:$0xf]
    %v724 = vld [vmem:[#allocation8 + $0x20] sm:$0xf]
    %v725 = vld [vmem:[#allocation8 + $0x24] sm:$0xf]
    %v726 = vld [vmem:[#allocation8 + $0x28] sm:$0xf]
    %v727 = vld [vmem:[#allocation8 + $0x2c] sm:$0xf]
    %v728 = vld [vmem:[#allocation8 + $0x30] sm:$0xf]
    %v729 = vld [vmem:[#allocation8 + $0x34] sm:$0xf]
    %v730 = vld [vmem:[#allocation8 + $0x38] sm:$0xf]
    %v731 = vld [vmem:[#allocation8 + $0x3c] sm:$0xf]
    %v732 = vld [vmem:[#allocation2 + $0x4] sm:$0x1]
    %v733 = vld [vmem:[#allocation2 + $0xc] sm:$0x1]
    %v734 = vld [vmem:[#allocation2 + $0x14] sm:$0x1]
    %v735 = vld [vmem:[#allocation2 + $0x1c] sm:$0x1]
    %v736 = vld [vmem:[#allocation2 + $0x24] sm:$0x1]
    %v737 = vld [vmem:[#allocation2 + $0x2c] sm:$0x1]
    %v738 = vld [vmem:[#allocation2 + $0x34] sm:$0x1]
    %v739 = vld [vmem:[#allocation2 + $0x3c] sm:$0x1]
    %v740 = vld [vmem:[#allocation2 + $0x54] sm:$0x1]
    %v741 = vld [vmem:[#allocation2 + $0x5c] sm:$0x1]
    %v742 = vld [vmem:[#allocation2 + $0x64] sm:$0x1]
    %v743 = vld [vmem:[#allocation2 + $0x6c] sm:$0x1]
    %v744 = vld [vmem:[#allocation2 + $0x74] sm:$0x1]
    %v745 = vld [vmem:[#allocation2 + $0x7c] sm:$0x1]
    %v746 = vld [vmem:[#allocation2 + $0x84] sm:$0x1]
    %v747 = vld [vmem:[#allocation2 + $0x8c] sm:$0x1]
    %vm748 = vsmask.f32 3328
    %vm749 = vsmask.f32 7440
    %vm750 = vmor %vm748, %vm749
    %v752 = vshrl.u32 %v700, 16
    %v754 = vrot.slane %v752, 4
    %v755 = vshll.u32 %v700, 16
    %v757 = vrot.slane %v755, 5
    %v758 = vor.u32 %v754, %v757
    %v759 = vrot.slane %v758, 4
    %v761 = vshll.u32 %v732, 16
    %v763 = vrot.slane %v761, 5
    %v764 = vsel %vm750, %v759, %v763
    %v766 = vshrl.u32 %v701, 16
    %v768 = vrot.slane %v766, 4
    %v769 = vshll.u32 %v701, 16
    %v771 = vrot.slane %v769, 5
    %v772 = vor.u32 %v768, %v771
    %v773 = vrot.slane %v772, 4
    %v775 = vshll.u32 %v733, 16
    %v777 = vrot.slane %v775, 5
    %v778 = vsel %vm750, %v773, %v777
    %v780 = vshrl.u32 %v702, 16
    %v782 = vrot.slane %v780, 4
    %v783 = vshll.u32 %v702, 16
    %v785 = vrot.slane %v783, 5
    %v786 = vor.u32 %v782, %v785
    %v787 = vrot.slane %v786, 4
    %v789 = vshll.u32 %v734, 16
    %v791 = vrot.slane %v789, 5
    %v792 = vsel %vm750, %v787, %v791
    %v794 = vshrl.u32 %v703, 16
    %v796 = vrot.slane %v794, 4
    %v797 = vshll.u32 %v703, 16
    %v799 = vrot.slane %v797, 5
    %v800 = vor.u32 %v796, %v799
    %v801 = vrot.slane %v800, 4
    %v803 = vshll.u32 %v735, 16
    %v805 = vrot.slane %v803, 5
    %v806 = vsel %vm750, %v801, %v805
    %v808 = vshrl.u32 %v704, 16
    %v810 = vrot.slane %v808, 4
    %v811 = vshll.u32 %v704, 16
    %v813 = vrot.slane %v811, 5
    %v814 = vor.u32 %v810, %v813
    %v815 = vrot.slane %v814, 4
    %v817 = vshll.u32 %v736, 16
    %v819 = vrot.slane %v817, 5
    %v820 = vsel %vm750, %v815, %v819
    %v822 = vshrl.u32 %v705, 16
    %v824 = vrot.slane %v822, 4
    %v825 = vshll.u32 %v705, 16
    %v827 = vrot.slane %v825, 5
    %v828 = vor.u32 %v824, %v827
    %v829 = vrot.slane %v828, 4
    %v831 = vshll.u32 %v737, 16
    %v833 = vrot.slane %v831, 5
    %v834 = vsel %vm750, %v829, %v833
    %v836 = vshrl.u32 %v706, 16
    %v838 = vrot.slane %v836, 4
    %v839 = vshll.u32 %v706, 16
    %v841 = vrot.slane %v839, 5
    %v842 = vor.u32 %v838, %v841
    %v843 = vrot.slane %v842, 4
    %v845 = vshll.u32 %v738, 16
    %v847 = vrot.slane %v845, 5
    %v848 = vsel %vm750, %v843, %v847
    %v850 = vshrl.u32 %v707, 16
    %v852 = vrot.slane %v850, 4
    %v853 = vshll.u32 %v707, 16
    %v855 = vrot.slane %v853, 5
    %v856 = vor.u32 %v852, %v855
    %v857 = vrot.slane %v856, 4
    %v859 = vshll.u32 %v739, 16
    %v861 = vrot.slane %v859, 5
    %v862 = vsel %vm750, %v857, %v861
    %v864 = vshrl.u32 %v708, 16
    %v866 = vrot.slane %v864, 4
    %v867 = vshll.u32 %v708, 16
    %v869 = vrot.slane %v867, 5
    %v870 = vor.u32 %v866, %v869
    %v871 = vrot.slane %v870, 4
    %v873 = vshll.u32 %v740, 16
    %v875 = vrot.slane %v873, 5
    %v876 = vsel %vm750, %v871, %v875
    %v878 = vshrl.u32 %v709, 16
    %v880 = vrot.slane %v878, 4
    %v881 = vshll.u32 %v709, 16
    %v883 = vrot.slane %v881, 5
    %v884 = vor.u32 %v880, %v883
    %v885 = vrot.slane %v884, 4
    %v887 = vshll.u32 %v741, 16
    %v889 = vrot.slane %v887, 5
    %v890 = vsel %vm750, %v885, %v889
    %v892 = vshrl.u32 %v710, 16
    %v894 = vrot.slane %v892, 4
    %v895 = vshll.u32 %v710, 16
    %v897 = vrot.slane %v895, 5
    %v898 = vor.u32 %v894, %v897
    %v899 = vrot.slane %v898, 4
    %v901 = vshll.u32 %v742, 16
    %v903 = vrot.slane %v901, 5
    %v904 = vsel %vm750, %v899, %v903
    %v906 = vshrl.u32 %v711, 16
    %v908 = vrot.slane %v906, 4
    %v909 = vshll.u32 %v711, 16
    %v911 = vrot.slane %v909, 5
    %v912 = vor.u32 %v908, %v911
    %v913 = vrot.slane %v912, 4
    %v915 = vshll.u32 %v743, 16
    %v917 = vrot.slane %v915, 5
    %v918 = vsel %vm750, %v913, %v917
    %v920 = vshrl.u32 %v712, 16
    %v922 = vrot.slane %v920, 4
    %v923 = vshll.u32 %v712, 16
    %v925 = vrot.slane %v923, 5
    %v926 = vor.u32 %v922, %v925
    %v927 = vrot.slane %v926, 4
    %v929 = vshll.u32 %v744, 16
    %v931 = vrot.slane %v929, 5
    %v932 = vsel %vm750, %v927, %v931
    %v934 = vshrl.u32 %v713, 16
    %v936 = vrot.slane %v934, 4
    %v937 = vshll.u32 %v713, 16
    %v939 = vrot.slane %v937, 5
    %v940 = vor.u32 %v936, %v939
    %v941 = vrot.slane %v940, 4
    %v943 = vshll.u32 %v745, 16
    %v945 = vrot.slane %v943, 5
    %v946 = vsel %vm750, %v941, %v945
    %v948 = vshrl.u32 %v714, 16
    %v950 = vrot.slane %v948, 4
    %v951 = vshll.u32 %v714, 16
    %v953 = vrot.slane %v951, 5
    %v954 = vor.u32 %v950, %v953
    %v955 = vrot.slane %v954, 4
    %v957 = vshll.u32 %v746, 16
    %v959 = vrot.slane %v957, 5
    %v960 = vsel %vm750, %v955, %v959
    %v962 = vshrl.u32 %v715, 16
    %v964 = vrot.slane %v962, 4
    %v965 = vshll.u32 %v715, 16
    %v967 = vrot.slane %v965, 5
    %v968 = vor.u32 %v964, %v967
    %v969 = vrot.slane %v968, 4
    %v971 = vshll.u32 %v747, 16
    %v973 = vrot.slane %v971, 5
    %v974 = vsel %vm750, %v969, %v973
    %s975 = scalar_lea.vmem [#allocation8], 64
    %v976 = vld [vmem:[%s975] sm:$0xf]
    %v977 = vld [vmem:[%s975 + $0x4] sm:$0xf]
    %v978 = vld [vmem:[%s975 + $0x8] sm:$0xf]
    %v979 = vld [vmem:[%s975 + $0xc] sm:$0xf]
    %v980 = vld [vmem:[%s975 + $0x10] sm:$0xf]
    %v981 = vld [vmem:[%s975 + $0x14] sm:$0xf]
    %v982 = vld [vmem:[%s975 + $0x18] sm:$0xf]
    %v983 = vld [vmem:[%s975 + $0x1c] sm:$0xf]
    %v984 = vld [vmem:[%s975 + $0x20] sm:$0xf]
    %v985 = vld [vmem:[%s975 + $0x24] sm:$0xf]
    %v986 = vld [vmem:[%s975 + $0x28] sm:$0xf]
    %v987 = vld [vmem:[%s975 + $0x2c] sm:$0xf]
    %v988 = vld [vmem:[%s975 + $0x30] sm:$0xf]
    %v989 = vld [vmem:[%s975 + $0x34] sm:$0xf]
    %v990 = vld [vmem:[%s975 + $0x38] sm:$0xf]
    %v991 = vld [vmem:[%s975 + $0x3c] sm:$0xf]
    %v992 = vunpack.c.l.b16 %v764
    %v993 = vunpack.c.l.b16 %v778
    %v994 = vunpack.c.l.b16 %v792
    %v995 = vunpack.c.l.b16 %v806
    %v996 = vunpack.c.l.b16 %v820
    %v997 = vunpack.c.l.b16 %v834
    %v998 = vunpack.c.l.b16 %v848
    %v999 = vunpack.c.l.b16 %v862
    %v1000 = vunpack.c.l.b16 %v876
    %v1001 = vunpack.c.l.b16 %v890
    %v1002 = vunpack.c.l.b16 %v904
    %v1003 = vunpack.c.l.b16 %v918
    %v1004 = vunpack.c.l.b16 %v932
    %v1005 = vunpack.c.l.b16 %v946
    %v1006 = vunpack.c.l.b16 %v960
    %v1007 = vunpack.c.l.b16 %v974
    %v1008 = vpack.c.b16 %v993, %v992
    %v1009 = vpack.c.b16 %v995, %v994
    %v1010 = vpack.c.b16 %v997, %v996
    %v1011 = vpack.c.b16 %v999, %v998
    %v1012 = vpack.c.b16 %v1001, %v1000
    %v1013 = vpack.c.b16 %v1003, %v1002
    %v1014 = vpack.c.b16 %v1005, %v1004
    %v1015 = vpack.c.b16 %v1007, %v1006
    %v1040 = vunpack.c.l.b16 %v976
    %v1041 = vunpack.c.l.b16 %v977
    %v1042 = vunpack.c.l.b16 %v978
    %v1043 = vunpack.c.l.b16 %v979
    %v1044 = vunpack.c.l.b16 %v980
    %v1045 = vunpack.c.l.b16 %v981
    %v1046 = vunpack.c.l.b16 %v982
    %v1047 = vunpack.c.l.b16 %v983
    %v1048 = vunpack.c.l.b16 %v984
    %v1049 = vunpack.c.l.b16 %v985
    %v1050 = vunpack.c.l.b16 %v986
    %v1051 = vunpack.c.l.b16 %v987
    %v1052 = vunpack.c.l.b16 %v988
    %v1053 = vunpack.c.l.b16 %v989
    %v1054 = vunpack.c.l.b16 %v990
    %v1055 = vunpack.c.l.b16 %v991
    %v1056 = vpack.c.b16 %v1041, %v1040
    %v1057 = vpack.c.b16 %v1043, %v1042
    %v1058 = vpack.c.b16 %v1045, %v1044
    %v1059 = vpack.c.b16 %v1047, %v1046
    %v1060 = vpack.c.b16 %v1049, %v1048
    %v1061 = vpack.c.b16 %v1051, %v1050
    %v1062 = vpack.c.b16 %v1053, %v1052
    %v1063 = vpack.c.b16 %v1055, %v1054
    %1072 = vmatpush.bf16.msra.mxu0 %v1063
    %1073 = vmatpush.bf16.msra.mxu0 %v1062
    %1074 = vmatpush.bf16.msra.mxu0 %v1061
    %1075 = vmatpush.bf16.msra.mxu0 %v1060
    %1076 = vmatpush.bf16.msra.mxu0 %v1059
    %1077 = vmatpush.bf16.msra.mxu0 %v1058
    %1078 = vmatpush.bf16.msra.mxu0 %v1057
    %1079 = vmatpush.bf16.msra.mxu0 %v1056
    %1080 = vmatmul.bf16.gmra.mxu0 %v1008
    %v1081 = vpop.f32.mrf.mxu0
    %v1082 = vadd.f32 0.0, %v1081
    %v1083 = vpop.f32.mrf.mxu0
    %v1084 = vadd.f32 0.0, %v1083
    %1085 = vmatmul.bf16.gmra.mxu0 %v1009
    %v1086 = vpop.f32.mrf.mxu0
    %v1087 = vadd.f32 0.0, %v1086
    %v1088 = vpop.f32.mrf.mxu0
    %v1089 = vadd.f32 0.0, %v1088
    %1090 = vmatmul.bf16.gmra.mxu0 %v1010
    %v1091 = vpop.f32.mrf.mxu0
    %v1092 = vadd.f32 0.0, %v1091
    %v1093 = vpop.f32.mrf.mxu0
    %v1094 = vadd.f32 0.0, %v1093
    %1095 = vmatmul.bf16.gmra.mxu0 %v1011
    %v1096 = vpop.f32.mrf.mxu0
    %v1097 = vadd.f32 0.0, %v1096
    %v1098 = vpop.f32.mrf.mxu0
    %v1099 = vadd.f32 0.0, %v1098
    %1100 = vmatmul.bf16.gmra.mxu0 %v1012
    %v1101 = vpop.f32.mrf.mxu0
    %v1102 = vadd.f32 0.0, %v1101
    %v1103 = vpop.f32.mrf.mxu0
    %v1104 = vadd.f32 0.0, %v1103
    %1105 = vmatmul.bf16.gmra.mxu0 %v1013
    %v1106 = vpop.f32.mrf.mxu0
    %v1107 = vadd.f32 0.0, %v1106
    %v1108 = vpop.f32.mrf.mxu0
    %v1109 = vadd.f32 0.0, %v1108
    %1110 = vmatmul.bf16.gmra.mxu0 %v1014
    %v1111 = vpop.f32.mrf.mxu0
    %v1112 = vadd.f32 0.0, %v1111
    %v1113 = vpop.f32.mrf.mxu0
    %v1114 = vadd.f32 0.0, %v1113
    %1115 = vmatmul.bf16.gmra.mxu0 %v1015
    %v1116 = vpop.f32.mrf.mxu0
    %v1117 = vadd.f32 0.0, %v1116
    %v1118 = vpop.f32.mrf.mxu0
    %v1119 = vadd.f32 0.0, %v1118
    %1120 = vdwg.mxu0
    %v1137 = vunpack.c.l.b16 %v700
    %v1138 = vunpack.c.l.b16 %v701
    %v1139 = vunpack.c.l.b16 %v702
    %v1140 = vunpack.c.l.b16 %v703
    %v1141 = vunpack.c.l.b16 %v704
    %v1142 = vunpack.c.l.b16 %v705
    %v1143 = vunpack.c.l.b16 %v706
    %v1144 = vunpack.c.l.b16 %v707
    %v1145 = vunpack.c.l.b16 %v708
    %v1146 = vunpack.c.l.b16 %v709
    %v1147 = vunpack.c.l.b16 %v710
    %v1148 = vunpack.c.l.b16 %v711
    %v1149 = vunpack.c.l.b16 %v712
    %v1150 = vunpack.c.l.b16 %v713
    %v1151 = vunpack.c.l.b16 %v714
    %v1152 = vunpack.c.l.b16 %v715
    %v1153 = vpack.c.b16 %v1138, %v1137
    %v1154 = vpack.c.b16 %v1140, %v1139
    %v1155 = vpack.c.b16 %v1142, %v1141
    %v1156 = vpack.c.b16 %v1144, %v1143
    %v1157 = vpack.c.b16 %v1146, %v1145
    %v1158 = vpack.c.b16 %v1148, %v1147
    %v1159 = vpack.c.b16 %v1150, %v1149
    %v1160 = vpack.c.b16 %v1152, %v1151
    %v1185 = vunpack.c.l.b16 %v716
    %v1186 = vunpack.c.l.b16 %v717
    %v1187 = vunpack.c.l.b16 %v718
    %v1188 = vunpack.c.l.b16 %v719
    %v1189 = vunpack.c.l.b16 %v720
    %v1190 = vunpack.c.l.b16 %v721
    %v1191 = vunpack.c.l.b16 %v722
    %v1192 = vunpack.c.l.b16 %v723
    %v1193 = vunpack.c.l.b16 %v724
    %v1194 = vunpack.c.l.b16 %v725
    %v1195 = vunpack.c.l.b16 %v726
    %v1196 = vunpack.c.l.b16 %v727
    %v1197 = vunpack.c.l.b16 %v728
    %v1198 = vunpack.c.l.b16 %v729
    %v1199 = vunpack.c.l.b16 %v730
    %v1200 = vunpack.c.l.b16 %v731
    %v1201 = vpack.c.b16 %v1186, %v1185
    %v1202 = vpack.c.b16 %v1188, %v1187
    %v1203 = vpack.c.b16 %v1190, %v1189
    %v1204 = vpack.c.b16 %v1192, %v1191
    %v1205 = vpack.c.b16 %v1194, %v1193
    %v1206 = vpack.c.b16 %v1196, %v1195
    %v1207 = vpack.c.b16 %v1198, %v1197
    %v1208 = vpack.c.b16 %v1200, %v1199
    %1217 = vmatpush.bf16.msra.mxu0 %v1208
    %1218 = vmatpush.bf16.msra.mxu0 %v1207
    %1219 = vmatpush.bf16.msra.mxu0 %v1206
    %1220 = vmatpush.bf16.msra.mxu0 %v1205
    %1221 = vmatpush.bf16.msra.mxu0 %v1204
    %1222 = vmatpush.bf16.msra.mxu0 %v1203
    %1223 = vmatpush.bf16.msra.mxu0 %v1202
    %1224 = vmatpush.bf16.msra.mxu0 %v1201
    %1225 = vmatmul.bf16.gmra.mxu0 %v1153
    %v1226 = vpop.f32.mrf.mxu0
    %v1227 = vadd.f32 %v1082, %v1226
    %v1228 = vpop.f32.mrf.mxu0
    %v1229 = vadd.f32 %v1084, %v1228
    %1230 = vmatmul.bf16.gmra.mxu0 %v1154
    %v1231 = vpop.f32.mrf.mxu0
    %v1232 = vadd.f32 %v1087, %v1231
    %v1233 = vpop.f32.mrf.mxu0
    %v1234 = vadd.f32 %v1089, %v1233
    %1235 = vmatmul.bf16.gmra.mxu0 %v1155
    %v1236 = vpop.f32.mrf.mxu0
    %v1237 = vadd.f32 %v1092, %v1236
    %v1238 = vpop.f32.mrf.mxu0
    %v1239 = vadd.f32 %v1094, %v1238
    %1240 = vmatmul.bf16.gmra.mxu0 %v1156
    %v1241 = vpop.f32.mrf.mxu0
    %v1242 = vadd.f32 %v1097, %v1241
    %v1243 = vpop.f32.mrf.mxu0
    %v1244 = vadd.f32 %v1099, %v1243
    %1245 = vmatmul.bf16.gmra.mxu0 %v1157
    %v1246 = vpop.f32.mrf.mxu0
    %v1247 = vadd.f32 %v1102, %v1246
    %v1248 = vpop.f32.mrf.mxu0
    %v1249 = vadd.f32 %v1104, %v1248
    %1250 = vmatmul.bf16.gmra.mxu0 %v1158
    %v1251 = vpop.f32.mrf.mxu0
    %v1252 = vadd.f32 %v1107, %v1251
    %v1253 = vpop.f32.mrf.mxu0
    %v1254 = vadd.f32 %v1109, %v1253
    %1255 = vmatmul.bf16.gmra.mxu0 %v1159
    %v1256 = vpop.f32.mrf.mxu0
    %v1257 = vadd.f32 %v1112, %v1256
    %v1258 = vpop.f32.mrf.mxu0
    %v1259 = vadd.f32 %v1114, %v1258
    %1260 = vmatmul.bf16.gmra.mxu0 %v1160
    %v1261 = vpop.f32.mrf.mxu0
    %v1262 = vadd.f32 %v1117, %v1261
    %v1263 = vpop.f32.mrf.mxu0
    %v1264 = vadd.f32 %v1119, %v1263
    %1265 = vdwg.mxu0
    %v1266 = vld [vmem:[#allocation2] sm:$0xe]
    %v1267 = vld [vmem:[#allocation2 + $0x8] sm:$0xe]
    %v1268 = vld [vmem:[#allocation2 + $0x10] sm:$0xe]
    %v1269 = vld [vmem:[#allocation2 + $0x18] sm:$0xe]
    %v1270 = vld [vmem:[#allocation2 + $0x20] sm:$0xe]
    %v1271 = vld [vmem:[#allocation2 + $0x28] sm:$0xe]
    %v1272 = vld [vmem:[#allocation2 + $0x30] sm:$0xe]
    %v1273 = vld [vmem:[#allocation2 + $0x38] sm:$0xe]
    %v1274 = vld [vmem:[#allocation2 + $0x50] sm:$0xe]
    %v1275 = vld [vmem:[#allocation2 + $0x58] sm:$0xe]
    %v1276 = vld [vmem:[#allocation2 + $0x60] sm:$0xe]
    %v1277 = vld [vmem:[#allocation2 + $0x68] sm:$0xe]
    %v1278 = vld [vmem:[#allocation2 + $0x70] sm:$0xe]
    %v1279 = vld [vmem:[#allocation2 + $0x78] sm:$0xe]
    %v1280 = vld [vmem:[#allocation2 + $0x80] sm:$0xe]
    %v1281 = vld [vmem:[#allocation2 + $0x88] sm:$0xe]
    %vm1314 = vcmask 1042432
    %vm1315 = vcmask 1046532
    %vm1316 = vmor %vm1314, %vm1315
    %v1317 = vrot.slane %v1266, 5
    %v1318 = vrot.slane %v1317, 4
    %v1319 = vrot.slane %v732, 5
    %v1320 = vsel %vm1316, %v1318, %v1319
    %v1321 = vrot.slane %v1267, 5
    %v1322 = vrot.slane %v1321, 4
    %v1323 = vrot.slane %v733, 5
    %v1324 = vsel %vm1316, %v1322, %v1323
    %v1325 = vrot.slane %v1268, 5
    %v1326 = vrot.slane %v1325, 4
    %v1327 = vrot.slane %v734, 5
    %v1328 = vsel %vm1316, %v1326, %v1327
    %v1329 = vrot.slane %v1269, 5
    %v1330 = vrot.slane %v1329, 4
    %v1331 = vrot.slane %v735, 5
    %v1332 = vsel %vm1316, %v1330, %v1331
    %v1333 = vrot.slane %v1270, 5
    %v1334 = vrot.slane %v1333, 4
    %v1335 = vrot.slane %v736, 5
    %v1336 = vsel %vm1316, %v1334, %v1335
    %v1337 = vrot.slane %v1271, 5
    %v1338 = vrot.slane %v1337, 4
    %v1339 = vrot.slane %v737, 5
    %v1340 = vsel %vm1316, %v1338, %v1339
    %v1341 = vrot.slane %v1272, 5
    %v1342 = vrot.slane %v1341, 4
    %v1343 = vrot.slane %v738, 5
    %v1344 = vsel %vm1316, %v1342, %v1343
    %v1345 = vrot.slane %v1273, 5
    %v1346 = vrot.slane %v1345, 4
    %v1347 = vrot.slane %v739, 5
    %v1348 = vsel %vm1316, %v1346, %v1347
    %v1349 = vrot.slane %v1274, 5
    %v1350 = vrot.slane %v1349, 4
    %v1351 = vrot.slane %v740, 5
    %v1352 = vsel %vm1316, %v1350, %v1351
    %v1353 = vrot.slane %v1275, 5
    %v1354 = vrot.slane %v1353, 4
    %v1355 = vrot.slane %v741, 5
    %v1356 = vsel %vm1316, %v1354, %v1355
    %v1357 = vrot.slane %v1276, 5
    %v1358 = vrot.slane %v1357, 4
    %v1359 = vrot.slane %v742, 5
    %v1360 = vsel %vm1316, %v1358, %v1359
    %v1361 = vrot.slane %v1277, 5
    %v1362 = vrot.slane %v1361, 4
    %v1363 = vrot.slane %v743, 5
    %v1364 = vsel %vm1316, %v1362, %v1363
    %v1365 = vrot.slane %v1278, 5
    %v1366 = vrot.slane %v1365, 4
    %v1367 = vrot.slane %v744, 5
    %v1368 = vsel %vm1316, %v1366, %v1367
    %v1369 = vrot.slane %v1279, 5
    %v1370 = vrot.slane %v1369, 4
    %v1371 = vrot.slane %v745, 5
    %v1372 = vsel %vm1316, %v1370, %v1371
    %v1373 = vrot.slane %v1280, 5
    %v1374 = vrot.slane %v1373, 4
    %v1375 = vrot.slane %v746, 5
    %v1376 = vsel %vm1316, %v1374, %v1375
    %v1377 = vrot.slane %v1281, 5
    %v1378 = vrot.slane %v1377, 4
    %v1379 = vrot.slane %v747, 5
    %v1380 = vsel %vm1316, %v1378, %v1379
    %s1381 = scalar_lea.vmem [#allocation8], 128
    %v1382 = vld [vmem:[%s1381] sm:$0xf]
    %v1383 = vld [vmem:[%s1381 + $0x4] sm:$0xf]
    %v1384 = vld [vmem:[%s1381 + $0x8] sm:$0xf]
    %v1385 = vld [vmem:[%s1381 + $0xc] sm:$0xf]
    %v1386 = vld [vmem:[%s1381 + $0x10] sm:$0xf]
    %v1387 = vld [vmem:[%s1381 + $0x14] sm:$0xf]
    %v1388 = vld [vmem:[%s1381 + $0x18] sm:$0xf]
    %v1389 = vld [vmem:[%s1381 + $0x1c] sm:$0xf]
    %v1390 = vld [vmem:[%s1381 + $0x20] sm:$0xf]
    %v1391 = vld [vmem:[%s1381 + $0x24] sm:$0xf]
    %v1392 = vld [vmem:[%s1381 + $0x28] sm:$0xf]
    %v1393 = vld [vmem:[%s1381 + $0x2c] sm:$0xf]
    %v1394 = vld [vmem:[%s1381 + $0x30] sm:$0xf]
    %v1395 = vld [vmem:[%s1381 + $0x34] sm:$0xf]
    %v1396 = vld [vmem:[%s1381 + $0x38] sm:$0xf]
    %v1397 = vld [vmem:[%s1381 + $0x3c] sm:$0xf]
    %v1398 = vunpack.c.l.b16 %v1320
    %v1399 = vunpack.c.l.b16 %v1324
    %v1400 = vunpack.c.l.b16 %v1328
    %v1401 = vunpack.c.l.b16 %v1332
    %v1402 = vunpack.c.l.b16 %v1336
    %v1403 = vunpack.c.l.b16 %v1340
    %v1404 = vunpack.c.l.b16 %v1344
    %v1405 = vunpack.c.l.b16 %v1348
    %v1406 = vunpack.c.l.b16 %v1352
    %v1407 = vunpack.c.l.b16 %v1356
    %v1408 = vunpack.c.l.b16 %v1360
    %v1409 = vunpack.c.l.b16 %v1364
    %v1410 = vunpack.c.l.b16 %v1368
    %v1411 = vunpack.c.l.b16 %v1372
    %v1412 = vunpack.c.l.b16 %v1376
    %v1413 = vunpack.c.l.b16 %v1380
    %v1414 = vpack.c.b16 %v1399, %v1398
    %v1415 = vpack.c.b16 %v1401, %v1400
    %v1416 = vpack.c.b16 %v1403, %v1402
    %v1417 = vpack.c.b16 %v1405, %v1404
    %v1418 = vpack.c.b16 %v1407, %v1406
    %v1419 = vpack.c.b16 %v1409, %v1408
    %v1420 = vpack.c.b16 %v1411, %v1410
    %v1421 = vpack.c.b16 %v1413, %v1412
    %v1446 = vunpack.c.l.b16 %v1382
    %v1447 = vunpack.c.l.b16 %v1383
    %v1448 = vunpack.c.l.b16 %v1384
    %v1449 = vunpack.c.l.b16 %v1385
    %v1450 = vunpack.c.l.b16 %v1386
    %v1451 = vunpack.c.l.b16 %v1387
    %v1452 = vunpack.c.l.b16 %v1388
    %v1453 = vunpack.c.l.b16 %v1389
    %v1454 = vunpack.c.l.b16 %v1390
    %v1455 = vunpack.c.l.b16 %v1391
    %v1456 = vunpack.c.l.b16 %v1392
    %v1457 = vunpack.c.l.b16 %v1393
    %v1458 = vunpack.c.l.b16 %v1394
    %v1459 = vunpack.c.l.b16 %v1395
    %v1460 = vunpack.c.l.b16 %v1396
    %v1461 = vunpack.c.l.b16 %v1397
    %v1462 = vpack.c.b16 %v1447, %v1446
    %v1463 = vpack.c.b16 %v1449, %v1448
    %v1464 = vpack.c.b16 %v1451, %v1450
    %v1465 = vpack.c.b16 %v1453, %v1452
    %v1466 = vpack.c.b16 %v1455, %v1454
    %v1467 = vpack.c.b16 %v1457, %v1456
    %v1468 = vpack.c.b16 %v1459, %v1458
    %v1469 = vpack.c.b16 %v1461, %v1460
    %1478 = vmatpush.bf16.msra.mxu0 %v1469
    %1479 = vmatpush.bf16.msra.mxu0 %v1468
    %1480 = vmatpush.bf16.msra.mxu0 %v1467
    %1481 = vmatpush.bf16.msra.mxu0 %v1466
    %1482 = vmatpush.bf16.msra.mxu0 %v1465
    %1483 = vmatpush.bf16.msra.mxu0 %v1464
    %1484 = vmatpush.bf16.msra.mxu0 %v1463
    %1485 = vmatpush.bf16.msra.mxu0 %v1462
    %1486 = vmatmul.bf16.gmra.mxu0 %v1414
    %v1487 = vpop.f32.mrf.mxu0
    %v1488 = vadd.f32 0.0, %v1487
    %v1489 = vpop.f32.mrf.mxu0
    %v1490 = vadd.f32 0.0, %v1489
    %1491 = vmatmul.bf16.gmra.mxu0 %v1415
    %v1492 = vpop.f32.mrf.mxu0
    %v1493 = vadd.f32 0.0, %v1492
    %v1494 = vpop.f32.mrf.mxu0
    %v1495 = vadd.f32 0.0, %v1494
    %1496 = vmatmul.bf16.gmra.mxu0 %v1416
    %v1497 = vpop.f32.mrf.mxu0
    %v1498 = vadd.f32 0.0, %v1497
    %v1499 = vpop.f32.mrf.mxu0
    %v1500 = vadd.f32 0.0, %v1499
    %1501 = vmatmul.bf16.gmra.mxu0 %v1417
    %v1502 = vpop.f32.mrf.mxu0
    %v1503 = vadd.f32 0.0, %v1502
    %v1504 = vpop.f32.mrf.mxu0
    %v1505 = vadd.f32 0.0, %v1504
    %1506 = vmatmul.bf16.gmra.mxu0 %v1418
    %v1507 = vpop.f32.mrf.mxu0
    %v1508 = vadd.f32 0.0, %v1507
    %v1509 = vpop.f32.mrf.mxu0
    %v1510 = vadd.f32 0.0, %v1509
    %1511 = vmatmul.bf16.gmra.mxu0 %v1419
    %v1512 = vpop.f32.mrf.mxu0
    %v1513 = vadd.f32 0.0, %v1512
    %v1514 = vpop.f32.mrf.mxu0
    %v1515 = vadd.f32 0.0, %v1514
    %1516 = vmatmul.bf16.gmra.mxu0 %v1420
    %v1517 = vpop.f32.mrf.mxu0
    %v1518 = vadd.f32 0.0, %v1517
    %v1519 = vpop.f32.mrf.mxu0
    %v1520 = vadd.f32 0.0, %v1519
    %1521 = vmatmul.bf16.gmra.mxu0 %v1421
    %v1522 = vpop.f32.mrf.mxu0
    %v1523 = vadd.f32 0.0, %v1522
    %v1524 = vpop.f32.mrf.mxu0
    %v1525 = vadd.f32 0.0, %v1524
    %1526 = vdwg.mxu0
    %v1527 = vadd.f32 %v1227, %v1488
    %v1528 = vadd.f32 %v1229, %v1490
    %v1529 = vadd.f32 %v1232, %v1493
    %v1530 = vadd.f32 %v1234, %v1495
    %v1531 = vadd.f32 %v1237, %v1498
    %v1532 = vadd.f32 %v1239, %v1500
    %v1533 = vadd.f32 %v1242, %v1503
    %v1534 = vadd.f32 %v1244, %v1505
    %v1535 = vadd.f32 %v1247, %v1508
    %v1536 = vadd.f32 %v1249, %v1510
    %v1537 = vadd.f32 %v1252, %v1513
    %v1538 = vadd.f32 %v1254, %v1515
    %v1539 = vadd.f32 %v1257, %v1518
    %v1540 = vadd.f32 %v1259, %v1520
    %v1541 = vadd.f32 %v1262, %v1523
    %v1542 = vadd.f32 %v1264, %v1525
    %v1543 = vld [vmem:[%s597] sm:$0xf]
    %v1544 = vld [vmem:[%s597 + $0x8] sm:$0xf]
    %v1545 = vld [vmem:[%s597 + $0x10] sm:$0xf]
    %v1546 = vld [vmem:[%s597 + $0x18] sm:$0xf]
    %v1547 = vld [vmem:[%s597 + $0x20] sm:$0xf]
    %v1548 = vld [vmem:[%s597 + $0x28] sm:$0xf]
    %v1549 = vld [vmem:[%s597 + $0x30] sm:$0xf]
    %v1550 = vld [vmem:[%s597 + $0x38] sm:$0xf]
    %v1551 = vld [vmem:[%s597 + $0x50] sm:$0xf]
    %v1552 = vld [vmem:[%s597 + $0x58] sm:$0xf]
    %v1553 = vld [vmem:[%s597 + $0x60] sm:$0xf]
    %v1554 = vld [vmem:[%s597 + $0x68] sm:$0xf]
    %v1555 = vld [vmem:[%s597 + $0x70] sm:$0xf]
    %v1556 = vld [vmem:[%s597 + $0x78] sm:$0xf]
    %v1557 = vld [vmem:[%s597 + $0x80] sm:$0xf]
    %v1558 = vld [vmem:[%s597 + $0x88] sm:$0xf]
    %s1559 = scalar_lea.vmem [#allocation8], 192
    %v1560 = vld [vmem:[%s1559] sm:$0xf]
    %v1561 = vld [vmem:[%s1559 + $0x4] sm:$0xf]
    %v1562 = vld [vmem:[%s1559 + $0x8] sm:$0xf]
    %v1563 = vld [vmem:[%s1559 + $0xc] sm:$0xf]
    %v1564 = vld [vmem:[%s1559 + $0x10] sm:$0xf]
    %v1565 = vld [vmem:[%s1559 + $0x14] sm:$0xf]
    %v1566 = vld [vmem:[%s1559 + $0x18] sm:$0xf]
    %v1567 = vld [vmem:[%s1559 + $0x1c] sm:$0xf]
    %v1568 = vld [vmem:[%s1559 + $0x20] sm:$0xf]
    %v1569 = vld [vmem:[%s1559 + $0x24] sm:$0xf]
    %v1570 = vld [vmem:[%s1559 + $0x28] sm:$0xf]
    %v1571 = vld [vmem:[%s1559 + $0x2c] sm:$0xf]
    %v1572 = vld [vmem:[%s1559 + $0x30] sm:$0xf]
    %v1573 = vld [vmem:[%s1559 + $0x34] sm:$0xf]
    %v1574 = vld [vmem:[%s1559 + $0x38] sm:$0xf]
    %v1575 = vld [vmem:[%s1559 + $0x3c] sm:$0xf]
    %v1592 = vunpack.c.l.b16 %v1543
    %v1593 = vunpack.c.l.b16 %v1544
    %v1594 = vunpack.c.l.b16 %v1545
    %v1595 = vunpack.c.l.b16 %v1546
    %v1596 = vunpack.c.l.b16 %v1547
    %v1597 = vunpack.c.l.b16 %v1548
    %v1598 = vunpack.c.l.b16 %v1549
    %v1599 = vunpack.c.l.b16 %v1550
    %v1600 = vunpack.c.l.b16 %v1551
    %v1601 = vunpack.c.l.b16 %v1552
    %v1602 = vunpack.c.l.b16 %v1553
    %v1603 = vunpack.c.l.b16 %v1554
    %v1604 = vunpack.c.l.b16 %v1555
    %v1605 = vunpack.c.l.b16 %v1556
    %v1606 = vunpack.c.l.b16 %v1557
    %v1607 = vunpack.c.l.b16 %v1558
    %v1608 = vpack.c.b16 %v1593, %v1592
    %v1609 = vpack.c.b16 %v1595, %v1594
    %v1610 = vpack.c.b16 %v1597, %v1596
    %v1611 = vpack.c.b16 %v1599, %v1598
    %v1612 = vpack.c.b16 %v1601, %v1600
    %v1613 = vpack.c.b16 %v1603, %v1602
    %v1614 = vpack.c.b16 %v1605, %v1604
    %v1615 = vpack.c.b16 %v1607, %v1606
    %v1640 = vunpack.c.l.b16 %v1560
    %v1641 = vunpack.c.l.b16 %v1561
    %v1642 = vunpack.c.l.b16 %v1562
    %v1643 = vunpack.c.l.b16 %v1563
    %v1644 = vunpack.c.l.b16 %v1564
    %v1645 = vunpack.c.l.b16 %v1565
    %v1646 = vunpack.c.l.b16 %v1566
    %v1647 = vunpack.c.l.b16 %v1567
    %v1648 = vunpack.c.l.b16 %v1568
    %v1649 = vunpack.c.l.b16 %v1569
    %v1650 = vunpack.c.l.b16 %v1570
    %v1651 = vunpack.c.l.b16 %v1571
    %v1652 = vunpack.c.l.b16 %v1572
    %v1653 = vunpack.c.l.b16 %v1573
    %v1654 = vunpack.c.l.b16 %v1574
    %v1655 = vunpack.c.l.b16 %v1575
    %v1656 = vpack.c.b16 %v1641, %v1640
    %v1657 = vpack.c.b16 %v1643, %v1642
    %v1658 = vpack.c.b16 %v1645, %v1644
    %v1659 = vpack.c.b16 %v1647, %v1646
    %v1660 = vpack.c.b16 %v1649, %v1648
    %v1661 = vpack.c.b16 %v1651, %v1650
    %v1662 = vpack.c.b16 %v1653, %v1652
    %v1663 = vpack.c.b16 %v1655, %v1654
    %1672 = vmatpush.bf16.msra.mxu0 %v1663
    %1673 = vmatpush.bf16.msra.mxu0 %v1662
    %1674 = vmatpush.bf16.msra.mxu0 %v1661
    %1675 = vmatpush.bf16.msra.mxu0 %v1660
    %1676 = vmatpush.bf16.msra.mxu0 %v1659
    %1677 = vmatpush.bf16.msra.mxu0 %v1658
    %1678 = vmatpush.bf16.msra.mxu0 %v1657
    %1679 = vmatpush.bf16.msra.mxu0 %v1656
    %1680 = vmatmul.bf16.gmra.mxu0 %v1608
    %v1681 = vpop.f32.mrf.mxu0
    %v1682 = vadd.f32 0.0, %v1681
    %v1683 = vpop.f32.mrf.mxu0
    %v1684 = vadd.f32 0.0, %v1683
    %1685 = vmatmul.bf16.gmra.mxu0 %v1609
    %v1686 = vpop.f32.mrf.mxu0
    %v1687 = vadd.f32 0.0, %v1686
    %v1688 = vpop.f32.mrf.mxu0
    %v1689 = vadd.f32 0.0, %v1688
    %1690 = vmatmul.bf16.gmra.mxu0 %v1610
    %v1691 = vpop.f32.mrf.mxu0
    %v1692 = vadd.f32 0.0, %v1691
    %v1693 = vpop.f32.mrf.mxu0
    %v1694 = vadd.f32 0.0, %v1693
    %1695 = vmatmul.bf16.gmra.mxu0 %v1611
    %v1696 = vpop.f32.mrf.mxu0
    %v1697 = vadd.f32 0.0, %v1696
    %v1698 = vpop.f32.mrf.mxu0
    %v1699 = vadd.f32 0.0, %v1698
    %1700 = vmatmul.bf16.gmra.mxu0 %v1612
    %v1701 = vpop.f32.mrf.mxu0
    %v1702 = vadd.f32 0.0, %v1701
    %v1703 = vpop.f32.mrf.mxu0
    %v1704 = vadd.f32 0.0, %v1703
    %1705 = vmatmul.bf16.gmra.mxu0 %v1613
    %v1706 = vpop.f32.mrf.mxu0
    %v1707 = vadd.f32 0.0, %v1706
    %v1708 = vpop.f32.mrf.mxu0
    %v1709 = vadd.f32 0.0, %v1708
    %1710 = vmatmul.bf16.gmra.mxu0 %v1614
    %v1711 = vpop.f32.mrf.mxu0
    %v1712 = vadd.f32 0.0, %v1711
    %v1713 = vpop.f32.mrf.mxu0
    %v1714 = vadd.f32 0.0, %v1713
    %1715 = vmatmul.bf16.gmra.mxu0 %v1615
    %v1716 = vpop.f32.mrf.mxu0
    %v1717 = vadd.f32 0.0, %v1716
    %v1718 = vpop.f32.mrf.mxu0
    %v1719 = vadd.f32 0.0, %v1718
    %1720 = vdwg.mxu0
    %v1721 = vadd.f32 %v1527, %v1682
    %v1722 = vadd.f32 %v1528, %v1684
    %v1723 = vadd.f32 %v1529, %v1687
    %v1724 = vadd.f32 %v1530, %v1689
    %v1725 = vadd.f32 %v1531, %v1692
    %v1726 = vadd.f32 %v1532, %v1694
    %v1727 = vadd.f32 %v1533, %v1697
    %v1728 = vadd.f32 %v1534, %v1699
    %v1729 = vadd.f32 %v1535, %v1702
    %v1730 = vadd.f32 %v1536, %v1704
    %v1731 = vadd.f32 %v1537, %v1707
    %v1732 = vadd.f32 %v1538, %v1709
    %v1733 = vadd.f32 %v1539, %v1712
    %v1734 = vadd.f32 %v1540, %v1714
    %v1735 = vadd.f32 %v1541, %v1717
    %v1736 = vadd.f32 %v1542, %v1719
    %v1737 = vld [vmem:[%s597] sm:$0xf]
    %v1738 = vld [vmem:[%s597 + $0x4] sm:$0x1]
    %v1739 = vld [vmem:[%s597 + $0x8] sm:$0xf]
    %v1740 = vld [vmem:[%s597 + $0xc] sm:$0x1]
    %v1741 = vld [vmem:[%s597 + $0x10] sm:$0xf]
    %v1742 = vld [vmem:[%s597 + $0x14] sm:$0x1]
    %v1743 = vld [vmem:[%s597 + $0x18] sm:$0xf]
    %v1744 = vld [vmem:[%s597 + $0x1c] sm:$0x1]
    %v1745 = vld [vmem:[%s597 + $0x20] sm:$0xf]
    %v1746 = vld [vmem:[%s597 + $0x24] sm:$0x1]
    %v1747 = vld [vmem:[%s597 + $0x28] sm:$0xf]
    %v1748 = vld [vmem:[%s597 + $0x2c] sm:$0x1]
    %v1749 = vld [vmem:[%s597 + $0x30] sm:$0xf]
    %v1750 = vld [vmem:[%s597 + $0x34] sm:$0x1]
    %v1751 = vld [vmem:[%s597 + $0x38] sm:$0xf]
    %v1752 = vld [vmem:[%s597 + $0x3c] sm:$0x1]
    %v1753 = vld [vmem:[%s597 + $0x50] sm:$0xf]
    %v1754 = vld [vmem:[%s597 + $0x54] sm:$0x1]
    %v1755 = vld [vmem:[%s597 + $0x58] sm:$0xf]
    %v1756 = vld [vmem:[%s597 + $0x5c] sm:$0x1]
    %v1757 = vld [vmem:[%s597 + $0x60] sm:$0xf]
    %v1758 = vld [vmem:[%s597 + $0x64] sm:$0x1]
    %v1759 = vld [vmem:[%s597 + $0x68] sm:$0xf]
    %v1760 = vld [vmem:[%s597 + $0x6c] sm:$0x1]
    %v1761 = vld [vmem:[%s597 + $0x70] sm:$0xf]
    %v1762 = vld [vmem:[%s597 + $0x74] sm:$0x1]
    %v1763 = vld [vmem:[%s597 + $0x78] sm:$0xf]
    %v1764 = vld [vmem:[%s597 + $0x7c] sm:$0x1]
    %v1765 = vld [vmem:[%s597 + $0x80] sm:$0xf]
    %v1766 = vld [vmem:[%s597 + $0x84] sm:$0x1]
    %v1767 = vld [vmem:[%s597 + $0x88] sm:$0xf]
    %v1768 = vld [vmem:[%s597 + $0x8c] sm:$0x1]
    %v1770 = vshrl.u32 %v1737, 16
    %v1772 = vrot.slane %v1770, 4
    %v1773 = vshll.u32 %v1737, 16
    %v1775 = vrot.slane %v1773, 5
    %v1776 = vor.u32 %v1772, %v1775
    %v1777 = vrot.slane %v1776, 4
    %v1779 = vshll.u32 %v1738, 16
    %v1781 = vrot.slane %v1779, 5
    %v1782 = vsel %vm750, %v1777, %v1781
    %v1784 = vshrl.u32 %v1739, 16
    %v1786 = vrot.slane %v1784, 4
    %v1787 = vshll.u32 %v1739, 16
    %v1789 = vrot.slane %v1787, 5
    %v1790 = vor.u32 %v1786, %v1789
    %v1791 = vrot.slane %v1790, 4
    %v1793 = vshll.u32 %v1740, 16
    %v1795 = vrot.slane %v1793, 5
    %v1796 = vsel %vm750, %v1791, %v1795
    %v1798 = vshrl.u32 %v1741, 16
    %v1800 = vrot.slane %v1798, 4
    %v1801 = vshll.u32 %v1741, 16
    %v1803 = vrot.slane %v1801, 5
    %v1804 = vor.u32 %v1800, %v1803
    %v1805 = vrot.slane %v1804, 4
    %v1807 = vshll.u32 %v1742, 16
    %v1809 = vrot.slane %v1807, 5
    %v1810 = vsel %vm750, %v1805, %v1809
    %v1812 = vshrl.u32 %v1743, 16
    %v1814 = vrot.slane %v1812, 4
    %v1815 = vshll.u32 %v1743, 16
    %v1817 = vrot.slane %v1815, 5
    %v1818 = vor.u32 %v1814, %v1817
    %v1819 = vrot.slane %v1818, 4
    %v1821 = vshll.u32 %v1744, 16
    %v1823 = vrot.slane %v1821, 5
    %v1824 = vsel %vm750, %v1819, %v1823
    %v1826 = vshrl.u32 %v1745, 16
    %v1828 = vrot.slane %v1826, 4
    %v1829 = vshll.u32 %v1745, 16
    %v1831 = vrot.slane %v1829, 5
    %v1832 = vor.u32 %v1828, %v1831
    %v1833 = vrot.slane %v1832, 4
    %v1835 = vshll.u32 %v1746, 16
    %v1837 = vrot.slane %v1835, 5
    %v1838 = vsel %vm750, %v1833, %v1837
    %v1840 = vshrl.u32 %v1747, 16
    %v1842 = vrot.slane %v1840, 4
    %v1843 = vshll.u32 %v1747, 16
    %v1845 = vrot.slane %v1843, 5
    %v1846 = vor.u32 %v1842, %v1845
    %v1847 = vrot.slane %v1846, 4
    %v1849 = vshll.u32 %v1748, 16
    %v1851 = vrot.slane %v1849, 5
    %v1852 = vsel %vm750, %v1847, %v1851
    %v1854 = vshrl.u32 %v1749, 16
    %v1856 = vrot.slane %v1854, 4
    %v1857 = vshll.u32 %v1749, 16
    %v1859 = vrot.slane %v1857, 5
    %v1860 = vor.u32 %v1856, %v1859
    %v1861 = vrot.slane %v1860, 4
    %v1863 = vshll.u32 %v1750, 16
    %v1865 = vrot.slane %v1863, 5
    %v1866 = vsel %vm750, %v1861, %v1865
    %v1868 = vshrl.u32 %v1751, 16
    %v1870 = vrot.slane %v1868, 4
    %v1871 = vshll.u32 %v1751, 16
    %v1873 = vrot.slane %v1871, 5
    %v1874 = vor.u32 %v1870, %v1873
    %v1875 = vrot.slane %v1874, 4
    %v1877 = vshll.u32 %v1752, 16
    %v1879 = vrot.slane %v1877, 5
    %v1880 = vsel %vm750, %v1875, %v1879
    %v1882 = vshrl.u32 %v1753, 16
    %v1884 = vrot.slane %v1882, 4
    %v1885 = vshll.u32 %v1753, 16
    %v1887 = vrot.slane %v1885, 5
    %v1888 = vor.u32 %v1884, %v1887
    %v1889 = vrot.slane %v1888, 4
    %v1891 = vshll.u32 %v1754, 16
    %v1893 = vrot.slane %v1891, 5
    %v1894 = vsel %vm750, %v1889, %v1893
    %v1896 = vshrl.u32 %v1755, 16
    %v1898 = vrot.slane %v1896, 4
    %v1899 = vshll.u32 %v1755, 16
    %v1901 = vrot.slane %v1899, 5
    %v1902 = vor.u32 %v1898, %v1901
    %v1903 = vrot.slane %v1902, 4
    %v1905 = vshll.u32 %v1756, 16
    %v1907 = vrot.slane %v1905, 5
    %v1908 = vsel %vm750, %v1903, %v1907
    %v1910 = vshrl.u32 %v1757, 16
    %v1912 = vrot.slane %v1910, 4
    %v1913 = vshll.u32 %v1757, 16
    %v1915 = vrot.slane %v1913, 5
    %v1916 = vor.u32 %v1912, %v1915
    %v1917 = vrot.slane %v1916, 4
    %v1919 = vshll.u32 %v1758, 16
    %v1921 = vrot.slane %v1919, 5
    %v1922 = vsel %vm750, %v1917, %v1921
    %v1924 = vshrl.u32 %v1759, 16
    %v1926 = vrot.slane %v1924, 4
    %v1927 = vshll.u32 %v1759, 16
    %v1929 = vrot.slane %v1927, 5
    %v1930 = vor.u32 %v1926, %v1929
    %v1931 = vrot.slane %v1930, 4
    %v1933 = vshll.u32 %v1760, 16
    %v1935 = vrot.slane %v1933, 5
    %v1936 = vsel %vm750, %v1931, %v1935
    %v1938 = vshrl.u32 %v1761, 16
    %v1940 = vrot.slane %v1938, 4
    %v1941 = vshll.u32 %v1761, 16
    %v1943 = vrot.slane %v1941, 5
    %v1944 = vor.u32 %v1940, %v1943
    %v1945 = vrot.slane %v1944, 4
    %v1947 = vshll.u32 %v1762, 16
    %v1949 = vrot.slane %v1947, 5
    %v1950 = vsel %vm750, %v1945, %v1949
    %v1952 = vshrl.u32 %v1763, 16
    %v1954 = vrot.slane %v1952, 4
    %v1955 = vshll.u32 %v1763, 16
    %v1957 = vrot.slane %v1955, 5
    %v1958 = vor.u32 %v1954, %v1957
    %v1959 = vrot.slane %v1958, 4
    %v1961 = vshll.u32 %v1764, 16
    %v1963 = vrot.slane %v1961, 5
    %v1964 = vsel %vm750, %v1959, %v1963
    %v1966 = vshrl.u32 %v1765, 16
    %v1968 = vrot.slane %v1966, 4
    %v1969 = vshll.u32 %v1765, 16
    %v1971 = vrot.slane %v1969, 5
    %v1972 = vor.u32 %v1968, %v1971
    %v1973 = vrot.slane %v1972, 4
    %v1975 = vshll.u32 %v1766, 16
    %v1977 = vrot.slane %v1975, 5
    %v1978 = vsel %vm750, %v1973, %v1977
    %v1980 = vshrl.u32 %v1767, 16
    %v1982 = vrot.slane %v1980, 4
    %v1983 = vshll.u32 %v1767, 16
    %v1985 = vrot.slane %v1983, 5
    %v1986 = vor.u32 %v1982, %v1985
    %v1987 = vrot.slane %v1986, 4
    %v1989 = vshll.u32 %v1768, 16
    %v1991 = vrot.slane %v1989, 5
    %v1992 = vsel %vm750, %v1987, %v1991
    %s1993 = scalar_lea.vmem [#allocation8], 256
    %v1994 = vld [vmem:[%s1993] sm:$0xf]
    %v1995 = vld [vmem:[%s1993 + $0x4] sm:$0xf]
    %v1996 = vld [vmem:[%s1993 + $0x8] sm:$0xf]
    %v1997 = vld [vmem:[%s1993 + $0xc] sm:$0xf]
    %v1998 = vld [vmem:[%s1993 + $0x10] sm:$0xf]
    %v1999 = vld [vmem:[%s1993 + $0x14] sm:$0xf]
    %v2000 = vld [vmem:[%s1993 + $0x18] sm:$0xf]
    %v2001 = vld [vmem:[%s1993 + $0x1c] sm:$0xf]
    %v2002 = vld [vmem:[%s1993 + $0x20] sm:$0xf]
    %v2003 = vld [vmem:[%s1993 + $0x24] sm:$0xf]
    %v2004 = vld [vmem:[%s1993 + $0x28] sm:$0xf]
    %v2005 = vld [vmem:[%s1993 + $0x2c] sm:$0xf]
    %v2006 = vld [vmem:[%s1993 + $0x30] sm:$0xf]
    %v2007 = vld [vmem:[%s1993 + $0x34] sm:$0xf]
    %v2008 = vld [vmem:[%s1993 + $0x38] sm:$0xf]
    %v2009 = vld [vmem:[%s1993 + $0x3c] sm:$0xf]
    %v2010 = vunpack.c.l.b16 %v1782
    %v2011 = vunpack.c.l.b16 %v1796
    %v2012 = vunpack.c.l.b16 %v1810
    %v2013 = vunpack.c.l.b16 %v1824
    %v2014 = vunpack.c.l.b16 %v1838
    %v2015 = vunpack.c.l.b16 %v1852
    %v2016 = vunpack.c.l.b16 %v1866
    %v2017 = vunpack.c.l.b16 %v1880
    %v2018 = vunpack.c.l.b16 %v1894
    %v2019 = vunpack.c.l.b16 %v1908
    %v2020 = vunpack.c.l.b16 %v1922
    %v2021 = vunpack.c.l.b16 %v1936
    %v2022 = vunpack.c.l.b16 %v1950
    %v2023 = vunpack.c.l.b16 %v1964
    %v2024 = vunpack.c.l.b16 %v1978
    %v2025 = vunpack.c.l.b16 %v1992
    %v2026 = vpack.c.b16 %v2011, %v2010
    %v2027 = vpack.c.b16 %v2013, %v2012
    %v2028 = vpack.c.b16 %v2015, %v2014
    %v2029 = vpack.c.b16 %v2017, %v2016
    %v2030 = vpack.c.b16 %v2019, %v2018
    %v2031 = vpack.c.b16 %v2021, %v2020
    %v2032 = vpack.c.b16 %v2023, %v2022
    %v2033 = vpack.c.b16 %v2025, %v2024
    %v2058 = vunpack.c.l.b16 %v1994
    %v2059 = vunpack.c.l.b16 %v1995
    %v2060 = vunpack.c.l.b16 %v1996
    %v2061 = vunpack.c.l.b16 %v1997
    %v2062 = vunpack.c.l.b16 %v1998
    %v2063 = vunpack.c.l.b16 %v1999
    %v2064 = vunpack.c.l.b16 %v2000
    %v2065 = vunpack.c.l.b16 %v2001
    %v2066 = vunpack.c.l.b16 %v2002
    %v2067 = vunpack.c.l.b16 %v2003
    %v2068 = vunpack.c.l.b16 %v2004
    %v2069 = vunpack.c.l.b16 %v2005
    %v2070 = vunpack.c.l.b16 %v2006
    %v2071 = vunpack.c.l.b16 %v2007
    %v2072 = vunpack.c.l.b16 %v2008
    %v2073 = vunpack.c.l.b16 %v2009
    %v2074 = vpack.c.b16 %v2059, %v2058
    %v2075 = vpack.c.b16 %v2061, %v2060
    %v2076 = vpack.c.b16 %v2063, %v2062
    %v2077 = vpack.c.b16 %v2065, %v2064
    %v2078 = vpack.c.b16 %v2067, %v2066
    %v2079 = vpack.c.b16 %v2069, %v2068
    %v2080 = vpack.c.b16 %v2071, %v2070
    %v2081 = vpack.c.b16 %v2073, %v2072
    %2090 = vmatpush.bf16.msra.mxu0 %v2081
    %2091 = vmatpush.bf16.msra.mxu0 %v2080
    %2092 = vmatpush.bf16.msra.mxu0 %v2079
    %2093 = vmatpush.bf16.msra.mxu0 %v2078
    %2094 = vmatpush.bf16.msra.mxu0 %v2077
    %2095 = vmatpush.bf16.msra.mxu0 %v2076
    %2096 = vmatpush.bf16.msra.mxu0 %v2075
    %2097 = vmatpush.bf16.msra.mxu0 %v2074
    %2098 = vmatmul.bf16.gmra.mxu0 %v2026
    %v2099 = vpop.f32.mrf.mxu0
    %v2100 = vadd.f32 0.0, %v2099
    %v2101 = vpop.f32.mrf.mxu0
    %v2102 = vadd.f32 0.0, %v2101
    %2103 = vmatmul.bf16.gmra.mxu0 %v2027
    %v2104 = vpop.f32.mrf.mxu0
    %v2105 = vadd.f32 0.0, %v2104
    %v2106 = vpop.f32.mrf.mxu0
    %v2107 = vadd.f32 0.0, %v2106
    %2108 = vmatmul.bf16.gmra.mxu0 %v2028
    %v2109 = vpop.f32.mrf.mxu0
    %v2110 = vadd.f32 0.0, %v2109
    %v2111 = vpop.f32.mrf.mxu0
    %v2112 = vadd.f32 0.0, %v2111
    %2113 = vmatmul.bf16.gmra.mxu0 %v2029
    %v2114 = vpop.f32.mrf.mxu0
    %v2115 = vadd.f32 0.0, %v2114
    %v2116 = vpop.f32.mrf.mxu0
    %v2117 = vadd.f32 0.0, %v2116
    %2118 = vmatmul.bf16.gmra.mxu0 %v2030
    %v2119 = vpop.f32.mrf.mxu0
    %v2120 = vadd.f32 0.0, %v2119
    %v2121 = vpop.f32.mrf.mxu0
    %v2122 = vadd.f32 0.0, %v2121
    %2123 = vmatmul.bf16.gmra.mxu0 %v2031
    %v2124 = vpop.f32.mrf.mxu0
    %v2125 = vadd.f32 0.0, %v2124
    %v2126 = vpop.f32.mrf.mxu0
    %v2127 = vadd.f32 0.0, %v2126
    %2128 = vmatmul.bf16.gmra.mxu0 %v2032
    %v2129 = vpop.f32.mrf.mxu0
    %v2130 = vadd.f32 0.0, %v2129
    %v2131 = vpop.f32.mrf.mxu0
    %v2132 = vadd.f32 0.0, %v2131
    %2133 = vmatmul.bf16.gmra.mxu0 %v2033
    %v2134 = vpop.f32.mrf.mxu0
    %v2135 = vadd.f32 0.0, %v2134
    %v2136 = vpop.f32.mrf.mxu0
    %v2137 = vadd.f32 0.0, %v2136
    %2138 = vdwg.mxu0
    %v2139 = vadd.f32 %v1721, %v2100
    %v2140 = vadd.f32 %v1722, %v2102
    %v2141 = vadd.f32 %v1723, %v2105
    %v2142 = vadd.f32 %v1724, %v2107
    %v2143 = vadd.f32 %v1725, %v2110
    %v2144 = vadd.f32 %v1726, %v2112
    %v2145 = vadd.f32 %v1727, %v2115
    %v2146 = vadd.f32 %v1728, %v2117
    %v2147 = vadd.f32 %v1729, %v2120
    %v2148 = vadd.f32 %v1730, %v2122
    %v2149 = vadd.f32 %v1731, %v2125
    %v2150 = vadd.f32 %v1732, %v2127
    %v2151 = vadd.f32 %v1733, %v2130
    %v2152 = vadd.f32 %v1734, %v2132
    %v2153 = vadd.f32 %v1735, %v2135
    %v2154 = vadd.f32 %v1736, %v2137
    %v2155 = vld [vmem:[%s597] sm:$0xe]
    %v2156 = vld [vmem:[%s597 + $0x8] sm:$0xe]
    %v2157 = vld [vmem:[%s597 + $0x10] sm:$0xe]
    %v2158 = vld [vmem:[%s597 + $0x18] sm:$0xe]
    %v2159 = vld [vmem:[%s597 + $0x20] sm:$0xe]
    %v2160 = vld [vmem:[%s597 + $0x28] sm:$0xe]
    %v2161 = vld [vmem:[%s597 + $0x30] sm:$0xe]
    %v2162 = vld [vmem:[%s597 + $0x38] sm:$0xe]
    %v2163 = vld [vmem:[%s597 + $0x50] sm:$0xe]
    %v2164 = vld [vmem:[%s597 + $0x58] sm:$0xe]
    %v2165 = vld [vmem:[%s597 + $0x60] sm:$0xe]
    %v2166 = vld [vmem:[%s597 + $0x68] sm:$0xe]
    %v2167 = vld [vmem:[%s597 + $0x70] sm:$0xe]
    %v2168 = vld [vmem:[%s597 + $0x78] sm:$0xe]
    %v2169 = vld [vmem:[%s597 + $0x80] sm:$0xe]
    %v2170 = vld [vmem:[%s597 + $0x88] sm:$0xe]
    %v2203 = vrot.slane %v2155, 5
    %v2204 = vrot.slane %v2203, 4
    %v2205 = vrot.slane %v1738, 5
    %v2206 = vsel %vm1316, %v2204, %v2205
    %v2207 = vrot.slane %v2156, 5
    %v2208 = vrot.slane %v2207, 4
    %v2209 = vrot.slane %v1740, 5
    %v2210 = vsel %vm1316, %v2208, %v2209
    %v2211 = vrot.slane %v2157, 5
    %v2212 = vrot.slane %v2211, 4
    %v2213 = vrot.slane %v1742, 5
    %v2214 = vsel %vm1316, %v2212, %v2213
    %v2215 = vrot.slane %v2158, 5
    %v2216 = vrot.slane %v2215, 4
    %v2217 = vrot.slane %v1744, 5
    %v2218 = vsel %vm1316, %v2216, %v2217
    %v2219 = vrot.slane %v2159, 5
    %v2220 = vrot.slane %v2219, 4
    %v2221 = vrot.slane %v1746, 5
    %v2222 = vsel %vm1316, %v2220, %v2221
    %v2223 = vrot.slane %v2160, 5
    %v2224 = vrot.slane %v2223, 4
    %v2225 = vrot.slane %v1748, 5
    %v2226 = vsel %vm1316, %v2224, %v2225
    %v2227 = vrot.slane %v2161, 5
    %v2228 = vrot.slane %v2227, 4
    %v2229 = vrot.slane %v1750, 5
    %v2230 = vsel %vm1316, %v2228, %v2229
    %v2231 = vrot.slane %v2162, 5
    %v2232 = vrot.slane %v2231, 4
    %v2233 = vrot.slane %v1752, 5
    %v2234 = vsel %vm1316, %v2232, %v2233
    %v2235 = vrot.slane %v2163, 5
    %v2236 = vrot.slane %v2235, 4
    %v2237 = vrot.slane %v1754, 5
    %v2238 = vsel %vm1316, %v2236, %v2237
    %v2239 = vrot.slane %v2164, 5
    %v2240 = vrot.slane %v2239, 4
    %v2241 = vrot.slane %v1756, 5
    %v2242 = vsel %vm1316, %v2240, %v2241
    %v2243 = vrot.slane %v2165, 5
    %v2244 = vrot.slane %v2243, 4
    %v2245 = vrot.slane %v1758, 5
    %v2246 = vsel %vm1316, %v2244, %v2245
    %v2247 = vrot.slane %v2166, 5
    %v2248 = vrot.slane %v2247, 4
    %v2249 = vrot.slane %v1760, 5
    %v2250 = vsel %vm1316, %v2248, %v2249
    %v2251 = vrot.slane %v2167, 5
    %v2252 = vrot.slane %v2251, 4
    %v2253 = vrot.slane %v1762, 5
    %v2254 = vsel %vm1316, %v2252, %v2253
    %v2255 = vrot.slane %v2168, 5
    %v2256 = vrot.slane %v2255, 4
    %v2257 = vrot.slane %v1764, 5
    %v2258 = vsel %vm1316, %v2256, %v2257
    %v2259 = vrot.slane %v2169, 5
    %v2260 = vrot.slane %v2259, 4
    %v2261 = vrot.slane %v1766, 5
    %v2262 = vsel %vm1316, %v2260, %v2261
    %v2263 = vrot.slane %v2170, 5
    %v2264 = vrot.slane %v2263, 4
    %v2265 = vrot.slane %v1768, 5
    %v2266 = vsel %vm1316, %v2264, %v2265
    %s2267 = scalar_lea.vmem [#allocation8], 320
    %v2268 = vld [vmem:[%s2267] sm:$0xf]
    %v2269 = vld [vmem:[%s2267 + $0x4] sm:$0xf]
    %v2270 = vld [vmem:[%s2267 + $0x8] sm:$0xf]
    %v2271 = vld [vmem:[%s2267 + $0xc] sm:$0xf]
    %v2272 = vld [vmem:[%s2267 + $0x10] sm:$0xf]
    %v2273 = vld [vmem:[%s2267 + $0x14] sm:$0xf]
    %v2274 = vld [vmem:[%s2267 + $0x18] sm:$0xf]
    %v2275 = vld [vmem:[%s2267 + $0x1c] sm:$0xf]
    %v2276 = vld [vmem:[%s2267 + $0x20] sm:$0xf]
    %v2277 = vld [vmem:[%s2267 + $0x24] sm:$0xf]
    %v2278 = vld [vmem:[%s2267 + $0x28] sm:$0xf]
    %v2279 = vld [vmem:[%s2267 + $0x2c] sm:$0xf]
    %v2280 = vld [vmem:[%s2267 + $0x30] sm:$0xf]
    %v2281 = vld [vmem:[%s2267 + $0x34] sm:$0xf]
    %v2282 = vld [vmem:[%s2267 + $0x38] sm:$0xf]
    %v2283 = vld [vmem:[%s2267 + $0x3c] sm:$0xf]
    %v2284 = vunpack.c.l.b16 %v2206
    %v2285 = vunpack.c.l.b16 %v2210
    %v2286 = vunpack.c.l.b16 %v2214
    %v2287 = vunpack.c.l.b16 %v2218
    %v2288 = vunpack.c.l.b16 %v2222
    %v2289 = vunpack.c.l.b16 %v2226
    %v2290 = vunpack.c.l.b16 %v2230
    %v2291 = vunpack.c.l.b16 %v2234
    %v2292 = vunpack.c.l.b16 %v2238
    %v2293 = vunpack.c.l.b16 %v2242
    %v2294 = vunpack.c.l.b16 %v2246
    %v2295 = vunpack.c.l.b16 %v2250
    %v2296 = vunpack.c.l.b16 %v2254
    %v2297 = vunpack.c.l.b16 %v2258
    %v2298 = vunpack.c.l.b16 %v2262
    %v2299 = vunpack.c.l.b16 %v2266
    %v2300 = vpack.c.b16 %v2285, %v2284
    %v2301 = vpack.c.b16 %v2287, %v2286
    %v2302 = vpack.c.b16 %v2289, %v2288
    %v2303 = vpack.c.b16 %v2291, %v2290
    %v2304 = vpack.c.b16 %v2293, %v2292
    %v2305 = vpack.c.b16 %v2295, %v2294
    %v2306 = vpack.c.b16 %v2297, %v2296
    %v2307 = vpack.c.b16 %v2299, %v2298
    %v2332 = vunpack.c.l.b16 %v2268
    %v2333 = vunpack.c.l.b16 %v2269
    %v2334 = vunpack.c.l.b16 %v2270
    %v2335 = vunpack.c.l.b16 %v2271
    %v2336 = vunpack.c.l.b16 %v2272
    %v2337 = vunpack.c.l.b16 %v2273
    %v2338 = vunpack.c.l.b16 %v2274
    %v2339 = vunpack.c.l.b16 %v2275
    %v2340 = vunpack.c.l.b16 %v2276
    %v2341 = vunpack.c.l.b16 %v2277
    %v2342 = vunpack.c.l.b16 %v2278
    %v2343 = vunpack.c.l.b16 %v2279
    %v2344 = vunpack.c.l.b16 %v2280
    %v2345 = vunpack.c.l.b16 %v2281
    %v2346 = vunpack.c.l.b16 %v2282
    %v2347 = vunpack.c.l.b16 %v2283
    %v2348 = vpack.c.b16 %v2333, %v2332
    %v2349 = vpack.c.b16 %v2335, %v2334
    %v2350 = vpack.c.b16 %v2337, %v2336
    %v2351 = vpack.c.b16 %v2339, %v2338
    %v2352 = vpack.c.b16 %v2341, %v2340
    %v2353 = vpack.c.b16 %v2343, %v2342
    %v2354 = vpack.c.b16 %v2345, %v2344
    %v2355 = vpack.c.b16 %v2347, %v2346
    %2364 = vmatpush.bf16.msra.mxu0 %v2355
    %2365 = vmatpush.bf16.msra.mxu0 %v2354
    %2366 = vmatpush.bf16.msra.mxu0 %v2353
    %2367 = vmatpush.bf16.msra.mxu0 %v2352
    %2368 = vmatpush.bf16.msra.mxu0 %v2351
    %2369 = vmatpush.bf16.msra.mxu0 %v2350
    %2370 = vmatpush.bf16.msra.mxu0 %v2349
    %2371 = vmatpush.bf16.msra.mxu0 %v2348
    %2372 = vmatmul.bf16.gmra.mxu0 %v2300
    %v2373 = vpop.f32.mrf.mxu0
    %v2374 = vadd.f32 0.0, %v2373
    %v2375 = vpop.f32.mrf.mxu0
    %v2376 = vadd.f32 0.0, %v2375
    %2377 = vmatmul.bf16.gmra.mxu0 %v2301
    %v2378 = vpop.f32.mrf.mxu0
    %v2379 = vadd.f32 0.0, %v2378
    %v2380 = vpop.f32.mrf.mxu0
    %v2381 = vadd.f32 0.0, %v2380
    %2382 = vmatmul.bf16.gmra.mxu0 %v2302
    %v2383 = vpop.f32.mrf.mxu0
    %v2384 = vadd.f32 0.0, %v2383
    %v2385 = vpop.f32.mrf.mxu0
    %v2386 = vadd.f32 0.0, %v2385
    %2387 = vmatmul.bf16.gmra.mxu0 %v2303
    %v2388 = vpop.f32.mrf.mxu0
    %v2389 = vadd.f32 0.0, %v2388
    %v2390 = vpop.f32.mrf.mxu0
    %v2391 = vadd.f32 0.0, %v2390
    %2392 = vmatmul.bf16.gmra.mxu0 %v2304
    %v2393 = vpop.f32.mrf.mxu0
    %v2394 = vadd.f32 0.0, %v2393
    %v2395 = vpop.f32.mrf.mxu0
    %v2396 = vadd.f32 0.0, %v2395
    %2397 = vmatmul.bf16.gmra.mxu0 %v2305
    %v2398 = vpop.f32.mrf.mxu0
    %v2399 = vadd.f32 0.0, %v2398
    %v2400 = vpop.f32.mrf.mxu0
    %v2401 = vadd.f32 0.0, %v2400
    %2402 = vmatmul.bf16.gmra.mxu0 %v2306
    %v2403 = vpop.f32.mrf.mxu0
    %v2404 = vadd.f32 0.0, %v2403
    %v2405 = vpop.f32.mrf.mxu0
    %v2406 = vadd.f32 0.0, %v2405
    %2407 = vmatmul.bf16.gmra.mxu0 %v2307
    %v2408 = vpop.f32.mrf.mxu0
    %v2409 = vadd.f32 0.0, %v2408
    %v2410 = vpop.f32.mrf.mxu0
    %v2411 = vadd.f32 0.0, %v2410
    %2412 = vdwg.mxu0
    %v2413 = vadd.f32 %v2139, %v2374
    %v2414 = vadd.f32 %v2140, %v2376
    %v2415 = vadd.f32 %v2141, %v2379
    %v2416 = vadd.f32 %v2142, %v2381
    %v2417 = vadd.f32 %v2143, %v2384
    %v2418 = vadd.f32 %v2144, %v2386
    %v2419 = vadd.f32 %v2145, %v2389
    %v2420 = vadd.f32 %v2146, %v2391
    %v2421 = vadd.f32 %v2147, %v2394
    %v2422 = vadd.f32 %v2148, %v2396
    %v2423 = vadd.f32 %v2149, %v2399
    %v2424 = vadd.f32 %v2150, %v2401
    %v2425 = vadd.f32 %v2151, %v2404
    %v2426 = vadd.f32 %v2152, %v2406
    %v2427 = vadd.f32 %v2153, %v2409
    %v2428 = vadd.f32 %v2154, %v2411
    %s2429 = scalar_lea.vmem [#allocation2], 16
    %v2430 = vld [vmem:[%s2429] sm:$0xf]
    %v2431 = vld [vmem:[%s2429 + $0x8] sm:$0xf]
    %v2432 = vld [vmem:[%s2429 + $0x10] sm:$0xf]
    %v2433 = vld [vmem:[%s2429 + $0x18] sm:$0xf]
    %v2434 = vld [vmem:[%s2429 + $0x20] sm:$0xf]
    %v2435 = vld [vmem:[%s2429 + $0x28] sm:$0xf]
    %v2436 = vld [vmem:[%s2429 + $0x30] sm:$0xf]
    %v2437 = vld [vmem:[%s2429 + $0x38] sm:$0xf]
    %v2438 = vld [vmem:[%s2429 + $0x50] sm:$0xf]
    %v2439 = vld [vmem:[%s2429 + $0x58] sm:$0xf]
    %v2440 = vld [vmem:[%s2429 + $0x60] sm:$0xf]
    %v2441 = vld [vmem:[%s2429 + $0x68] sm:$0xf]
    %v2442 = vld [vmem:[%s2429 + $0x70] sm:$0xf]
    %v2443 = vld [vmem:[%s2429 + $0x78] sm:$0xf]
    %v2444 = vld [vmem:[%s2429 + $0x80] sm:$0xf]
    %v2445 = vld [vmem:[%s2429 + $0x88] sm:$0xf]
    %s2446 = scalar_lea.vmem [#allocation8], 384
    %v2447 = vld [vmem:[%s2446] sm:$0xf]
    %v2448 = vld [vmem:[%s2446 + $0x4] sm:$0xf]
    %v2449 = vld [vmem:[%s2446 + $0x8] sm:$0xf]
    %v2450 = vld [vmem:[%s2446 + $0xc] sm:$0xf]
    %v2451 = vld [vmem:[%s2446 + $0x10] sm:$0xf]
    %v2452 = vld [vmem:[%s2446 + $0x14] sm:$0xf]
    %v2453 = vld [vmem:[%s2446 + $0x18] sm:$0xf]
    %v2454 = vld [vmem:[%s2446 + $0x1c] sm:$0xf]
    %v2455 = vld [vmem:[%s2446 + $0x20] sm:$0xf]
    %v2456 = vld [vmem:[%s2446 + $0x24] sm:$0xf]
    %v2457 = vld [vmem:[%s2446 + $0x28] sm:$0xf]
    %v2458 = vld [vmem:[%s2446 + $0x2c] sm:$0xf]
    %v2459 = vld [vmem:[%s2446 + $0x30] sm:$0xf]
    %v2460 = vld [vmem:[%s2446 + $0x34] sm:$0xf]
    %v2461 = vld [vmem:[%s2446 + $0x38] sm:$0xf]
    %v2462 = vld [vmem:[%s2446 + $0x3c] sm:$0xf]
    %v2479 = vunpack.c.l.b16 %v2430
    %v2480 = vunpack.c.l.b16 %v2431
    %v2481 = vunpack.c.l.b16 %v2432
    %v2482 = vunpack.c.l.b16 %v2433
    %v2483 = vunpack.c.l.b16 %v2434
    %v2484 = vunpack.c.l.b16 %v2435
    %v2485 = vunpack.c.l.b16 %v2436
    %v2486 = vunpack.c.l.b16 %v2437
    %v2487 = vunpack.c.l.b16 %v2438
    %v2488 = vunpack.c.l.b16 %v2439
    %v2489 = vunpack.c.l.b16 %v2440
    %v2490 = vunpack.c.l.b16 %v2441
    %v2491 = vunpack.c.l.b16 %v2442
    %v2492 = vunpack.c.l.b16 %v2443
    %v2493 = vunpack.c.l.b16 %v2444
    %v2494 = vunpack.c.l.b16 %v2445
    %v2495 = vpack.c.b16 %v2480, %v2479
    %v2496 = vpack.c.b16 %v2482, %v2481
    %v2497 = vpack.c.b16 %v2484, %v2483
    %v2498 = vpack.c.b16 %v2486, %v2485
    %v2499 = vpack.c.b16 %v2488, %v2487
    %v2500 = vpack.c.b16 %v2490, %v2489
    %v2501 = vpack.c.b16 %v2492, %v2491
    %v2502 = vpack.c.b16 %v2494, %v2493
    %v2527 = vunpack.c.l.b16 %v2447
    %v2528 = vunpack.c.l.b16 %v2448
    %v2529 = vunpack.c.l.b16 %v2449
    %v2530 = vunpack.c.l.b16 %v2450
    %v2531 = vunpack.c.l.b16 %v2451
    %v2532 = vunpack.c.l.b16 %v2452
    %v2533 = vunpack.c.l.b16 %v2453
    %v2534 = vunpack.c.l.b16 %v2454
    %v2535 = vunpack.c.l.b16 %v2455
    %v2536 = vunpack.c.l.b16 %v2456
    %v2537 = vunpack.c.l.b16 %v2457
    %v2538 = vunpack.c.l.b16 %v2458
    %v2539 = vunpack.c.l.b16 %v2459
    %v2540 = vunpack.c.l.b16 %v2460
    %v2541 = vunpack.c.l.b16 %v2461
    %v2542 = vunpack.c.l.b16 %v2462
    %v2543 = vpack.c.b16 %v2528, %v2527
    %v2544 = vpack.c.b16 %v2530, %v2529
    %v2545 = vpack.c.b16 %v2532, %v2531
    %v2546 = vpack.c.b16 %v2534, %v2533
    %v2547 = vpack.c.b16 %v2536, %v2535
    %v2548 = vpack.c.b16 %v2538, %v2537
    %v2549 = vpack.c.b16 %v2540, %v2539
    %v2550 = vpack.c.b16 %v2542, %v2541
    %2559 = vmatpush.bf16.msra.mxu0 %v2550
    %2560 = vmatpush.bf16.msra.mxu0 %v2549
    %2561 = vmatpush.bf16.msra.mxu0 %v2548
    %2562 = vmatpush.bf16.msra.mxu0 %v2547
    %2563 = vmatpush.bf16.msra.mxu0 %v2546
    %2564 = vmatpush.bf16.msra.mxu0 %v2545
    %2565 = vmatpush.bf16.msra.mxu0 %v2544
    %2566 = vmatpush.bf16.msra.mxu0 %v2543
    %2567 = vmatmul.bf16.gmra.mxu0 %v2495
    %v2568 = vpop.f32.mrf.mxu0
    %v2569 = vadd.f32 0.0, %v2568
    %v2570 = vpop.f32.mrf.mxu0
    %v2571 = vadd.f32 0.0, %v2570
    %2572 = vmatmul.bf16.gmra.mxu0 %v2496
    %v2573 = vpop.f32.mrf.mxu0
    %v2574 = vadd.f32 0.0, %v2573
    %v2575 = vpop.f32.mrf.mxu0
    %v2576 = vadd.f32 0.0, %v2575
    %2577 = vmatmul.bf16.gmra.mxu0 %v2497
    %v2578 = vpop.f32.mrf.mxu0
    %v2579 = vadd.f32 0.0, %v2578
    %v2580 = vpop.f32.mrf.mxu0
    %v2581 = vadd.f32 0.0, %v2580
    %2582 = vmatmul.bf16.gmra.mxu0 %v2498
    %v2583 = vpop.f32.mrf.mxu0
    %v2584 = vadd.f32 0.0, %v2583
    %v2585 = vpop.f32.mrf.mxu0
    %v2586 = vadd.f32 0.0, %v2585
    %2587 = vmatmul.bf16.gmra.mxu0 %v2499
    %v2588 = vpop.f32.mrf.mxu0
    %v2589 = vadd.f32 0.0, %v2588
    %v2590 = vpop.f32.mrf.mxu0
    %v2591 = vadd.f32 0.0, %v2590
    %2592 = vmatmul.bf16.gmra.mxu0 %v2500
    %v2593 = vpop.f32.mrf.mxu0
    %v2594 = vadd.f32 0.0, %v2593
    %v2595 = vpop.f32.mrf.mxu0
    %v2596 = vadd.f32 0.0, %v2595
    %2597 = vmatmul.bf16.gmra.mxu0 %v2501
    %v2598 = vpop.f32.mrf.mxu0
    %v2599 = vadd.f32 0.0, %v2598
    %v2600 = vpop.f32.mrf.mxu0
    %v2601 = vadd.f32 0.0, %v2600
    %2602 = vmatmul.bf16.gmra.mxu0 %v2502
    %v2603 = vpop.f32.mrf.mxu0
    %v2604 = vadd.f32 0.0, %v2603
    %v2605 = vpop.f32.mrf.mxu0
    %v2606 = vadd.f32 0.0, %v2605
    %2607 = vdwg.mxu0
    %v2608 = vadd.f32 %v2413, %v2569
    %v2609 = vadd.f32 %v2414, %v2571
    %v2610 = vadd.f32 %v2415, %v2574
    %v2611 = vadd.f32 %v2416, %v2576
    %v2612 = vadd.f32 %v2417, %v2579
    %v2613 = vadd.f32 %v2418, %v2581
    %v2614 = vadd.f32 %v2419, %v2584
    %v2615 = vadd.f32 %v2420, %v2586
    %v2616 = vadd.f32 %v2421, %v2589
    %v2617 = vadd.f32 %v2422, %v2591
    %v2618 = vadd.f32 %v2423, %v2594
    %v2619 = vadd.f32 %v2424, %v2596
    %v2620 = vadd.f32 %v2425, %v2599
    %v2621 = vadd.f32 %v2426, %v2601
    %v2622 = vadd.f32 %v2427, %v2604
    %v2623 = vadd.f32 %v2428, %v2606
    %v2624 = vld [vmem:[%s2429] sm:$0xf]
    %v2625 = vld [vmem:[%s2429 + $0x4] sm:$0x1]
    %v2626 = vld [vmem:[%s2429 + $0x8] sm:$0xf]
    %v2627 = vld [vmem:[%s2429 + $0xc] sm:$0x1]
    %v2628 = vld [vmem:[%s2429 + $0x10] sm:$0xf]
    %v2629 = vld [vmem:[%s2429 + $0x14] sm:$0x1]
    %v2630 = vld [vmem:[%s2429 + $0x18] sm:$0xf]
    %v2631 = vld [vmem:[%s2429 + $0x1c] sm:$0x1]
    %v2632 = vld [vmem:[%s2429 + $0x20] sm:$0xf]
    %v2633 = vld [vmem:[%s2429 + $0x24] sm:$0x1]
    %v2634 = vld [vmem:[%s2429 + $0x28] sm:$0xf]
    %v2635 = vld [vmem:[%s2429 + $0x2c] sm:$0x1]
    %v2636 = vld [vmem:[%s2429 + $0x30] sm:$0xf]
    %v2637 = vld [vmem:[%s2429 + $0x34] sm:$0x1]
    %v2638 = vld [vmem:[%s2429 + $0x38] sm:$0xf]
    %v2639 = vld [vmem:[%s2429 + $0x3c] sm:$0x1]
    %v2640 = vld [vmem:[%s2429 + $0x50] sm:$0xf]
    %v2641 = vld [vmem:[%s2429 + $0x54] sm:$0x1]
    %v2642 = vld [vmem:[%s2429 + $0x58] sm:$0xf]
    %v2643 = vld [vmem:[%s2429 + $0x5c] sm:$0x1]
    %v2644 = vld [vmem:[%s2429 + $0x60] sm:$0xf]
    %v2645 = vld [vmem:[%s2429 + $0x64] sm:$0x1]
    %v2646 = vld [vmem:[%s2429 + $0x68] sm:$0xf]
    %v2647 = vld [vmem:[%s2429 + $0x6c] sm:$0x1]
    %v2648 = vld [vmem:[%s2429 + $0x70] sm:$0xf]
    %v2649 = vld [vmem:[%s2429 + $0x74] sm:$0x1]
    %v2650 = vld [vmem:[%s2429 + $0x78] sm:$0xf]
    %v2651 = vld [vmem:[%s2429 + $0x7c] sm:$0x1]
    %v2652 = vld [vmem:[%s2429 + $0x80] sm:$0xf]
    %v2653 = vld [vmem:[%s2429 + $0x84] sm:$0x1]
    %v2654 = vld [vmem:[%s2429 + $0x88] sm:$0xf]
    %v2655 = vld [vmem:[%s2429 + $0x8c] sm:$0x1]
    %v2657 = vshrl.u32 %v2624, 16
    %v2659 = vrot.slane %v2657, 4
    %v2660 = vshll.u32 %v2624, 16
    %v2662 = vrot.slane %v2660, 5
    %v2663 = vor.u32 %v2659, %v2662
    %v2664 = vrot.slane %v2663, 4
    %v2666 = vshll.u32 %v2625, 16
    %v2668 = vrot.slane %v2666, 5
    %v2669 = vsel %vm750, %v2664, %v2668
    %v2671 = vshrl.u32 %v2626, 16
    %v2673 = vrot.slane %v2671, 4
    %v2674 = vshll.u32 %v2626, 16
    %v2676 = vrot.slane %v2674, 5
    %v2677 = vor.u32 %v2673, %v2676
    %v2678 = vrot.slane %v2677, 4
    %v2680 = vshll.u32 %v2627, 16
    %v2682 = vrot.slane %v2680, 5
    %v2683 = vsel %vm750, %v2678, %v2682
    %v2685 = vshrl.u32 %v2628, 16
    %v2687 = vrot.slane %v2685, 4
    %v2688 = vshll.u32 %v2628, 16
    %v2690 = vrot.slane %v2688, 5
    %v2691 = vor.u32 %v2687, %v2690
    %v2692 = vrot.slane %v2691, 4
    %v2694 = vshll.u32 %v2629, 16
    %v2696 = vrot.slane %v2694, 5
    %v2697 = vsel %vm750, %v2692, %v2696
    %v2699 = vshrl.u32 %v2630, 16
    %v2701 = vrot.slane %v2699, 4
    %v2702 = vshll.u32 %v2630, 16
    %v2704 = vrot.slane %v2702, 5
    %v2705 = vor.u32 %v2701, %v2704
    %v2706 = vrot.slane %v2705, 4
    %v2708 = vshll.u32 %v2631, 16
    %v2710 = vrot.slane %v2708, 5
    %v2711 = vsel %vm750, %v2706, %v2710
    %v2713 = vshrl.u32 %v2632, 16
    %v2715 = vrot.slane %v2713, 4
    %v2716 = vshll.u32 %v2632, 16
    %v2718 = vrot.slane %v2716, 5
    %v2719 = vor.u32 %v2715, %v2718
    %v2720 = vrot.slane %v2719, 4
    %v2722 = vshll.u32 %v2633, 16
    %v2724 = vrot.slane %v2722, 5
    %v2725 = vsel %vm750, %v2720, %v2724
    %v2727 = vshrl.u32 %v2634, 16
    %v2729 = vrot.slane %v2727, 4
    %v2730 = vshll.u32 %v2634, 16
    %v2732 = vrot.slane %v2730, 5
    %v2733 = vor.u32 %v2729, %v2732
    %v2734 = vrot.slane %v2733, 4
    %v2736 = vshll.u32 %v2635, 16
    %v2738 = vrot.slane %v2736, 5
    %v2739 = vsel %vm750, %v2734, %v2738
    %v2741 = vshrl.u32 %v2636, 16
    %v2743 = vrot.slane %v2741, 4
    %v2744 = vshll.u32 %v2636, 16
    %v2746 = vrot.slane %v2744, 5
    %v2747 = vor.u32 %v2743, %v2746
    %v2748 = vrot.slane %v2747, 4
    %v2750 = vshll.u32 %v2637, 16
    %v2752 = vrot.slane %v2750, 5
    %v2753 = vsel %vm750, %v2748, %v2752
    %v2755 = vshrl.u32 %v2638, 16
    %v2757 = vrot.slane %v2755, 4
    %v2758 = vshll.u32 %v2638, 16
    %v2760 = vrot.slane %v2758, 5
    %v2761 = vor.u32 %v2757, %v2760
    %v2762 = vrot.slane %v2761, 4
    %v2764 = vshll.u32 %v2639, 16
    %v2766 = vrot.slane %v2764, 5
    %v2767 = vsel %vm750, %v2762, %v2766
    %v2769 = vshrl.u32 %v2640, 16
    %v2771 = vrot.slane %v2769, 4
    %v2772 = vshll.u32 %v2640, 16
    %v2774 = vrot.slane %v2772, 5
    %v2775 = vor.u32 %v2771, %v2774
    %v2776 = vrot.slane %v2775, 4
    %v2778 = vshll.u32 %v2641, 16
    %v2780 = vrot.slane %v2778, 5
    %v2781 = vsel %vm750, %v2776, %v2780
    %v2783 = vshrl.u32 %v2642, 16
    %v2785 = vrot.slane %v2783, 4
    %v2786 = vshll.u32 %v2642, 16
    %v2788 = vrot.slane %v2786, 5
    %v2789 = vor.u32 %v2785, %v2788
    %v2790 = vrot.slane %v2789, 4
    %v2792 = vshll.u32 %v2643, 16
    %v2794 = vrot.slane %v2792, 5
    %v2795 = vsel %vm750, %v2790, %v2794
    %v2797 = vshrl.u32 %v2644, 16
    %v2799 = vrot.slane %v2797, 4
    %v2800 = vshll.u32 %v2644, 16
    %v2802 = vrot.slane %v2800, 5
    %v2803 = vor.u32 %v2799, %v2802
    %v2804 = vrot.slane %v2803, 4
    %v2806 = vshll.u32 %v2645, 16
    %v2808 = vrot.slane %v2806, 5
    %v2809 = vsel %vm750, %v2804, %v2808
    %v2811 = vshrl.u32 %v2646, 16
    %v2813 = vrot.slane %v2811, 4
    %v2814 = vshll.u32 %v2646, 16
    %v2816 = vrot.slane %v2814, 5
    %v2817 = vor.u32 %v2813, %v2816
    %v2818 = vrot.slane %v2817, 4
    %v2820 = vshll.u32 %v2647, 16
    %v2822 = vrot.slane %v2820, 5
    %v2823 = vsel %vm750, %v2818, %v2822
    %v2825 = vshrl.u32 %v2648, 16
    %v2827 = vrot.slane %v2825, 4
    %v2828 = vshll.u32 %v2648, 16
    %v2830 = vrot.slane %v2828, 5
    %v2831 = vor.u32 %v2827, %v2830
    %v2832 = vrot.slane %v2831, 4
    %v2834 = vshll.u32 %v2649, 16
    %v2836 = vrot.slane %v2834, 5
    %v2837 = vsel %vm750, %v2832, %v2836
    %v2839 = vshrl.u32 %v2650, 16
    %v2841 = vrot.slane %v2839, 4
    %v2842 = vshll.u32 %v2650, 16
    %v2844 = vrot.slane %v2842, 5
    %v2845 = vor.u32 %v2841, %v2844
    %v2846 = vrot.slane %v2845, 4
    %v2848 = vshll.u32 %v2651, 16
    %v2850 = vrot.slane %v2848, 5
    %v2851 = vsel %vm750, %v2846, %v2850
    %v2853 = vshrl.u32 %v2652, 16
    %v2855 = vrot.slane %v2853, 4
    %v2856 = vshll.u32 %v2652, 16
    %v2858 = vrot.slane %v2856, 5
    %v2859 = vor.u32 %v2855, %v2858
    %v2860 = vrot.slane %v2859, 4
    %v2862 = vshll.u32 %v2653, 16
    %v2864 = vrot.slane %v2862, 5
    %v2865 = vsel %vm750, %v2860, %v2864
    %v2867 = vshrl.u32 %v2654, 16
    %v2869 = vrot.slane %v2867, 4
    %v2870 = vshll.u32 %v2654, 16
    %v2872 = vrot.slane %v2870, 5
    %v2873 = vor.u32 %v2869, %v2872
    %v2874 = vrot.slane %v2873, 4
    %v2876 = vshll.u32 %v2655, 16
    %v2878 = vrot.slane %v2876, 5
    %v2879 = vsel %vm750, %v2874, %v2878
    %s2880 = scalar_lea.vmem [#allocation8], 448
    %v2881 = vld [vmem:[%s2880] sm:$0xf]
    %v2882 = vld [vmem:[%s2880 + $0x4] sm:$0xf]
    %v2883 = vld [vmem:[%s2880 + $0x8] sm:$0xf]
    %v2884 = vld [vmem:[%s2880 + $0xc] sm:$0xf]
    %v2885 = vld [vmem:[%s2880 + $0x10] sm:$0xf]
    %v2886 = vld [vmem:[%s2880 + $0x14] sm:$0xf]
    %v2887 = vld [vmem:[%s2880 + $0x18] sm:$0xf]
    %v2888 = vld [vmem:[%s2880 + $0x1c] sm:$0xf]
    %v2889 = vld [vmem:[%s2880 + $0x20] sm:$0xf]
    %v2890 = vld [vmem:[%s2880 + $0x24] sm:$0xf]
    %v2891 = vld [vmem:[%s2880 + $0x28] sm:$0xf]
    %v2892 = vld [vmem:[%s2880 + $0x2c] sm:$0xf]
    %v2893 = vld [vmem:[%s2880 + $0x30] sm:$0xf]
    %v2894 = vld [vmem:[%s2880 + $0x34] sm:$0xf]
    %v2895 = vld [vmem:[%s2880 + $0x38] sm:$0xf]
    %v2896 = vld [vmem:[%s2880 + $0x3c] sm:$0xf]
    %v2897 = vunpack.c.l.b16 %v2669
    %v2898 = vunpack.c.l.b16 %v2683
    %v2899 = vunpack.c.l.b16 %v2697
    %v2900 = vunpack.c.l.b16 %v2711
    %v2901 = vunpack.c.l.b16 %v2725
    %v2902 = vunpack.c.l.b16 %v2739
    %v2903 = vunpack.c.l.b16 %v2753
    %v2904 = vunpack.c.l.b16 %v2767
    %v2905 = vunpack.c.l.b16 %v2781
    %v2906 = vunpack.c.l.b16 %v2795
    %v2907 = vunpack.c.l.b16 %v2809
    %v2908 = vunpack.c.l.b16 %v2823
    %v2909 = vunpack.c.l.b16 %v2837
    %v2910 = vunpack.c.l.b16 %v2851
    %v2911 = vunpack.c.l.b16 %v2865
    %v2912 = vunpack.c.l.b16 %v2879
    %v2913 = vpack.c.b16 %v2898, %v2897
    %v2914 = vpack.c.b16 %v2900, %v2899
    %v2915 = vpack.c.b16 %v2902, %v2901
    %v2916 = vpack.c.b16 %v2904, %v2903
    %v2917 = vpack.c.b16 %v2906, %v2905
    %v2918 = vpack.c.b16 %v2908, %v2907
    %v2919 = vpack.c.b16 %v2910, %v2909
    %v2920 = vpack.c.b16 %v2912, %v2911
    %v2945 = vunpack.c.l.b16 %v2881
    %v2946 = vunpack.c.l.b16 %v2882
    %v2947 = vunpack.c.l.b16 %v2883
    %v2948 = vunpack.c.l.b16 %v2884
    %v2949 = vunpack.c.l.b16 %v2885
    %v2950 = vunpack.c.l.b16 %v2886
    %v2951 = vunpack.c.l.b16 %v2887
    %v2952 = vunpack.c.l.b16 %v2888
    %v2953 = vunpack.c.l.b16 %v2889
    %v2954 = vunpack.c.l.b16 %v2890
    %v2955 = vunpack.c.l.b16 %v2891
    %v2956 = vunpack.c.l.b16 %v2892
    %v2957 = vunpack.c.l.b16 %v2893
    %v2958 = vunpack.c.l.b16 %v2894
    %v2959 = vunpack.c.l.b16 %v2895
    %v2960 = vunpack.c.l.b16 %v2896
    %v2961 = vpack.c.b16 %v2946, %v2945
    %v2962 = vpack.c.b16 %v2948, %v2947
    %v2963 = vpack.c.b16 %v2950, %v2949
    %v2964 = vpack.c.b16 %v2952, %v2951
    %v2965 = vpack.c.b16 %v2954, %v2953
    %v2966 = vpack.c.b16 %v2956, %v2955
    %v2967 = vpack.c.b16 %v2958, %v2957
    %v2968 = vpack.c.b16 %v2960, %v2959
    %2977 = vmatpush.bf16.msra.mxu0 %v2968
    %2978 = vmatpush.bf16.msra.mxu0 %v2967
    %2979 = vmatpush.bf16.msra.mxu0 %v2966
    %2980 = vmatpush.bf16.msra.mxu0 %v2965
    %2981 = vmatpush.bf16.msra.mxu0 %v2964
    %2982 = vmatpush.bf16.msra.mxu0 %v2963
    %2983 = vmatpush.bf16.msra.mxu0 %v2962
    %2984 = vmatpush.bf16.msra.mxu0 %v2961
    %2985 = vmatmul.bf16.gmra.mxu0 %v2913
    %v2986 = vpop.f32.mrf.mxu0
    %v2987 = vadd.f32 0.0, %v2986
    %v2988 = vpop.f32.mrf.mxu0
    %v2989 = vadd.f32 0.0, %v2988
    %2990 = vmatmul.bf16.gmra.mxu0 %v2914
    %v2991 = vpop.f32.mrf.mxu0
    %v2992 = vadd.f32 0.0, %v2991
    %v2993 = vpop.f32.mrf.mxu0
    %v2994 = vadd.f32 0.0, %v2993
    %2995 = vmatmul.bf16.gmra.mxu0 %v2915
    %v2996 = vpop.f32.mrf.mxu0
    %v2997 = vadd.f32 0.0, %v2996
    %v2998 = vpop.f32.mrf.mxu0
    %v2999 = vadd.f32 0.0, %v2998
    %3000 = vmatmul.bf16.gmra.mxu0 %v2916
    %v3001 = vpop.f32.mrf.mxu0
    %v3002 = vadd.f32 0.0, %v3001
    %v3003 = vpop.f32.mrf.mxu0
    %v3004 = vadd.f32 0.0, %v3003
    %3005 = vmatmul.bf16.gmra.mxu0 %v2917
    %v3006 = vpop.f32.mrf.mxu0
    %v3007 = vadd.f32 0.0, %v3006
    %v3008 = vpop.f32.mrf.mxu0
    %v3009 = vadd.f32 0.0, %v3008
    %3010 = vmatmul.bf16.gmra.mxu0 %v2918
    %v3011 = vpop.f32.mrf.mxu0
    %v3012 = vadd.f32 0.0, %v3011
    %v3013 = vpop.f32.mrf.mxu0
    %v3014 = vadd.f32 0.0, %v3013
    %3015 = vmatmul.bf16.gmra.mxu0 %v2919
    %v3016 = vpop.f32.mrf.mxu0
    %v3017 = vadd.f32 0.0, %v3016
    %v3018 = vpop.f32.mrf.mxu0
    %v3019 = vadd.f32 0.0, %v3018
    %3020 = vmatmul.bf16.gmra.mxu0 %v2920
    %v3021 = vpop.f32.mrf.mxu0
    %v3022 = vadd.f32 0.0, %v3021
    %v3023 = vpop.f32.mrf.mxu0
    %v3024 = vadd.f32 0.0, %v3023
    %3025 = vdwg.mxu0
    %v3026 = vadd.f32 %v2608, %v2987
    %v3027 = vadd.f32 %v2609, %v2989
    %v3028 = vadd.f32 %v2610, %v2992
    %v3029 = vadd.f32 %v2611, %v2994
    %v3030 = vadd.f32 %v2612, %v2997
    %v3031 = vadd.f32 %v2613, %v2999
    %v3032 = vadd.f32 %v2614, %v3002
    %v3033 = vadd.f32 %v2615, %v3004
    %v3034 = vadd.f32 %v2616, %v3007
    %v3035 = vadd.f32 %v2617, %v3009
    %v3036 = vadd.f32 %v2618, %v3012
    %v3037 = vadd.f32 %v2619, %v3014
    %v3038 = vadd.f32 %v2620, %v3017
    %v3039 = vadd.f32 %v2621, %v3019
    %v3040 = vadd.f32 %v2622, %v3022
    %v3041 = vadd.f32 %v2623, %v3024
    %v3042 = vld [vmem:[%s2429] sm:$0xe]
    %v3043 = vld [vmem:[%s2429 + $0x8] sm:$0xe]
    %v3044 = vld [vmem:[%s2429 + $0x10] sm:$0xe]
    %v3045 = vld [vmem:[%s2429 + $0x18] sm:$0xe]
    %v3046 = vld [vmem:[%s2429 + $0x20] sm:$0xe]
    %v3047 = vld [vmem:[%s2429 + $0x28] sm:$0xe]
    %v3048 = vld [vmem:[%s2429 + $0x30] sm:$0xe]
    %v3049 = vld [vmem:[%s2429 + $0x38] sm:$0xe]
    %v3050 = vld [vmem:[%s2429 + $0x50] sm:$0xe]
    %v3051 = vld [vmem:[%s2429 + $0x58] sm:$0xe]
    %v3052 = vld [vmem:[%s2429 + $0x60] sm:$0xe]
    %v3053 = vld [vmem:[%s2429 + $0x68] sm:$0xe]
    %v3054 = vld [vmem:[%s2429 + $0x70] sm:$0xe]
    %v3055 = vld [vmem:[%s2429 + $0x78] sm:$0xe]
    %v3056 = vld [vmem:[%s2429 + $0x80] sm:$0xe]
    %v3057 = vld [vmem:[%s2429 + $0x88] sm:$0xe]
    %v3090 = vrot.slane %v3042, 5
    %v3091 = vrot.slane %v3090, 4
    %v3092 = vrot.slane %v2625, 5
    %v3093 = vsel %vm1316, %v3091, %v3092
    %v3094 = vrot.slane %v3043, 5
    %v3095 = vrot.slane %v3094, 4
    %v3096 = vrot.slane %v2627, 5
    %v3097 = vsel %vm1316, %v3095, %v3096
    %v3098 = vrot.slane %v3044, 5
    %v3099 = vrot.slane %v3098, 4
    %v3100 = vrot.slane %v2629, 5
    %v3101 = vsel %vm1316, %v3099, %v3100
    %v3102 = vrot.slane %v3045, 5
    %v3103 = vrot.slane %v3102, 4
    %v3104 = vrot.slane %v2631, 5
    %v3105 = vsel %vm1316, %v3103, %v3104
    %v3106 = vrot.slane %v3046, 5
    %v3107 = vrot.slane %v3106, 4
    %v3108 = vrot.slane %v2633, 5
    %v3109 = vsel %vm1316, %v3107, %v3108
    %v3110 = vrot.slane %v3047, 5
    %v3111 = vrot.slane %v3110, 4
    %v3112 = vrot.slane %v2635, 5
    %v3113 = vsel %vm1316, %v3111, %v3112
    %v3114 = vrot.slane %v3048, 5
    %v3115 = vrot.slane %v3114, 4
    %v3116 = vrot.slane %v2637, 5
    %v3117 = vsel %vm1316, %v3115, %v3116
    %v3118 = vrot.slane %v3049, 5
    %v3119 = vrot.slane %v3118, 4
    %v3120 = vrot.slane %v2639, 5
    %v3121 = vsel %vm1316, %v3119, %v3120
    %v3122 = vrot.slane %v3050, 5
    %v3123 = vrot.slane %v3122, 4
    %v3124 = vrot.slane %v2641, 5
    %v3125 = vsel %vm1316, %v3123, %v3124
    %v3126 = vrot.slane %v3051, 5
    %v3127 = vrot.slane %v3126, 4
    %v3128 = vrot.slane %v2643, 5
    %v3129 = vsel %vm1316, %v3127, %v3128
    %v3130 = vrot.slane %v3052, 5
    %v3131 = vrot.slane %v3130, 4
    %v3132 = vrot.slane %v2645, 5
    %v3133 = vsel %vm1316, %v3131, %v3132
    %v3134 = vrot.slane %v3053, 5
    %v3135 = vrot.slane %v3134, 4
    %v3136 = vrot.slane %v2647, 5
    %v3137 = vsel %vm1316, %v3135, %v3136
    %v3138 = vrot.slane %v3054, 5
    %v3139 = vrot.slane %v3138, 4
    %v3140 = vrot.slane %v2649, 5
    %v3141 = vsel %vm1316, %v3139, %v3140
    %v3142 = vrot.slane %v3055, 5
    %v3143 = vrot.slane %v3142, 4
    %v3144 = vrot.slane %v2651, 5
    %v3145 = vsel %vm1316, %v3143, %v3144
    %v3146 = vrot.slane %v3056, 5
    %v3147 = vrot.slane %v3146, 4
    %v3148 = vrot.slane %v2653, 5
    %v3149 = vsel %vm1316, %v3147, %v3148
    %v3150 = vrot.slane %v3057, 5
    %v3151 = vrot.slane %v3150, 4
    %v3152 = vrot.slane %v2655, 5
    %v3153 = vsel %vm1316, %v3151, %v3152
    %s3154 = scalar_lea.vmem [#allocation8], 512
    %v3155 = vld [vmem:[%s3154] sm:$0xf]
    %v3156 = vld [vmem:[%s3154 + $0x4] sm:$0xf]
    %v3157 = vld [vmem:[%s3154 + $0x8] sm:$0xf]
    %v3158 = vld [vmem:[%s3154 + $0xc] sm:$0xf]
    %v3159 = vld [vmem:[%s3154 + $0x10] sm:$0xf]
    %v3160 = vld [vmem:[%s3154 + $0x14] sm:$0xf]
    %v3161 = vld [vmem:[%s3154 + $0x18] sm:$0xf]
    %v3162 = vld [vmem:[%s3154 + $0x1c] sm:$0xf]
    %v3163 = vld [vmem:[%s3154 + $0x20] sm:$0xf]
    %v3164 = vld [vmem:[%s3154 + $0x24] sm:$0xf]
    %v3165 = vld [vmem:[%s3154 + $0x28] sm:$0xf]
    %v3166 = vld [vmem:[%s3154 + $0x2c] sm:$0xf]
    %v3167 = vld [vmem:[%s3154 + $0x30] sm:$0xf]
    %v3168 = vld [vmem:[%s3154 + $0x34] sm:$0xf]
    %v3169 = vld [vmem:[%s3154 + $0x38] sm:$0xf]
    %v3170 = vld [vmem:[%s3154 + $0x3c] sm:$0xf]
    %v3171 = vunpack.c.l.b16 %v3093
    %v3172 = vunpack.c.l.b16 %v3097
    %v3173 = vunpack.c.l.b16 %v3101
    %v3174 = vunpack.c.l.b16 %v3105
    %v3175 = vunpack.c.l.b16 %v3109
    %v3176 = vunpack.c.l.b16 %v3113
    %v3177 = vunpack.c.l.b16 %v3117
    %v3178 = vunpack.c.l.b16 %v3121
    %v3179 = vunpack.c.l.b16 %v3125
    %v3180 = vunpack.c.l.b16 %v3129
    %v3181 = vunpack.c.l.b16 %v3133
    %v3182 = vunpack.c.l.b16 %v3137
    %v3183 = vunpack.c.l.b16 %v3141
    %v3184 = vunpack.c.l.b16 %v3145
    %v3185 = vunpack.c.l.b16 %v3149
    %v3186 = vunpack.c.l.b16 %v3153
    %v3187 = vpack.c.b16 %v3172, %v3171
    %v3188 = vpack.c.b16 %v3174, %v3173
    %v3189 = vpack.c.b16 %v3176, %v3175
    %v3190 = vpack.c.b16 %v3178, %v3177
    %v3191 = vpack.c.b16 %v3180, %v3179
    %v3192 = vpack.c.b16 %v3182, %v3181
    %v3193 = vpack.c.b16 %v3184, %v3183
    %v3194 = vpack.c.b16 %v3186, %v3185
    %v3219 = vunpack.c.l.b16 %v3155
    %v3220 = vunpack.c.l.b16 %v3156
    %v3221 = vunpack.c.l.b16 %v3157
    %v3222 = vunpack.c.l.b16 %v3158
    %v3223 = vunpack.c.l.b16 %v3159
    %v3224 = vunpack.c.l.b16 %v3160
    %v3225 = vunpack.c.l.b16 %v3161
    %v3226 = vunpack.c.l.b16 %v3162
    %v3227 = vunpack.c.l.b16 %v3163
    %v3228 = vunpack.c.l.b16 %v3164
    %v3229 = vunpack.c.l.b16 %v3165
    %v3230 = vunpack.c.l.b16 %v3166
    %v3231 = vunpack.c.l.b16 %v3167
    %v3232 = vunpack.c.l.b16 %v3168
    %v3233 = vunpack.c.l.b16 %v3169
    %v3234 = vunpack.c.l.b16 %v3170
    %v3235 = vpack.c.b16 %v3220, %v3219
    %v3236 = vpack.c.b16 %v3222, %v3221
    %v3237 = vpack.c.b16 %v3224, %v3223
    %v3238 = vpack.c.b16 %v3226, %v3225
    %v3239 = vpack.c.b16 %v3228, %v3227
    %v3240 = vpack.c.b16 %v3230, %v3229
    %v3241 = vpack.c.b16 %v3232, %v3231
    %v3242 = vpack.c.b16 %v3234, %v3233
    %3251 = vmatpush.bf16.msra.mxu0 %v3242
    %3252 = vmatpush.bf16.msra.mxu0 %v3241
    %3253 = vmatpush.bf16.msra.mxu0 %v3240
    %3254 = vmatpush.bf16.msra.mxu0 %v3239
    %3255 = vmatpush.bf16.msra.mxu0 %v3238
    %3256 = vmatpush.bf16.msra.mxu0 %v3237
    %3257 = vmatpush.bf16.msra.mxu0 %v3236
    %3258 = vmatpush.bf16.msra.mxu0 %v3235
    %3259 = vmatmul.bf16.gmra.mxu0 %v3187
    %v3260 = vpop.f32.mrf.mxu0
    %v3261 = vadd.f32 0.0, %v3260
    %v3262 = vpop.f32.mrf.mxu0
    %v3263 = vadd.f32 0.0, %v3262
    %3264 = vmatmul.bf16.gmra.mxu0 %v3188
    %v3265 = vpop.f32.mrf.mxu0
    %v3266 = vadd.f32 0.0, %v3265
    %v3267 = vpop.f32.mrf.mxu0
    %v3268 = vadd.f32 0.0, %v3267
    %3269 = vmatmul.bf16.gmra.mxu0 %v3189
    %v3270 = vpop.f32.mrf.mxu0
    %v3271 = vadd.f32 0.0, %v3270
    %v3272 = vpop.f32.mrf.mxu0
    %v3273 = vadd.f32 0.0, %v3272
    %3274 = vmatmul.bf16.gmra.mxu0 %v3190
    %v3275 = vpop.f32.mrf.mxu0
    %v3276 = vadd.f32 0.0, %v3275
    %v3277 = vpop.f32.mrf.mxu0
    %v3278 = vadd.f32 0.0, %v3277
    %3279 = vmatmul.bf16.gmra.mxu0 %v3191
    %v3280 = vpop.f32.mrf.mxu0
    %v3281 = vadd.f32 0.0, %v3280
    %v3282 = vpop.f32.mrf.mxu0
    %v3283 = vadd.f32 0.0, %v3282
    %3284 = vmatmul.bf16.gmra.mxu0 %v3192
    %v3285 = vpop.f32.mrf.mxu0
    %v3286 = vadd.f32 0.0, %v3285
    %v3287 = vpop.f32.mrf.mxu0
    %v3288 = vadd.f32 0.0, %v3287
    %3289 = vmatmul.bf16.gmra.mxu0 %v3193
    %v3290 = vpop.f32.mrf.mxu0
    %v3291 = vadd.f32 0.0, %v3290
    %v3292 = vpop.f32.mrf.mxu0
    %v3293 = vadd.f32 0.0, %v3292
    %3294 = vmatmul.bf16.gmra.mxu0 %v3194
    %v3295 = vpop.f32.mrf.mxu0
    %v3296 = vadd.f32 0.0, %v3295
    %v3297 = vpop.f32.mrf.mxu0
    %v3298 = vadd.f32 0.0, %v3297
    %3299 = vdwg.mxu0
    %v3300 = vadd.f32 %v3026, %v3261
    %v3301 = vadd.f32 %v3027, %v3263
    %v3302 = vadd.f32 %v3028, %v3266
    %v3303 = vadd.f32 %v3029, %v3268
    %v3304 = vadd.f32 %v3030, %v3271
    %v3305 = vadd.f32 %v3031, %v3273
    %v3306 = vadd.f32 %v3032, %v3276
    %v3307 = vadd.f32 %v3033, %v3278
    %v3308 = vadd.f32 %v3034, %v3281
    %v3309 = vadd.f32 %v3035, %v3283
    %v3310 = vadd.f32 %v3036, %v3286
    %v3311 = vadd.f32 %v3037, %v3288
    %v3312 = vadd.f32 %v3038, %v3291
    %v3313 = vadd.f32 %v3039, %v3293
    %v3314 = vadd.f32 %v3040, %v3296
    %v3315 = vadd.f32 %v3041, %v3298
    %v3316 = vld [vmem:[%s5] sm:$0x1]
    %v3317 = vld [vmem:[%s6] sm:$0x1]
    %v3318 = vadd.f32 %v3300, %v3301
    %v3319 = vadd.f32 %v3318, %v3302
    %v3320 = vadd.f32 %v3319, %v3303
    %v3321 = vadd.f32 %v3320, %v3304
    %v3322 = vadd.f32 %v3321, %v3305
    %v3323 = vadd.f32 %v3322, %v3306
    %v3324 = vadd.f32 %v3323, %v3307
    %v3325 = vadd.f32 %v3324, %v3308
    %v3326 = vadd.f32 %v3325, %v3309
    %v3327 = vadd.f32 %v3326, %v3310
    %v3328 = vadd.f32 %v3327, %v3311
    %v3329 = vadd.f32 %v3328, %v3312
    %v3330 = vadd.f32 %v3329, %v3313
    %v3331 = vadd.f32 %v3330, %v3314
    %v3332 = vadd.f32 %v3331, %v3315
    %v3333 = vrot.slane %v3332, 4
    %v3334 = vadd.f32 %v3332, %v3333
    %v3335 = vrot.slane %v3334, 2
    %v3336 = vadd.f32 %v3334, %v3335
    %v3337 = vrot.slane %v3336, 1
    %v3338 = vadd.f32 %v3336, %v3337
    %v3339 = vmul.f32 %v3338, 0.0078125
    %v3340 = vsub.f32 %v3300, %v3339
    %v3341 = vsub.f32 %v3301, %v3339
    %v3342 = vsub.f32 %v3302, %v3339
    %v3343 = vsub.f32 %v3303, %v3339
    %v3344 = vsub.f32 %v3304, %v3339
    %v3345 = vsub.f32 %v3305, %v3339
    %v3346 = vsub.f32 %v3306, %v3339
    %v3347 = vsub.f32 %v3307, %v3339
    %v3348 = vsub.f32 %v3308, %v3339
    %v3349 = vsub.f32 %v3309, %v3339
    %v3350 = vsub.f32 %v3310, %v3339
    %v3351 = vsub.f32 %v3311, %v3339
    %v3352 = vsub.f32 %v3312, %v3339
    %v3353 = vsub.f32 %v3313, %v3339
    %v3354 = vsub.f32 %v3314, %v3339
    %v3355 = vsub.f32 %v3315, %v3339
    %v3356 = vmul.f32 %v3340, %v3340
    %v3357 = vmul.f32 %v3341, %v3341
    %v3358 = vmul.f32 %v3342, %v3342
    %v3359 = vmul.f32 %v3343, %v3343
    %v3360 = vmul.f32 %v3344, %v3344
    %v3361 = vmul.f32 %v3345, %v3345
    %v3362 = vmul.f32 %v3346, %v3346
    %v3363 = vmul.f32 %v3347, %v3347
    %v3364 = vmul.f32 %v3348, %v3348
    %v3365 = vmul.f32 %v3349, %v3349
    %v3366 = vmul.f32 %v3350, %v3350
    %v3367 = vmul.f32 %v3351, %v3351
    %v3368 = vmul.f32 %v3352, %v3352
    %v3369 = vmul.f32 %v3353, %v3353
    %v3370 = vmul.f32 %v3354, %v3354
    %v3371 = vmul.f32 %v3355, %v3355
    %v3372 = vadd.f32 %v3356, %v3357
    %v3373 = vadd.f32 %v3372, %v3358
    %v3374 = vadd.f32 %v3373, %v3359
    %v3375 = vadd.f32 %v3374, %v3360
    %v3376 = vadd.f32 %v3375, %v3361
    %v3377 = vadd.f32 %v3376, %v3362
    %v3378 = vadd.f32 %v3377, %v3363
    %v3379 = vadd.f32 %v3378, %v3364
    %v3380 = vadd.f32 %v3379, %v3365
    %v3381 = vadd.f32 %v3380, %v3366
    %v3382 = vadd.f32 %v3381, %v3367
    %v3383 = vadd.f32 %v3382, %v3368
    %v3384 = vadd.f32 %v3383, %v3369
    %v3385 = vadd.f32 %v3384, %v3370
    %v3386 = vadd.f32 %v3385, %v3371
    %v3387 = vrot.slane %v3386, 4
    %v3388 = vadd.f32 %v3386, %v3387
    %v3389 = vrot.slane %v3388, 2
    %v3390 = vadd.f32 %v3388, %v3389
    %v3391 = vrot.slane %v3390, 1
    %v3392 = vadd.f32 %v3390, %v3391
    %v3393 = vmul.f32 %v3392, 0.0078125
    %v3394 = vadd.f32 %v3393, 1e-05
    %v3395 = vrsqrt.pop %v3394
    %v3396 = vmul.f32 %v3395, %v3394
    %v3397 = vmul.f32 %v3396, %v3395
    %v3398 = vmul.f32 0.5, %v3397
    %v3399 = vsub.f32 1.5, %v3398
    %v3400 = vmul.f32 %v3395, %v3399
    %vm3401 = vweird.f32 %v3394
    %vm3402 = vweird.f32 %v3395
    %vm3403 = vmor %vm3401, %vm3402
    %v3404 = vsel %vm3403, %v3395, %v3400
    %v3405 = vmul.f32 %v3316, %v3404
    %v3407 = vperm.slane %v3405, 0
    %v3409 = vmul.f32 %v3340, %v3407
    %v3410 = vmul.f32 %v3341, %v3407
    %v3411 = vmul.f32 %v3342, %v3407
    %v3412 = vmul.f32 %v3343, %v3407
    %v3413 = vmul.f32 %v3344, %v3407
    %v3414 = vmul.f32 %v3345, %v3407
    %v3415 = vmul.f32 %v3346, %v3407
    %v3416 = vmul.f32 %v3347, %v3407
    %v3417 = vmul.f32 %v3348, %v3407
    %v3418 = vmul.f32 %v3349, %v3407
    %v3419 = vmul.f32 %v3350, %v3407
    %v3420 = vmul.f32 %v3351, %v3407
    %v3421 = vmul.f32 %v3352, %v3407
    %v3422 = vmul.f32 %v3353, %v3407
    %v3423 = vmul.f32 %v3354, %v3407
    %v3424 = vmul.f32 %v3355, %v3407
    %v3426 = vperm.slane %v3317, 0
    %v3428 = vadd.f32 %v3409, %v3426
    %v3429 = vadd.f32 %v3410, %v3426
    %v3430 = vadd.f32 %v3411, %v3426
    %v3431 = vadd.f32 %v3412, %v3426
    %v3432 = vadd.f32 %v3413, %v3426
    %v3433 = vadd.f32 %v3414, %v3426
    %v3434 = vadd.f32 %v3415, %v3426
    %v3435 = vadd.f32 %v3416, %v3426
    %v3436 = vadd.f32 %v3417, %v3426
    %v3437 = vadd.f32 %v3418, %v3426
    %v3438 = vadd.f32 %v3419, %v3426
    %v3439 = vadd.f32 %v3420, %v3426
    %v3440 = vadd.f32 %v3421, %v3426
    %v3441 = vadd.f32 %v3422, %v3426
    %v3442 = vadd.f32 %v3423, %v3426
    %v3443 = vadd.f32 %v3424, %v3426
    %v3444 = vmax.f32 %v3428, 0.0
    %v3445 = vmax.f32 %v3429, 0.0
    %v3446 = vmax.f32 %v3430, 0.0
    %v3447 = vmax.f32 %v3431, 0.0
    %v3448 = vmax.f32 %v3432, 0.0
    %v3449 = vmax.f32 %v3433, 0.0
    %v3450 = vmax.f32 %v3434, 0.0
    %v3451 = vmax.f32 %v3435, 0.0
    %v3452 = vmax.f32 %v3436, 0.0
    %v3453 = vmax.f32 %v3437, 0.0
    %v3454 = vmax.f32 %v3438, 0.0
    %v3455 = vmax.f32 %v3439, 0.0
    %v3456 = vmax.f32 %v3440, 0.0
    %v3457 = vmax.f32 %v3441, 0.0
    %v3458 = vmax.f32 %v3442, 0.0
    %v3459 = vmax.f32 %v3443, 0.0
    %v3460 = vpack.c.bf16 %v3445, %v3444
    %v3461 = vpack.c.bf16 %v3447, %v3446
    %v3462 = vpack.c.bf16 %v3449, %v3448
    %v3463 = vpack.c.bf16 %v3451, %v3450
    %v3464 = vpack.c.bf16 %v3453, %v3452
    %v3465 = vpack.c.bf16 %v3455, %v3454
    %v3466 = vpack.c.bf16 %v3457, %v3456
    %v3467 = vpack.c.bf16 %v3459, %v3458
    %v3468 = vld [vmem:[#allocation9] sm:$0xf]
    %v3469 = vld [vmem:[#allocation9 + $0x4] sm:$0xf]
    %v3470 = vld [vmem:[#allocation9 + $0x8] sm:$0xf]
    %v3471 = vld [vmem:[#allocation9 + $0xc] sm:$0xf]
    %v3472 = vld [vmem:[#allocation9 + $0x10] sm:$0xf]
    %v3473 = vld [vmem:[#allocation9 + $0x14] sm:$0xf]
    %v3474 = vld [vmem:[#allocation9 + $0x18] sm:$0xf]
    %v3475 = vld [vmem:[#allocation9 + $0x1c] sm:$0xf]
    %v3476 = vld [vmem:[#allocation9 + $0x20] sm:$0xf]
    %v3477 = vld [vmem:[#allocation9 + $0x24] sm:$0xf]
    %v3478 = vld [vmem:[#allocation9 + $0x28] sm:$0xf]
    %v3479 = vld [vmem:[#allocation9 + $0x2c] sm:$0xf]
    %v3480 = vld [vmem:[#allocation9 + $0x30] sm:$0xf]
    %v3481 = vld [vmem:[#allocation9 + $0x34] sm:$0xf]
    %v3482 = vld [vmem:[#allocation9 + $0x38] sm:$0xf]
    %v3483 = vld [vmem:[#allocation9 + $0x3c] sm:$0xf]
    %v3500 = vunpack.c.l.b16 %v3468
    %v3501 = vunpack.c.l.b16 %v3469
    %v3502 = vunpack.c.l.b16 %v3470
    %v3503 = vunpack.c.l.b16 %v3471
    %v3504 = vunpack.c.l.b16 %v3472
    %v3505 = vunpack.c.l.b16 %v3473
    %v3506 = vunpack.c.l.b16 %v3474
    %v3507 = vunpack.c.l.b16 %v3475
    %v3508 = vunpack.c.l.b16 %v3476
    %v3509 = vunpack.c.l.b16 %v3477
    %v3510 = vunpack.c.l.b16 %v3478
    %v3511 = vunpack.c.l.b16 %v3479
    %v3512 = vunpack.c.l.b16 %v3480
    %v3513 = vunpack.c.l.b16 %v3481
    %v3514 = vunpack.c.l.b16 %v3482
    %v3515 = vunpack.c.l.b16 %v3483
    %v3516 = vpack.c.b16 %v3501, %v3500
    %v3517 = vpack.c.b16 %v3503, %v3502
    %v3518 = vpack.c.b16 %v3505, %v3504
    %v3519 = vpack.c.b16 %v3507, %v3506
    %v3520 = vpack.c.b16 %v3509, %v3508
    %v3521 = vpack.c.b16 %v3511, %v3510
    %v3522 = vpack.c.b16 %v3513, %v3512
    %v3523 = vpack.c.b16 %v3515, %v3514
    %3532 = vmatpush.bf16.msra.mxu0 %v3523
    %3533 = vmatpush.bf16.msra.mxu0 %v3522
    %3534 = vmatpush.bf16.msra.mxu0 %v3521
    %3535 = vmatpush.bf16.msra.mxu0 %v3520
    %3536 = vmatpush.bf16.msra.mxu0 %v3519
    %3537 = vmatpush.bf16.msra.mxu0 %v3518
    %3538 = vmatpush.bf16.msra.mxu0 %v3517
    %3539 = vmatpush.bf16.msra.mxu0 %v3516
    %3540 = vmatmul.bf16.gmra.mxu0 %v3460
    %v3541 = vpop.f32.mrf.mxu0
    %v3542 = vadd.f32 0.0, %v3541
    %v3543 = vpop.f32.mrf.mxu0
    %v3544 = vadd.f32 0.0, %v3543
    %3545 = vmatmul.bf16.gmra.mxu0 %v3461
    %v3546 = vpop.f32.mrf.mxu0
    %v3547 = vadd.f32 0.0, %v3546
    %v3548 = vpop.f32.mrf.mxu0
    %v3549 = vadd.f32 0.0, %v3548
    %3550 = vmatmul.bf16.gmra.mxu0 %v3462
    %v3551 = vpop.f32.mrf.mxu0
    %v3552 = vadd.f32 0.0, %v3551
    %v3553 = vpop.f32.mrf.mxu0
    %v3554 = vadd.f32 0.0, %v3553
    %3555 = vmatmul.bf16.gmra.mxu0 %v3463
    %v3556 = vpop.f32.mrf.mxu0
    %v3557 = vadd.f32 0.0, %v3556
    %v3558 = vpop.f32.mrf.mxu0
    %v3559 = vadd.f32 0.0, %v3558
    %3560 = vmatmul.bf16.gmra.mxu0 %v3464
    %v3561 = vpop.f32.mrf.mxu0
    %v3562 = vadd.f32 0.0, %v3561
    %v3563 = vpop.f32.mrf.mxu0
    %v3564 = vadd.f32 0.0, %v3563
    %3565 = vmatmul.bf16.gmra.mxu0 %v3465
    %v3566 = vpop.f32.mrf.mxu0
    %v3567 = vadd.f32 0.0, %v3566
    %v3568 = vpop.f32.mrf.mxu0
    %v3569 = vadd.f32 0.0, %v3568
    %3570 = vmatmul.bf16.gmra.mxu0 %v3466
    %v3571 = vpop.f32.mrf.mxu0
    %v3572 = vadd.f32 0.0, %v3571
    %v3573 = vpop.f32.mrf.mxu0
    %v3574 = vadd.f32 0.0, %v3573
    %3575 = vmatmul.bf16.gmra.mxu0 %v3467
    %v3576 = vpop.f32.mrf.mxu0
    %v3577 = vadd.f32 0.0, %v3576
    %v3578 = vpop.f32.mrf.mxu0
    %v3579 = vadd.f32 0.0, %v3578
    %3580 = vdwg.mxu0
    %v3581 = vld [vmem:[%s8] sm:$0x1]
    %v3582 = vld [vmem:[%s9] sm:$0x1]
    %v3583 = vadd.f32 %v3542, %v3544
    %v3584 = vadd.f32 %v3583, %v3547
    %v3585 = vadd.f32 %v3584, %v3549
    %v3586 = vadd.f32 %v3585, %v3552
    %v3587 = vadd.f32 %v3586, %v3554
    %v3588 = vadd.f32 %v3587, %v3557
    %v3589 = vadd.f32 %v3588, %v3559
    %v3590 = vadd.f32 %v3589, %v3562
    %v3591 = vadd.f32 %v3590, %v3564
    %v3592 = vadd.f32 %v3591, %v3567
    %v3593 = vadd.f32 %v3592, %v3569
    %v3594 = vadd.f32 %v3593, %v3572
    %v3595 = vadd.f32 %v3594, %v3574
    %v3596 = vadd.f32 %v3595, %v3577
    %v3597 = vadd.f32 %v3596, %v3579
    %v3598 = vrot.slane %v3597, 4
    %v3599 = vadd.f32 %v3597, %v3598
    %v3600 = vrot.slane %v3599, 2
    %v3601 = vadd.f32 %v3599, %v3600
    %v3602 = vrot.slane %v3601, 1
    %v3603 = vadd.f32 %v3601, %v3602
    %v3604 = vmul.f32 %v3603, 0.0078125
    %v3605 = vsub.f32 %v3542, %v3604
    %v3606 = vsub.f32 %v3544, %v3604
    %v3607 = vsub.f32 %v3547, %v3604
    %v3608 = vsub.f32 %v3549, %v3604
    %v3609 = vsub.f32 %v3552, %v3604
    %v3610 = vsub.f32 %v3554, %v3604
    %v3611 = vsub.f32 %v3557, %v3604
    %v3612 = vsub.f32 %v3559, %v3604
    %v3613 = vsub.f32 %v3562, %v3604
    %v3614 = vsub.f32 %v3564, %v3604
    %v3615 = vsub.f32 %v3567, %v3604
    %v3616 = vsub.f32 %v3569, %v3604
    %v3617 = vsub.f32 %v3572, %v3604
    %v3618 = vsub.f32 %v3574, %v3604
    %v3619 = vsub.f32 %v3577, %v3604
    %v3620 = vsub.f32 %v3579, %v3604
    %v3621 = vmul.f32 %v3605, %v3605
    %v3622 = vmul.f32 %v3606, %v3606
    %v3623 = vmul.f32 %v3607, %v3607
    %v3624 = vmul.f32 %v3608, %v3608
    %v3625 = vmul.f32 %v3609, %v3609
    %v3626 = vmul.f32 %v3610, %v3610
    %v3627 = vmul.f32 %v3611, %v3611
    %v3628 = vmul.f32 %v3612, %v3612
    %v3629 = vmul.f32 %v3613, %v3613
    %v3630 = vmul.f32 %v3614, %v3614
    %v3631 = vmul.f32 %v3615, %v3615
    %v3632 = vmul.f32 %v3616, %v3616
    %v3633 = vmul.f32 %v3617, %v3617
    %v3634 = vmul.f32 %v3618, %v3618
    %v3635 = vmul.f32 %v3619, %v3619
    %v3636 = vmul.f32 %v3620, %v3620
    %v3637 = vadd.f32 %v3621, %v3622
    %v3638 = vadd.f32 %v3637, %v3623
    %v3639 = vadd.f32 %v3638, %v3624
    %v3640 = vadd.f32 %v3639, %v3625
    %v3641 = vadd.f32 %v3640, %v3626
    %v3642 = vadd.f32 %v3641, %v3627
    %v3643 = vadd.f32 %v3642, %v3628
    %v3644 = vadd.f32 %v3643, %v3629
    %v3645 = vadd.f32 %v3644, %v3630
    %v3646 = vadd.f32 %v3645, %v3631
    %v3647 = vadd.f32 %v3646, %v3632
    %v3648 = vadd.f32 %v3647, %v3633
    %v3649 = vadd.f32 %v3648, %v3634
    %v3650 = vadd.f32 %v3649, %v3635
    %v3651 = vadd.f32 %v3650, %v3636
    %v3652 = vrot.slane %v3651, 4
    %v3653 = vadd.f32 %v3651, %v3652
    %v3654 = vrot.slane %v3653, 2
    %v3655 = vadd.f32 %v3653, %v3654
    %v3656 = vrot.slane %v3655, 1
    %v3657 = vadd.f32 %v3655, %v3656
    %v3658 = vmul.f32 %v3657, 0.0078125
    %v3659 = vadd.f32 %v3658, 1e-05
    %v3660 = vrsqrt.pop %v3659
    %v3661 = vmul.f32 %v3660, %v3659
    %v3662 = vmul.f32 %v3661, %v3660
    %v3663 = vmul.f32 0.5, %v3662
    %v3664 = vsub.f32 1.5, %v3663
    %v3665 = vmul.f32 %v3660, %v3664
    %vm3666 = vweird.f32 %v3659
    %vm3667 = vweird.f32 %v3660
    %vm3668 = vmor %vm3666, %vm3667
    %v3669 = vsel %vm3668, %v3660, %v3665
    %v3670 = vmul.f32 %v3581, %v3669
    %v3672 = vperm.slane %v3670, 0
    %v3674 = vmul.f32 %v3605, %v3672
    %v3675 = vmul.f32 %v3606, %v3672
    %v3676 = vmul.f32 %v3607, %v3672
    %v3677 = vmul.f32 %v3608, %v3672
    %v3678 = vmul.f32 %v3609, %v3672
    %v3679 = vmul.f32 %v3610, %v3672
    %v3680 = vmul.f32 %v3611, %v3672
    %v3681 = vmul.f32 %v3612, %v3672
    %v3682 = vmul.f32 %v3613, %v3672
    %v3683 = vmul.f32 %v3614, %v3672
    %v3684 = vmul.f32 %v3615, %v3672
    %v3685 = vmul.f32 %v3616, %v3672
    %v3686 = vmul.f32 %v3617, %v3672
    %v3687 = vmul.f32 %v3618, %v3672
    %v3688 = vmul.f32 %v3619, %v3672
    %v3689 = vmul.f32 %v3620, %v3672
    %v3691 = vperm.slane %v3582, 0
    %v3693 = vadd.f32 %v3674, %v3691
    %v3694 = vadd.f32 %v3675, %v3691
    %v3695 = vadd.f32 %v3676, %v3691
    %v3696 = vadd.f32 %v3677, %v3691
    %v3697 = vadd.f32 %v3678, %v3691
    %v3698 = vadd.f32 %v3679, %v3691
    %v3699 = vadd.f32 %v3680, %v3691
    %v3700 = vadd.f32 %v3681, %v3691
    %v3701 = vadd.f32 %v3682, %v3691
    %v3702 = vadd.f32 %v3683, %v3691
    %v3703 = vadd.f32 %v3684, %v3691
    %v3704 = vadd.f32 %v3685, %v3691
    %v3705 = vadd.f32 %v3686, %v3691
    %v3706 = vadd.f32 %v3687, %v3691
    %v3707 = vadd.f32 %v3688, %v3691
    %v3708 = vadd.f32 %v3689, %v3691
    %v3709 = vadd.f32 %v3693, %v100
    %v3710 = vadd.f32 %v3694, %v101
    %v3711 = vadd.f32 %v3695, %v102
    %v3712 = vadd.f32 %v3696, %v103
    %v3713 = vadd.f32 %v3697, %v104
    %v3714 = vadd.f32 %v3698, %v105
    %v3715 = vadd.f32 %v3699, %v106
    %v3716 = vadd.f32 %v3700, %v107
    %v3717 = vadd.f32 %v3701, %v108
    %v3718 = vadd.f32 %v3702, %v109
    %v3719 = vadd.f32 %v3703, %v110
    %v3720 = vadd.f32 %v3704, %v111
    %v3721 = vadd.f32 %v3705, %v112
    %v3722 = vadd.f32 %v3706, %v113
    %v3723 = vadd.f32 %v3707, %v114
    %v3724 = vadd.f32 %v3708, %v115
    %v3725 = vmax.f32 %v3709, 0.0
    %v3726 = vmax.f32 %v3710, 0.0
    %v3727 = vmax.f32 %v3711, 0.0
    %v3728 = vmax.f32 %v3712, 0.0
    %v3729 = vmax.f32 %v3713, 0.0
    %v3730 = vmax.f32 %v3714, 0.0
    %v3731 = vmax.f32 %v3715, 0.0
    %v3732 = vmax.f32 %v3716, 0.0
    %v3733 = vmax.f32 %v3717, 0.0
    %v3734 = vmax.f32 %v3718, 0.0
    %v3735 = vmax.f32 %v3719, 0.0
    %v3736 = vmax.f32 %v3720, 0.0
    %v3737 = vmax.f32 %v3721, 0.0
    %v3738 = vmax.f32 %v3722, 0.0
    %v3739 = vmax.f32 %v3723, 0.0
    %v3740 = vmax.f32 %v3724, 0.0
    %3741 = vst [vmem:[#allocation11] sm:$0xff] %v3725
    %3742 = vst [vmem:[#allocation11 + $0x8] sm:$0xff] %v3726
    %3743 = vst [vmem:[#allocation11 + $0x10] sm:$0xff] %v3727
    %3744 = vst [vmem:[#allocation11 + $0x18] sm:$0xff] %v3728
    %3745 = vst [vmem:[#allocation11 + $0x20] sm:$0xff] %v3729
    %3746 = vst [vmem:[#allocation11 + $0x28] sm:$0xff] %v3730
    %3747 = vst [vmem:[#allocation11 + $0x30] sm:$0xff] %v3731
    %3748 = vst [vmem:[#allocation11 + $0x38] sm:$0xff] %v3732
    %3749 = vst [vmem:[#allocation11 + $0x40] sm:$0xff] %v3733
    %3750 = vst [vmem:[#allocation11 + $0x48] sm:$0xff] %v3734
    %3751 = vst [vmem:[#allocation11 + $0x50] sm:$0xff] %v3735
    %3752 = vst [vmem:[#allocation11 + $0x58] sm:$0xff] %v3736
    %3753 = vst [vmem:[#allocation11 + $0x60] sm:$0xff] %v3737
    %3754 = vst [vmem:[#allocation11 + $0x68] sm:$0xff] %v3738
    %3755 = vst [vmem:[#allocation11 + $0x70] sm:$0xff] %v3739
    %3756 = vst [vmem:[#allocation11 + $0x78] sm:$0xff] %v3740
    // Predicated region
    $region58: #{tpu_custom_call.1} parent=1 // pred_check
      _
    $region59: #{tpu_custom_call.1} parent=1 // pred_check_branch
      %3758 = sbr.rel (0) target = $region61
    $region60: #{tpu_custom_call.1} parent=1 // pred_region
      %3760 = vsyncadd [#allocation5], 0
      %s3761 = sshll.u32 [#allocation11], 4
      %s3762 = int_to_ptr.vmem [resolvable:$true] %s3761
      %s3763 = sshll.u32 %s10, 4
      %s3764 = int_to_ptr.hbm [resolvable:$true] %s3763
      %3769 = dma.vmem_to_hbm [thread:$0]  %s3762, 2048, %s3764, [#allocation5], 128, 128, 8
    $region61: #{tpu_custom_call.1} parent=1 // pred_fallthru
      _
    // Predicated region
    $region62: #{tpu_custom_call.1} parent=1 // pred_check
      _
    $region63: #{tpu_custom_call.1} parent=1 // pred_check_branch
      %3771 = sbr.rel (0) target = $region65
    $region64: #{tpu_custom_call.1} parent=1 // pred_region
      %3773 = dma.done [#allocation5], 2048
    $region65: #{tpu_custom_call.1} parent=1 // pred_fallthru
      _
    %3774 = vsyncpa [#allocation4], 1
    %3775 = vsyncpa [#allocation7], 1
    %3776 = vsyncpa [#allocation10], 1
    %3777 = vsyncpa [#allocation5], 1

</llo_original>
